<compile_context>
chip_gen: v6e
topology: v6e:2x2x1
jax: 0.10.0
libtpu: 0.0.40
codegen_flags: <defaults>
</compile_context>

<pallas_src>
import jax
import jax.numpy as jnp
import numpy as np
from jax.experimental import pallas as pl
from jax.experimental.pallas import tpu as pltpu

# ---------------------------------------------------------------------------
# Model hyper-parameters (small, consistent with the module's forward).
# ---------------------------------------------------------------------------
BATCH       = 8
LATENT_DIM  = 32
LATENT_PAD  = 128                               # pad K of first matmul to a full vreg
CHANNELS    = 4
IMG_SIZE    = 8
IMG_PIXELS  = CHANNELS * IMG_SIZE * IMG_SIZE    # 256
BN_EPS      = 0.8                               # nn.BatchNorm1d(out_feat, 0.8)
LRELU_SLOPE = 0.2

HIDDEN = [128, 256, 512, 1024]
# (K, N) of each Linear as seen by the kernel (first layer padded to 128).
_LAYER_DIMS = [(LATENT_PAD, 128), (128, 256), (256, 512), (512, 1024),
               (1024, IMG_PIXELS)]


def _leaky_relu(x):
    return jnp.where(x > 0, x, LRELU_SLOPE * x)


# ---------------------------------------------------------------------------
# Pallas kernel: whole MLP in one VMEM-resident pass (~2 MB of bf16 weights).
# ---------------------------------------------------------------------------
def generator_kernel(z_ref,
                     w1_ref, b1_ref,
                     w2_ref, g2_ref, be2_ref,
                     w3_ref, g3_ref, be3_ref,
                     w4_ref, g4_ref, be4_ref,
                     w5_ref, b5_ref,
                     out_ref):
    f32 = jnp.float32
    bf16 = jnp.bfloat16

    def dot_bf16(x, w_ref):
        # bf16 x bf16 on the MXU, f32 accumulation.
        return jnp.dot(x.astype(bf16), w_ref[...], preferred_element_type=f32)

    def bn_lrelu(h, gamma, beta):
        # Training-mode BatchNorm1d (biased var, eps=0.8), single-pass variance,
        # scale folded to a (1, N) vector before the broadcast multiply.
        mean = jnp.mean(h, axis=0, keepdims=True)
        var = jnp.mean(h * h, axis=0, keepdims=True) - mean * mean
        scale = jax.lax.rsqrt(var + BN_EPS) * gamma            # (1, N)
        return _leaky_relu((h - mean) * scale + beta)

    # Block 1: Linear -> LeakyReLU (no norm)
    h = _leaky_relu(dot_bf16(z_ref[...], w1_ref) + b1_ref[...])

    # Blocks 2-4: Linear (bias dropped, dead under BN) -> BN -> LeakyReLU
    h = bn_lrelu(dot_bf16(h, w2_ref), g2_ref[...], be2_ref[...])
    h = bn_lrelu(dot_bf16(h, w3_ref), g3_ref[...], be3_ref[...])
    h = bn_lrelu(dot_bf16(h, w4_ref), g4_ref[...], be4_ref[...])

    # Output head: Linear -> Tanh
    out_ref[...] = jnp.tanh(dot_bf16(h, w5_ref) + b5_ref[...])


def _cost_estimate(B):
    macs = sum(k * n for k, n in _LAYER_DIMS)
    flops = 2 * B * macs
    transcendentals = B * IMG_PIXELS + sum(n for _, n in _LAYER_DIMS[1:4])  # tanh + rsqrt
    weight_bytes = macs * 2                                                 # bf16 weights
    vec_bytes = 4 * (128 + IMG_PIXELS + 2 * (256 + 512 + 1024))             # b1,b5,gamma,beta
    io_bytes = 4 * B * (LATENT_PAD + IMG_PIXELS)
    return pl.CostEstimate(flops=flops, transcendentals=transcendentals,
                           bytes_accessed=weight_bytes + vec_bytes + io_bytes)


def generator_forward(z, params):
    """z: (B, latent_dim) float32  ->  img: (B, C, H, W) float32."""
    B = z.shape[0]
    # Zero-pad the latent to a full 128-lane boundary (exact no-op: w1 rows
    # beyond LATENT_DIM are zero).
    z_pad = jnp.pad(z, ((0, 0), (0, LATENT_PAD - LATENT_DIM)))

    flat_args = (z_pad,) + tuple(params)
    vmem_spec = pl.BlockSpec(memory_space=pltpu.MemorySpace.VMEM)

    img_flat = pl.pallas_call(
        generator_kernel,
        out_shape=jax.ShapeDtypeStruct((B, IMG_PIXELS), jnp.float32),
        in_specs=[vmem_spec] * len(flat_args),
        out_specs=vmem_spec,
        cost_estimate=_cost_estimate(B),
    )(*flat_args)

    # Glue: .view(B, C, H, W) equivalent.
    return img_flat.reshape(B, CHANNELS, IMG_SIZE, IMG_SIZE)


# ---------------------------------------------------------------------------
# Deterministic parameter construction (PyTorch-style uniform fan-in init).
# Returns:
#   kernel_params : bf16 weights (w1 zero-padded to (128,128)), no dead biases
#   torch_params  : faithful f32 parameters incl. b2/b3/b4 (for the reference)
# ---------------------------------------------------------------------------
def make_params(key):
    dims = [LATENT_DIM] + HIDDEN + [IMG_PIXELS]   # 32,128,256,512,1024,256
    keys = jax.random.split(key, 2 * (len(dims) - 1))
    lin = []
    for i in range(len(dims) - 1):
        fan_in, fan_out = dims[i], dims[i + 1]
        bound = 1.0 / np.sqrt(fan_in)
        w = jax.random.uniform(keys[2 * i], (fan_in, fan_out),
                               jnp.float32, -bound, bound)
        b = jax.random.uniform(keys[2 * i + 1], (1, fan_out),
                               jnp.float32, -bound, bound)
        lin.append((w, b))

    (w1, b1), (w2, b2), (w3, b3), (w4, b4), (w5, b5) = lin

    def bn_init(n):
        return jnp.ones((1, n), jnp.float32), jnp.zeros((1, n), jnp.float32)

    g2, be2 = bn_init(256)
    g3, be3 = bn_init(512)
    g4, be4 = bn_init(1024)

    bf = jnp.bfloat16
    w1_pad = jnp.pad(w1, ((0, LATENT_PAD - LATENT_DIM), (0, 0)))

    kernel_params = [
        w1_pad.astype(bf), b1,
        w2.astype(bf), g2, be2,          # b2/b3/b4 dropped: dead under BN
        w3.astype(bf), g3, be3,
        w4.astype(bf), g4, be4,
        w5.astype(bf), b5,
    ]
    torch_params = [w1, b1, w2, b2, g2, be2, w3, b3, g3, be3,
                    w4, b4, g4, be4, w5, b5]
    return kernel_params, torch_params


# ---------------------------------------------------------------------------
# References.
# ---------------------------------------------------------------------------
def _bn_two_pass(x, gamma, beta):
    mean = jnp.mean(x, axis=0, keepdims=True)
    var = jnp.mean((x - mean) * (x - mean), axis=0, keepdims=True)
    return (x - mean) * jax.lax.rsqrt(var + BN_EPS) * gamma + beta


def reference_matched(z, kp):
    """Same arithmetic as the kernel (bf16 weights / dots, folded BN)."""
    (w1, b1, w2, g2, be2, w3, g3, be3, w4, g4, be4, w5, b5) = kp
    f32, bf16 = jnp.float32, jnp.bfloat16
    zp = jnp.pad(z, ((0, 0), (0, LATENT_PAD - LATENT_DIM)))

    def dot(x, w):
        return jnp.dot(x.astype(bf16), w, preferred_element_type=f32)

    def bn_lrelu(h, g, b):
        mean = jnp.mean(h, axis=0, keepdims=True)
        var = jnp.mean(h * h, axis=0, keepdims=True) - mean * mean
        return _leaky_relu((h - mean) * (jax.lax.rsqrt(var + BN_EPS) * g) + b)

    h = _leaky_relu(dot(zp, w1) + b1)
    h = bn_lrelu(dot(h, w2), g2, be2)
    h = bn_lrelu(dot(h, w3), g3, be3)
    h = bn_lrelu(dot(h, w4), g4, be4)
    h = jnp.tanh(dot(h, w5) + b5)
    return h.reshape(z.shape[0], CHANNELS, IMG_SIZE, IMG_SIZE)


def reference_torch_f32(z, tp):
    """Faithful f32 PyTorch math (with the pre-BN biases the kernel drops)."""
    (w1, b1, w2, b2, g2, be2, w3, b3, g3, be3,
     w4, b4, g4, be4, w5, b5) = tp
    h = _leaky_relu(z @ w1 + b1)
    h = _leaky_relu(_bn_two_pass(h @ w2 + b2, g2, be2))
    h = _leaky_relu(_bn_two_pass(h @ w3 + b3, g3, be3))
    h = _leaky_relu(_bn_two_pass(h @ w4 + b4, g4, be4))
    h = jnp.tanh(h @ w5 + b5)
    return h.reshape(z.shape[0], CHANNELS, IMG_SIZE, IMG_SIZE)


if __name__ == "__main__":
    key = jax.random.PRNGKey(0)
    z_key, p_key = jax.random.split(key)

    z = jax.random.normal(z_key, (BATCH, LATENT_DIM), jnp.float32)
    kernel_params, torch_params = make_params(p_key)

    img = generator_forward(z, kernel_params)
    img = jax.block_until_ready(img)
    assert img.shape == (BATCH, CHANNELS, IMG_SIZE, IMG_SIZE)

    # Tight check against an arithmetic-matched reference (same bf16 dots).
    ref = reference_matched(z, kernel_params)
    np.testing.assert_allclose(np.asarray(img), np.asarray(ref),
                               rtol=1e-4, atol=1e-4)

    # Loose sanity check against the faithful f32 PyTorch math (differences
    # come only from bf16 weight quantization; outputs are tanh-bounded).
    ref_f32 = reference_torch_f32(z, torch_params)
    np.testing.assert_allclose(np.asarray(img), np.asarray(ref_f32), atol=0.1)

    print("KERNEL_OK")
</pallas_src>

<mosaic_0001>
module attributes {stable_mosaic.version = 11 : i64} {
  func.func @generator_kernel(%arg0: memref<8x128xf32, #tpu.memory_space<vmem>>, %arg1: memref<128x128xbf16, #tpu.memory_space<vmem>>, %arg2: memref<1x128xf32, #tpu.memory_space<vmem>>, %arg3: memref<128x256xbf16, #tpu.memory_space<vmem>>, %arg4: memref<1x256xf32, #tpu.memory_space<vmem>>, %arg5: memref<1x256xf32, #tpu.memory_space<vmem>>, %arg6: memref<256x512xbf16, #tpu.memory_space<vmem>>, %arg7: memref<1x512xf32, #tpu.memory_space<vmem>>, %arg8: memref<1x512xf32, #tpu.memory_space<vmem>>, %arg9: memref<512x1024xbf16, #tpu.memory_space<vmem>>, %arg10: memref<1x1024xf32, #tpu.memory_space<vmem>>, %arg11: memref<1x1024xf32, #tpu.memory_space<vmem>>, %arg12: memref<1024x256xbf16, #tpu.memory_space<vmem>>, %arg13: memref<1x256xf32, #tpu.memory_space<vmem>>, %arg14: memref<8x256xf32, #tpu.memory_space<vmem>>) attributes {dimension_semantics = [], scalar_prefetch = 0 : i64, scratch_operands = 0 : i64, tpu.core_type = #tpu.core_type<tc>} {
    %c0 = arith.constant 0 : index
    %c0_0 = arith.constant 0 : index
    %0 = vector.load %arg0[%c0, %c0_0] : memref<8x128xf32, #tpu.memory_space<vmem>>, vector<8x128xf32>
    %1 = arith.truncf %0 : vector<8x128xf32> to vector<8x128xbf16>
    %c0_1 = arith.constant 0 : index
    %c0_2 = arith.constant 0 : index
    %2 = vector.load %arg1[%c0_1, %c0_2] : memref<128x128xbf16, #tpu.memory_space<vmem>>, vector<128x128xbf16>
    %cst = arith.constant dense<0.000000e+00> : vector<8x128xf32>
    %3 = tpu.matmul %1, %2, %cst {dimension_numbers = #tpu.dot_dimension_numbers<[1], [0], [0], [1], [0, 0, 1, 1], [], []>} : vector<8x128xbf16>, vector<128x128xbf16>, vector<8x128xf32> -> vector<8x128xf32>
    %c0_3 = arith.constant 0 : index
    %c0_4 = arith.constant 0 : index
    %4 = vector.load %arg2[%c0_3, %c0_4] : memref<1x128xf32, #tpu.memory_space<vmem>>, vector<1x128xf32>
    %5 = vector.broadcast %4 : vector<1x128xf32> to vector<8x128xf32>
    %6 = arith.addf %3, %5 : vector<8x128xf32>
    %cst_5 = arith.constant 0.000000e+00 : f32
    %7 = vector.broadcast %cst_5 : f32 to vector<8x128xf32>
    %8 = arith.cmpf ogt, %6, %7 : vector<8x128xf32>
    %cst_6 = arith.constant 2.000000e-01 : f32
    %9 = vector.broadcast %cst_6 : f32 to vector<8x128xf32>
    %10 = arith.mulf %9, %6 : vector<8x128xf32>
    %11 = arith.select %8, %6, %10 : vector<8x128xi1>, vector<8x128xf32>
    %12 = arith.truncf %11 : vector<8x128xf32> to vector<8x128xbf16>
    %c0_7 = arith.constant 0 : index
    %c0_8 = arith.constant 0 : index
    %13 = vector.load %arg3[%c0_7, %c0_8] : memref<128x256xbf16, #tpu.memory_space<vmem>>, vector<128x256xbf16>
    %cst_9 = arith.constant dense<0.000000e+00> : vector<8x256xf32>
    %14 = tpu.matmul %12, %13, %cst_9 {dimension_numbers = #tpu.dot_dimension_numbers<[1], [0], [0], [1], [0, 0, 1, 1], [], []>} : vector<8x128xbf16>, vector<128x256xbf16>, vector<8x256xf32> -> vector<8x256xf32>
    %c0_10 = arith.constant 0 : index
    %c0_11 = arith.constant 0 : index
    %15 = vector.load %arg4[%c0_10, %c0_11] : memref<1x256xf32, #tpu.memory_space<vmem>>, vector<1x256xf32>
    %c0_12 = arith.constant 0 : index
    %c0_13 = arith.constant 0 : index
    %16 = vector.load %arg5[%c0_12, %c0_13] : memref<1x256xf32, #tpu.memory_space<vmem>>, vector<1x256xf32>
    %cst_14 = arith.constant dense<0.000000e+00> : vector<256xf32>
    %17 = vector.multi_reduction <add>, %14, %cst_14 [0] : vector<8x256xf32> to vector<256xf32>
    %18 = vector.shape_cast %17 : vector<256xf32> to vector<1x256xf32>
    %cst_15 = arith.constant 8.000000e+00 : f32
    %19 = vector.broadcast %cst_15 : f32 to vector<1x256xf32>
    %20 = arith.divf %18, %19 : vector<1x256xf32>
    %21 = arith.mulf %14, %14 : vector<8x256xf32>
    %cst_16 = arith.constant dense<0.000000e+00> : vector<256xf32>
    %22 = vector.multi_reduction <add>, %21, %cst_16 [0] : vector<8x256xf32> to vector<256xf32>
    %23 = vector.shape_cast %22 : vector<256xf32> to vector<1x256xf32>
    %cst_17 = arith.constant 8.000000e+00 : f32
    %24 = vector.broadcast %cst_17 : f32 to vector<1x256xf32>
    %25 = arith.divf %23, %24 : vector<1x256xf32>
    %26 = arith.mulf %20, %20 : vector<1x256xf32>
    %27 = arith.subf %25, %26 : vector<1x256xf32>
    %cst_18 = arith.constant 8.000000e-01 : f32
    %28 = vector.broadcast %cst_18 : f32 to vector<1x256xf32>
    %29 = arith.addf %27, %28 : vector<1x256xf32>
    %30 = math.rsqrt %29 : vector<1x256xf32>
    %31 = arith.mulf %30, %15 : vector<1x256xf32>
    %32 = vector.broadcast %20 : vector<1x256xf32> to vector<8x256xf32>
    %33 = arith.subf %14, %32 : vector<8x256xf32>
    %34 = vector.broadcast %31 : vector<1x256xf32> to vector<8x256xf32>
    %35 = arith.mulf %33, %34 : vector<8x256xf32>
    %36 = vector.broadcast %16 : vector<1x256xf32> to vector<8x256xf32>
    %37 = arith.addf %35, %36 : vector<8x256xf32>
    %cst_19 = arith.constant 0.000000e+00 : f32
    %38 = vector.broadcast %cst_19 : f32 to vector<8x256xf32>
    %39 = arith.cmpf ogt, %37, %38 : vector<8x256xf32>
    %cst_20 = arith.constant 2.000000e-01 : f32
    %40 = vector.broadcast %cst_20 : f32 to vector<8x256xf32>
    %41 = arith.mulf %40, %37 : vector<8x256xf32>
    %42 = arith.select %39, %37, %41 : vector<8x256xi1>, vector<8x256xf32>
    %43 = arith.truncf %42 : vector<8x256xf32> to vector<8x256xbf16>
    %c0_21 = arith.constant 0 : index
    %c0_22 = arith.constant 0 : index
    %44 = vector.load %arg6[%c0_21, %c0_22] : memref<256x512xbf16, #tpu.memory_space<vmem>>, vector<256x512xbf16>
    %cst_23 = arith.constant dense<0.000000e+00> : vector<8x512xf32>
    %45 = tpu.matmul %43, %44, %cst_23 {dimension_numbers = #tpu.dot_dimension_numbers<[1], [0], [0], [1], [0, 0, 1, 1], [], []>} : vector<8x256xbf16>, vector<256x512xbf16>, vector<8x512xf32> -> vector<8x512xf32>
    %c0_24 = arith.constant 0 : index
    %c0_25 = arith.constant 0 : index
    %46 = vector.load %arg7[%c0_24, %c0_25] : memref<1x512xf32, #tpu.memory_space<vmem>>, vector<1x512xf32>
    %c0_26 = arith.constant 0 : index
    %c0_27 = arith.constant 0 : index
    %47 = vector.load %arg8[%c0_26, %c0_27] : memref<1x512xf32, #tpu.memory_space<vmem>>, vector<1x512xf32>
    %cst_28 = arith.constant dense<0.000000e+00> : vector<512xf32>
    %48 = vector.multi_reduction <add>, %45, %cst_28 [0] : vector<8x512xf32> to vector<512xf32>
    %49 = vector.shape_cast %48 : vector<512xf32> to vector<1x512xf32>
    %cst_29 = arith.constant 8.000000e+00 : f32
    %50 = vector.broadcast %cst_29 : f32 to vector<1x512xf32>
    %51 = arith.divf %49, %50 : vector<1x512xf32>
    %52 = arith.mulf %45, %45 : vector<8x512xf32>
    %cst_30 = arith.constant dense<0.000000e+00> : vector<512xf32>
    %53 = vector.multi_reduction <add>, %52, %cst_30 [0] : vector<8x512xf32> to vector<512xf32>
    %54 = vector.shape_cast %53 : vector<512xf32> to vector<1x512xf32>
    %cst_31 = arith.constant 8.000000e+00 : f32
    %55 = vector.broadcast %cst_31 : f32 to vector<1x512xf32>
    %56 = arith.divf %54, %55 : vector<1x512xf32>
    %57 = arith.mulf %51, %51 : vector<1x512xf32>
    %58 = arith.subf %56, %57 : vector<1x512xf32>
    %cst_32 = arith.constant 8.000000e-01 : f32
    %59 = vector.broadcast %cst_32 : f32 to vector<1x512xf32>
    %60 = arith.addf %58, %59 : vector<1x512xf32>
    %61 = math.rsqrt %60 : vector<1x512xf32>
    %62 = arith.mulf %61, %46 : vector<1x512xf32>
    %63 = vector.broadcast %51 : vector<1x512xf32> to vector<8x512xf32>
    %64 = arith.subf %45, %63 : vector<8x512xf32>
    %65 = vector.broadcast %62 : vector<1x512xf32> to vector<8x512xf32>
    %66 = arith.mulf %64, %65 : vector<8x512xf32>
    %67 = vector.broadcast %47 : vector<1x512xf32> to vector<8x512xf32>
    %68 = arith.addf %66, %67 : vector<8x512xf32>
    %cst_33 = arith.constant 0.000000e+00 : f32
    %69 = vector.broadcast %cst_33 : f32 to vector<8x512xf32>
    %70 = arith.cmpf ogt, %68, %69 : vector<8x512xf32>
    %cst_34 = arith.constant 2.000000e-01 : f32
    %71 = vector.broadcast %cst_34 : f32 to vector<8x512xf32>
    %72 = arith.mulf %71, %68 : vector<8x512xf32>
    %73 = arith.select %70, %68, %72 : vector<8x512xi1>, vector<8x512xf32>
    %74 = arith.truncf %73 : vector<8x512xf32> to vector<8x512xbf16>
    %c0_35 = arith.constant 0 : index
    %c0_36 = arith.constant 0 : index
    %75 = vector.load %arg9[%c0_35, %c0_36] : memref<512x1024xbf16, #tpu.memory_space<vmem>>, vector<512x1024xbf16>
    %cst_37 = arith.constant dense<0.000000e+00> : vector<8x1024xf32>
    %76 = tpu.matmul %74, %75, %cst_37 {dimension_numbers = #tpu.dot_dimension_numbers<[1], [0], [0], [1], [0, 0, 1, 1], [], []>} : vector<8x512xbf16>, vector<512x1024xbf16>, vector<8x1024xf32> -> vector<8x1024xf32>
    %c0_38 = arith.constant 0 : index
    %c0_39 = arith.constant 0 : index
    %77 = vector.load %arg10[%c0_38, %c0_39] : memref<1x1024xf32, #tpu.memory_space<vmem>>, vector<1x1024xf32>
    %c0_40 = arith.constant 0 : index
    %c0_41 = arith.constant 0 : index
    %78 = vector.load %arg11[%c0_40, %c0_41] : memref<1x1024xf32, #tpu.memory_space<vmem>>, vector<1x1024xf32>
    %cst_42 = arith.constant dense<0.000000e+00> : vector<1024xf32>
    %79 = vector.multi_reduction <add>, %76, %cst_42 [0] : vector<8x1024xf32> to vector<1024xf32>
    %80 = vector.shape_cast %79 : vector<1024xf32> to vector<1x1024xf32>
    %cst_43 = arith.constant 8.000000e+00 : f32
    %81 = vector.broadcast %cst_43 : f32 to vector<1x1024xf32>
    %82 = arith.divf %80, %81 : vector<1x1024xf32>
    %83 = arith.mulf %76, %76 : vector<8x1024xf32>
    %cst_44 = arith.constant dense<0.000000e+00> : vector<1024xf32>
    %84 = vector.multi_reduction <add>, %83, %cst_44 [0] : vector<8x1024xf32> to vector<1024xf32>
    %85 = vector.shape_cast %84 : vector<1024xf32> to vector<1x1024xf32>
    %cst_45 = arith.constant 8.000000e+00 : f32
    %86 = vector.broadcast %cst_45 : f32 to vector<1x1024xf32>
    %87 = arith.divf %85, %86 : vector<1x1024xf32>
    %88 = arith.mulf %82, %82 : vector<1x1024xf32>
    %89 = arith.subf %87, %88 : vector<1x1024xf32>
    %cst_46 = arith.constant 8.000000e-01 : f32
    %90 = vector.broadcast %cst_46 : f32 to vector<1x1024xf32>
    %91 = arith.addf %89, %90 : vector<1x1024xf32>
    %92 = math.rsqrt %91 : vector<1x1024xf32>
    %93 = arith.mulf %92, %77 : vector<1x1024xf32>
    %94 = vector.broadcast %82 : vector<1x1024xf32> to vector<8x1024xf32>
    %95 = arith.subf %76, %94 : vector<8x1024xf32>
    %96 = vector.broadcast %93 : vector<1x1024xf32> to vector<8x1024xf32>
    %97 = arith.mulf %95, %96 : vector<8x1024xf32>
    %98 = vector.broadcast %78 : vector<1x1024xf32> to vector<8x1024xf32>
    %99 = arith.addf %97, %98 : vector<8x1024xf32>
    %cst_47 = arith.constant 0.000000e+00 : f32
    %100 = vector.broadcast %cst_47 : f32 to vector<8x1024xf32>
    %101 = arith.cmpf ogt, %99, %100 : vector<8x1024xf32>
    %cst_48 = arith.constant 2.000000e-01 : f32
    %102 = vector.broadcast %cst_48 : f32 to vector<8x1024xf32>
    %103 = arith.mulf %102, %99 : vector<8x1024xf32>
    %104 = arith.select %101, %99, %103 : vector<8x1024xi1>, vector<8x1024xf32>
    %105 = arith.truncf %104 : vector<8x1024xf32> to vector<8x1024xbf16>
    %c0_49 = arith.constant 0 : index
    %c0_50 = arith.constant 0 : index
    %106 = vector.load %arg12[%c0_49, %c0_50] : memref<1024x256xbf16, #tpu.memory_space<vmem>>, vector<1024x256xbf16>
    %cst_51 = arith.constant dense<0.000000e+00> : vector<8x256xf32>
    %107 = tpu.matmul %105, %106, %cst_51 {dimension_numbers = #tpu.dot_dimension_numbers<[1], [0], [0], [1], [0, 0, 1, 1], [], []>} : vector<8x1024xbf16>, vector<1024x256xbf16>, vector<8x256xf32> -> vector<8x256xf32>
    %c0_52 = arith.constant 0 : index
    %c0_53 = arith.constant 0 : index
    %108 = vector.load %arg13[%c0_52, %c0_53] : memref<1x256xf32, #tpu.memory_space<vmem>>, vector<1x256xf32>
    %109 = vector.broadcast %108 : vector<1x256xf32> to vector<8x256xf32>
    %110 = arith.addf %107, %109 : vector<8x256xf32>
    %111 = math.tanh %110 : vector<8x256xf32>
    %c0_54 = arith.constant 0 : index
    %c0_55 = arith.constant 0 : index
    %112 = vector.load %arg14[%c0_54, %c0_55] : memref<8x256xf32, #tpu.memory_space<vmem>>, vector<8x256xf32>
    tpu.vector_store %arg14[%c0_54, %c0_55], %111 {strides = array<i32>} : memref<8x256xf32, #tpu.memory_space<vmem>>, vector<8x256xf32>,
    return
  }
}

</mosaic_0001>

<llo_original>
// kernel: tpu_custom_call.1
$region0: #{tpu_custom_call.1}
  #allocation0 [shape = 'u32[]', space=smem, size = 0x4, offset = 0x4, fixed_abs, tag = 'smem constant byte address 0x4 - core index']
  #allocation1 [shape = 'u32[144,128]{1,0:T(1,128)}', space=vmem, size = 0x12000, scoped, tag = 'internal scratch']
  %s0 = inlined_call_operand.hbm [shape: f32[8,128], index: 0, kind: input, shape index: {}]
  %s1 = inlined_call_operand.hbm [shape: bf16[128,128], index: 1, kind: input, shape index: {}]
  %s2 = inlined_call_operand.hbm [shape: f32[1,128], index: 2, kind: input, shape index: {}]
  %s3 = inlined_call_operand.hbm [shape: bf16[128,256], index: 3, kind: input, shape index: {}]
  %s4 = inlined_call_operand.hbm [shape: f32[1,256], index: 4, kind: input, shape index: {}]
  %s5 = inlined_call_operand.hbm [shape: f32[1,256], index: 5, kind: input, shape index: {}]
  %s6 = inlined_call_operand.hbm [shape: bf16[256,512], index: 6, kind: input, shape index: {}]
  %s7 = inlined_call_operand.hbm [shape: f32[1,512], index: 7, kind: input, shape index: {}]
  %s8 = inlined_call_operand.hbm [shape: f32[1,512], index: 8, kind: input, shape index: {}]
  %s9 = inlined_call_operand.hbm [shape: bf16[512,1024], index: 9, kind: input, shape index: {}]
  %s10 = inlined_call_operand.vmem [shape: f32[1,1024], index: 10, kind: input, shape index: {}]
  %s11 = inlined_call_operand.vmem [shape: f32[1,1024], index: 11, kind: input, shape index: {}]
  %s12 = inlined_call_operand.hbm [shape: bf16[1024,256], index: 12, kind: input, shape index: {}]
  %s13 = inlined_call_operand.vmem [shape: f32[1,256], index: 13, kind: input, shape index: {}]
  %s14 = inlined_call_operand.hbm [shape: f32[8,256], index: 14, kind: output, shape index: {}]
  %s15 = sld [smem:[#allocation0]]
  $region110: #{tpu_custom_call.1} parent=0
    _
  %s17 = ssub.s32 1, %s15
  %s18 = scalar_select 0, %s17, %s15
  $region1: #{tpu_custom_call.1} parent=0
    #allocation2 [shape = 'u8[4096]{0}', space=vmem, size = 0x1000, scoped, tag = 'input window, operand 0, single buffered']
    #allocation3 [shape = 's32[1]{0}', space=sflag, size = 0x4, scoped, tag = 'scoped memory for tpu_custom_call.1']
    #allocation4 [shape = 's32[1]{0}', space=sflag, size = 0x4, scoped, tag = 'scoped memory for tpu_custom_call.1']
    #allocation5 [shape = 'u8[32768]{0}', space=vmem, size = 0x8000, scoped, tag = 'input window, operand 1, single buffered']
    #allocation6 [shape = 's32[1]{0}', space=sflag, size = 0x4, scoped, tag = 'scoped memory for tpu_custom_call.1']
    #allocation7 [shape = 'u8[512]{0}', space=vmem, size = 0x400, scoped, tag = 'input window, operand 2, single buffered']
    #allocation8 [shape = 'u8[65536]{0}', space=vmem, size = 0x10000, scoped, tag = 'input window, operand 3, single buffered']
    #allocation9 [shape = 's32[1]{0}', space=sflag, size = 0x4, scoped, tag = 'scoped memory for tpu_custom_call.1']
    #allocation10 [shape = 'u8[1024]{0}', space=vmem, size = 0x400, scoped, tag = 'input window, operand 4, single buffered']
    #allocation11 [shape = 'u8[1024]{0}', space=vmem, size = 0x400, scoped, tag = 'input window, operand 5, single buffered']
    #allocation12 [shape = 's32[1]{0}', space=sflag, size = 0x4, scoped, tag = 'scoped memory for tpu_custom_call.1']
    #allocation13 [shape = 'u8[262144]{0}', space=vmem, size = 0x40000, scoped, tag = 'input window, operand 6, single buffered']
    #allocation14 [shape = 'u8[2048]{0}', space=vmem, size = 0x800, scoped, tag = 'input window, operand 7, single buffered']
    #allocation15 [shape = 's32[1]{0}', space=sflag, size = 0x4, scoped, tag = 'scoped memory for tpu_custom_call.1']
    #allocation16 [shape = 'u8[2048]{0}', space=vmem, size = 0x800, scoped, tag = 'input window, operand 8, single buffered']
    #allocation17 [shape = 'u8[1048576]{0}', space=vmem, size = 0x100000, scoped, tag = 'input window, operand 9, single buffered']
    #allocation18 [shape = 's32[1]{0}', space=sflag, size = 0x4, scoped, tag = 'scoped memory for tpu_custom_call.1']
    #allocation19 [shape = 'u8[524288]{0}', space=vmem, size = 0x80000, scoped, tag = 'input window, operand 12, single buffered']
    #allocation20 [shape = 'u8[8192]{0}', space=vmem, size = 0x2000, scoped, tag = 'output window, operand 0, single buffered']
    %19 = vsyncpa [#allocation3], 0
    %20 = vsyncpa [#allocation6], 0
    %21 = vsyncpa [#allocation9], 0
    %22 = vsyncpa [#allocation12], 0
    %23 = vsyncpa [#allocation15], 0
    %24 = vsyncpa [#allocation18], 0
    %25 = vsyncpa [#allocation4], 0
    // Predicated region
    $region2: #{tpu_custom_call.1} parent=1 // pred_check
      _
    $region3: #{tpu_custom_call.1} parent=1 // pred_check_branch
      %27 = sbr.rel (0) target = $region5
    $region4: #{tpu_custom_call.1} parent=1 // pred_region
      %s29 = ssub.s32 128, 128
      %30 = vsyncadd [#allocation3], %s29
      %s32 = sshll.u32 [#allocation2], 4
      %s33 = int_to_ptr.vmem [resolvable:$true] %s32
      %35 = dma.hbm_to_vmem [thread:$0]  %s0, 128, %s33, [#allocation3]
    $region5: #{tpu_custom_call.1} parent=1 // pred_fallthru
      _
    // Predicated region
    $region6: #{tpu_custom_call.1} parent=1 // pred_check
      _
    $region7: #{tpu_custom_call.1} parent=1 // pred_check_branch
      %37 = sbr.rel (0) target = $region9
    $region8: #{tpu_custom_call.1} parent=1 // pred_region
      %s39 = ssub.s32 1024, 1024
      %40 = vsyncadd [#allocation6], %s39
      %s41 = sshll.u32 [#allocation5], 4
      %s42 = int_to_ptr.vmem [resolvable:$true] %s41
      %47 = dma.hbm_to_vmem [thread:$0]  %s1, 1024, %s42, [#allocation6], 64, 64, 4
    $region9: #{tpu_custom_call.1} parent=1 // pred_fallthru
      _
    // Predicated region
    $region10: #{tpu_custom_call.1} parent=1 // pred_check
      _
    $region11: #{tpu_custom_call.1} parent=1 // pred_check_branch
      %49 = sbr.rel (0) target = $region13
    $region12: #{tpu_custom_call.1} parent=1 // pred_region
      %s51 = ssub.s32 16, 16
      %52 = vsyncadd [#allocation6], %s51
      %s54 = sshll.u32 [#allocation7], 4
      %s55 = int_to_ptr.vmem [resolvable:$true] %s54
      %57 = dma.hbm_to_vmem [thread:$0]  %s2, 16, %s55, [#allocation6]
    $region13: #{tpu_custom_call.1} parent=1 // pred_fallthru
      _
    // Predicated region
    $region14: #{tpu_custom_call.1} parent=1 // pred_check
      _
    $region15: #{tpu_custom_call.1} parent=1 // pred_check_branch
      %59 = sbr.rel (0) target = $region17
    $region16: #{tpu_custom_call.1} parent=1 // pred_region
      %s61 = ssub.s32 2048, 2048
      %62 = vsyncadd [#allocation9], %s61
      %s63 = sshll.u32 [#allocation8], 4
      %s64 = int_to_ptr.vmem [resolvable:$true] %s63
      %69 = dma.hbm_to_vmem [thread:$0]  %s3, 2048, %s64, [#allocation9], 128, 128, 8
    $region17: #{tpu_custom_call.1} parent=1 // pred_fallthru
      _
    // Predicated region
    $region18: #{tpu_custom_call.1} parent=1 // pred_check
      _
    $region19: #{tpu_custom_call.1} parent=1 // pred_check_branch
      %71 = sbr.rel (0) target = $region21
    $region20: #{tpu_custom_call.1} parent=1 // pred_region
      %s73 = ssub.s32 32, 32
      %74 = vsyncadd [#allocation9], %s73
      %s76 = sshll.u32 [#allocation10], 4
      %s77 = int_to_ptr.vmem [resolvable:$true] %s76
      %79 = dma.hbm_to_vmem [thread:$0]  %s4, 32, %s77, [#allocation9]
    $region21: #{tpu_custom_call.1} parent=1 // pred_fallthru
      _
    // Predicated region
    $region22: #{tpu_custom_call.1} parent=1 // pred_check
      _
    $region23: #{tpu_custom_call.1} parent=1 // pred_check_branch
      %81 = sbr.rel (0) target = $region25
    $region24: #{tpu_custom_call.1} parent=1 // pred_region
      %s83 = ssub.s32 32, 32
      %84 = vsyncadd [#allocation12], %s83
      %s86 = sshll.u32 [#allocation11], 4
      %s87 = int_to_ptr.vmem [resolvable:$true] %s86
      %89 = dma.hbm_to_vmem [thread:$0]  %s5, 32, %s87, [#allocation12]
    $region25: #{tpu_custom_call.1} parent=1 // pred_fallthru
      _
    // Predicated region
    $region26: #{tpu_custom_call.1} parent=1 // pred_check
      _
    $region27: #{tpu_custom_call.1} parent=1 // pred_check_branch
      %91 = sbr.rel (0) target = $region29
    $region28: #{tpu_custom_call.1} parent=1 // pred_region
      %s93 = ssub.s32 8192, 8192
      %94 = vsyncadd [#allocation12], %s93
      %s95 = sshll.u32 [#allocation13], 4
      %s96 = int_to_ptr.vmem [resolvable:$true] %s95
      %101 = dma.hbm_to_vmem [thread:$0]  %s6, 8192, %s96, [#allocation12], 256, 256, 16
    $region29: #{tpu_custom_call.1} parent=1 // pred_fallthru
      _
    // Predicated region
    $region30: #{tpu_custom_call.1} parent=1 // pred_check
      _
    $region31: #{tpu_custom_call.1} parent=1 // pred_check_branch
      %103 = sbr.rel (0) target = $region33
    $region32: #{tpu_custom_call.1} parent=1 // pred_region
      %s105 = ssub.s32 64, 64
      %106 = vsyncadd [#allocation15], %s105
      %s108 = sshll.u32 [#allocation14], 4
      %s109 = int_to_ptr.vmem [resolvable:$true] %s108
      %111 = dma.hbm_to_vmem [thread:$0]  %s7, 64, %s109, [#allocation15]
    $region33: #{tpu_custom_call.1} parent=1 // pred_fallthru
      _
    // Predicated region
    $region34: #{tpu_custom_call.1} parent=1 // pred_check
      _
    $region35: #{tpu_custom_call.1} parent=1 // pred_check_branch
      %113 = sbr.rel (0) target = $region37
    $region36: #{tpu_custom_call.1} parent=1 // pred_region
      %s115 = ssub.s32 64, 64
      %116 = vsyncadd [#allocation15], %s115
      %s118 = sshll.u32 [#allocation16], 4
      %s119 = int_to_ptr.vmem [resolvable:$true] %s118
      %121 = dma.hbm_to_vmem [thread:$0]  %s8, 64, %s119, [#allocation15]
    $region37: #{tpu_custom_call.1} parent=1 // pred_fallthru
      _
    // Predicated region
    $region38: #{tpu_custom_call.1} parent=1 // pred_check
      _
    $region39: #{tpu_custom_call.1} parent=1 // pred_check_branch
      %123 = sbr.rel (0) target = $region41
    $region40: #{tpu_custom_call.1} parent=1 // pred_region
      %s125 = ssub.s32 32768, 32768
      %126 = vsyncadd [#allocation18], %s125
      %s127 = sshll.u32 [#allocation17], 4
      %s128 = int_to_ptr.vmem [resolvable:$true] %s127
      %133 = dma.hbm_to_vmem [thread:$0]  %s9, 32768, %s128, [#allocation18], 512, 512, 32
    $region41: #{tpu_custom_call.1} parent=1 // pred_fallthru
      _
    // Predicated region
    $region42: #{tpu_custom_call.1} parent=1 // pred_check
      _
    $region43: #{tpu_custom_call.1} parent=1 // pred_check_branch
      %135 = sbr.rel (0) target = $region45
    $region44: #{tpu_custom_call.1} parent=1 // pred_region
      _
    $region45: #{tpu_custom_call.1} parent=1 // pred_fallthru
      _
    // Predicated region
    $region46: #{tpu_custom_call.1} parent=1 // pred_check
      _
    $region47: #{tpu_custom_call.1} parent=1 // pred_check_branch
      %137 = sbr.rel (0) target = $region49
    $region48: #{tpu_custom_call.1} parent=1 // pred_region
      _
    $region49: #{tpu_custom_call.1} parent=1 // pred_fallthru
      _
    // Predicated region
    $region50: #{tpu_custom_call.1} parent=1 // pred_check
      _
    $region51: #{tpu_custom_call.1} parent=1 // pred_check_branch
      %139 = sbr.rel (0) target = $region53
    $region52: #{tpu_custom_call.1} parent=1 // pred_region
      %s141 = ssub.s32 16384, 16384
      %142 = vsyncadd [#allocation18], %s141
      %s143 = sshll.u32 [#allocation19], 4
      %s144 = int_to_ptr.vmem [resolvable:$true] %s143
      %149 = dma.hbm_to_vmem [thread:$0]  %s12, 16384, %s144, [#allocation18], 128, 128, 8
    $region53: #{tpu_custom_call.1} parent=1 // pred_fallthru
      _
    // Predicated region
    $region54: #{tpu_custom_call.1} parent=1 // pred_check
      _
    $region55: #{tpu_custom_call.1} parent=1 // pred_check_branch
      %151 = sbr.rel (0) target = $region57
    $region56: #{tpu_custom_call.1} parent=1 // pred_region
      _
    $region57: #{tpu_custom_call.1} parent=1 // pred_fallthru
      _
    // Predicated region
    $region58: #{tpu_custom_call.1} parent=1 // pred_check
      _
    $region59: #{tpu_custom_call.1} parent=1 // pred_check_branch
      %153 = sbr.rel (0) target = $region61
    $region60: #{tpu_custom_call.1} parent=1 // pred_region
      %154 = dma.done [#allocation3], 128
    $region61: #{tpu_custom_call.1} parent=1 // pred_fallthru
      _
    // Predicated region
    $region62: #{tpu_custom_call.1} parent=1 // pred_check
      _
    $region63: #{tpu_custom_call.1} parent=1 // pred_check_branch
      %156 = sbr.rel (0) target = $region65
    $region64: #{tpu_custom_call.1} parent=1 // pred_region
      %157 = dma.done [#allocation6], 1024
    $region65: #{tpu_custom_call.1} parent=1 // pred_fallthru
      _
    // Predicated region
    $region66: #{tpu_custom_call.1} parent=1 // pred_check
      _
    $region67: #{tpu_custom_call.1} parent=1 // pred_check_branch
      %159 = sbr.rel (0) target = $region69
    $region68: #{tpu_custom_call.1} parent=1 // pred_region
      %160 = dma.done [#allocation6], 16
    $region69: #{tpu_custom_call.1} parent=1 // pred_fallthru
      _
    // Predicated region
    $region70: #{tpu_custom_call.1} parent=1 // pred_check
      _
    $region71: #{tpu_custom_call.1} parent=1 // pred_check_branch
      %162 = sbr.rel (0) target = $region73
    $region72: #{tpu_custom_call.1} parent=1 // pred_region
      %163 = dma.done [#allocation9], 2048
    $region73: #{tpu_custom_call.1} parent=1 // pred_fallthru
      _
    // Predicated region
    $region74: #{tpu_custom_call.1} parent=1 // pred_check
      _
    $region75: #{tpu_custom_call.1} parent=1 // pred_check_branch
      %165 = sbr.rel (0) target = $region77
    $region76: #{tpu_custom_call.1} parent=1 // pred_region
      %166 = dma.done [#allocation9], 32
    $region77: #{tpu_custom_call.1} parent=1 // pred_fallthru
      _
    // Predicated region
    $region78: #{tpu_custom_call.1} parent=1 // pred_check
      _
    $region79: #{tpu_custom_call.1} parent=1 // pred_check_branch
      %168 = sbr.rel (0) target = $region81
    $region80: #{tpu_custom_call.1} parent=1 // pred_region
      %169 = dma.done [#allocation12], 32
    $region81: #{tpu_custom_call.1} parent=1 // pred_fallthru
      _
    // Predicated region
    $region82: #{tpu_custom_call.1} parent=1 // pred_check
      _
    $region83: #{tpu_custom_call.1} parent=1 // pred_check_branch
      %171 = sbr.rel (0) target = $region85
    $region84: #{tpu_custom_call.1} parent=1 // pred_region
      %172 = dma.done [#allocation12], 8192
    $region85: #{tpu_custom_call.1} parent=1 // pred_fallthru
      _
    // Predicated region
    $region86: #{tpu_custom_call.1} parent=1 // pred_check
      _
    $region87: #{tpu_custom_call.1} parent=1 // pred_check_branch
      %174 = sbr.rel (0) target = $region89
    $region88: #{tpu_custom_call.1} parent=1 // pred_region
      %175 = dma.done [#allocation15], 64
    $region89: #{tpu_custom_call.1} parent=1 // pred_fallthru
      _
    // Predicated region
    $region90: #{tpu_custom_call.1} parent=1 // pred_check
      _
    $region91: #{tpu_custom_call.1} parent=1 // pred_check_branch
      %177 = sbr.rel (0) target = $region93
    $region92: #{tpu_custom_call.1} parent=1 // pred_region
      %178 = dma.done [#allocation15], 64
    $region93: #{tpu_custom_call.1} parent=1 // pred_fallthru
      _
    // Predicated region
    $region94: #{tpu_custom_call.1} parent=1 // pred_check
      _
    $region95: #{tpu_custom_call.1} parent=1 // pred_check_branch
      %180 = sbr.rel (0) target = $region97
    $region96: #{tpu_custom_call.1} parent=1 // pred_region
      %181 = dma.done [#allocation18], 32768
    $region97: #{tpu_custom_call.1} parent=1 // pred_fallthru
      _
    // Predicated region
    $region98: #{tpu_custom_call.1} parent=1 // pred_check
      _
    $region99: #{tpu_custom_call.1} parent=1 // pred_check_branch
      %183 = sbr.rel (0) target = $region101
    $region100: #{tpu_custom_call.1} parent=1 // pred_region
      %184 = dma.done [#allocation18], 16384
    $region101: #{tpu_custom_call.1} parent=1 // pred_fallthru
      _
    %v186 = vld [vmem:[#allocation2] sm:$0xff]
    %v187 = vpack.c.bf16 %v186, %v186
    %v188 = vld [vmem:[#allocation5] sm:$0xf]
    %v189 = vld [vmem:[#allocation5 + $0x4] sm:$0xf]
    %v190 = vld [vmem:[#allocation5 + $0x8] sm:$0xf]
    %v191 = vld [vmem:[#allocation5 + $0xc] sm:$0xf]
    %v192 = vld [vmem:[#allocation5 + $0x10] sm:$0xf]
    %v193 = vld [vmem:[#allocation5 + $0x14] sm:$0xf]
    %v194 = vld [vmem:[#allocation5 + $0x18] sm:$0xf]
    %v195 = vld [vmem:[#allocation5 + $0x1c] sm:$0xf]
    %v196 = vld [vmem:[#allocation5 + $0x20] sm:$0xf]
    %v197 = vld [vmem:[#allocation5 + $0x24] sm:$0xf]
    %v198 = vld [vmem:[#allocation5 + $0x28] sm:$0xf]
    %v199 = vld [vmem:[#allocation5 + $0x2c] sm:$0xf]
    %v200 = vld [vmem:[#allocation5 + $0x30] sm:$0xf]
    %v201 = vld [vmem:[#allocation5 + $0x34] sm:$0xf]
    %v202 = vld [vmem:[#allocation5 + $0x38] sm:$0xf]
    %v203 = vld [vmem:[#allocation5 + $0x3c] sm:$0xf]
    %v204 = vld [vmem:[#allocation7] sm:$0x1]
    %v206 = vlaneseq
    %v207 = vshrl.u32 %v206, 7
    %v208 = vsub.s32 0, %v207
    %v209 = vrot.slane %v204, %v208
    %v227 = vunpack.c.l.b16 %v188
    %v228 = vunpack.c.l.b16 %v189
    %v229 = vunpack.c.l.b16 %v190
    %v230 = vunpack.c.l.b16 %v191
    %v231 = vunpack.c.l.b16 %v192
    %v232 = vunpack.c.l.b16 %v193
    %v233 = vunpack.c.l.b16 %v194
    %v234 = vunpack.c.l.b16 %v195
    %v235 = vunpack.c.l.b16 %v196
    %v236 = vunpack.c.l.b16 %v197
    %v237 = vunpack.c.l.b16 %v198
    %v238 = vunpack.c.l.b16 %v199
    %v239 = vunpack.c.l.b16 %v200
    %v240 = vunpack.c.l.b16 %v201
    %v241 = vunpack.c.l.b16 %v202
    %v242 = vunpack.c.l.b16 %v203
    %v243 = vpack.c.b16 %v228, %v227
    %v244 = vpack.c.b16 %v230, %v229
    %v245 = vpack.c.b16 %v232, %v231
    %v246 = vpack.c.b16 %v234, %v233
    %v247 = vpack.c.b16 %v236, %v235
    %v248 = vpack.c.b16 %v238, %v237
    %v249 = vpack.c.b16 %v240, %v239
    %v250 = vpack.c.b16 %v242, %v241
    %259 = vmatprep.subr.bf16.mxu0 0
    %260 = vmatpush1.bf16.msra.mxu0 %v250
    %261 = vmatprep.subr.bf16.mxu0 0
    %262 = vmatpush1.bf16.msra.mxu0 %v249
    %263 = vmatprep.subr.bf16.mxu0 0
    %264 = vmatpush1.bf16.msra.mxu0 %v248
    %265 = vmatprep.subr.bf16.mxu0 0
    %266 = vmatpush1.bf16.msra.mxu0 %v247
    %267 = vmatprep.subr.bf16.mxu0 0
    %268 = vmatpush1.bf16.msra.mxu0 %v246
    %269 = vmatprep.subr.bf16.mxu0 0
    %270 = vmatpush1.bf16.msra.mxu0 %v245
    %271 = vmatprep.subr.bf16.mxu0 0
    %272 = vmatpush1.bf16.msra.mxu0 %v244
    %273 = vmatprep.subr.bf16.mxu0 0
    %274 = vmatpush1.bf16.msra.mxu0 %v243
    %275 = vmatprep.subr.bf16.mxu0 0
    %276 = vmatpush2.bf16.msra.mxu0 0
    %277 = vmatprep.subr.bf16.mxu0 0
    %278 = vmatpush2.bf16.msra.mxu0 0
    %279 = vmatprep.subr.bf16.mxu0 0
    %280 = vmatpush2.bf16.msra.mxu0 0
    %281 = vmatprep.subr.bf16.mxu0 0
    %282 = vmatpush2.bf16.msra.mxu0 0
    %283 = vmatprep.subr.bf16.mxu0 0
    %284 = vmatpush2.bf16.msra.mxu0 0
    %285 = vmatprep.subr.bf16.mxu0 0
    %286 = vmatpush2.bf16.msra.mxu0 0
    %287 = vmatprep.subr.bf16.mxu0 0
    %288 = vmatpush2.bf16.msra.mxu0 0
    %289 = vmatprep.subr.bf16.mxu0 0
    %290 = vmatpush2.bf16.msra.mxu0 0
    %291 = vmatprep.mubr.bf16.mxu0 0
    %292 = vmatmul.mubr.bf16.gmra.mxu0 %v187
    %v293 = vpop.f32.mrf.mxu0
    %v294 = vadd.f32 %v209, %v293
    %v295 = vpop.f32.mrf.mxu0
    %v296 = vpop.f32.mrf.mxu0
    %v297 = vpop.f32.mrf.mxu0
    %298 = vdwg.mxu0
    %vm299 = vcmp.gt.f32.partialorder %v294, 0.0
    %v300 = vmul.f32 %v294, 0.2
    %v301 = vsel %vm299, %v294, %v300
    %v302 = vpack.c.bf16 %v301, %v301
    %v303 = vld [vmem:[#allocation8] sm:$0xff]
    %v304 = vld [vmem:[#allocation8 + $0x8] sm:$0xff]
    %v305 = vld [vmem:[#allocation8 + $0x10] sm:$0xff]
    %v306 = vld [vmem:[#allocation8 + $0x18] sm:$0xff]
    %v307 = vld [vmem:[#allocation8 + $0x20] sm:$0xff]
    %v308 = vld [vmem:[#allocation8 + $0x28] sm:$0xff]
    %v309 = vld [vmem:[#allocation8 + $0x30] sm:$0xff]
    %v310 = vld [vmem:[#allocation8 + $0x38] sm:$0xff]
    %v311 = vld [vmem:[#allocation8 + $0x40] sm:$0xff]
    %v312 = vld [vmem:[#allocation8 + $0x48] sm:$0xff]
    %v313 = vld [vmem:[#allocation8 + $0x50] sm:$0xff]
    %v314 = vld [vmem:[#allocation8 + $0x58] sm:$0xff]
    %v315 = vld [vmem:[#allocation8 + $0x60] sm:$0xff]
    %v316 = vld [vmem:[#allocation8 + $0x68] sm:$0xff]
    %v317 = vld [vmem:[#allocation8 + $0x70] sm:$0xff]
    %v318 = vld [vmem:[#allocation8 + $0x78] sm:$0xff]
    %v335 = vunpack.c.l.b16 %v303
    %v336 = vunpack.c.h.b16 %v303
    %v337 = vunpack.c.l.b16 %v304
    %v338 = vunpack.c.h.b16 %v304
    %v339 = vunpack.c.l.b16 %v305
    %v340 = vunpack.c.h.b16 %v305
    %v341 = vunpack.c.l.b16 %v306
    %v342 = vunpack.c.h.b16 %v306
    %v343 = vunpack.c.l.b16 %v307
    %v344 = vunpack.c.h.b16 %v307
    %v345 = vunpack.c.l.b16 %v308
    %v346 = vunpack.c.h.b16 %v308
    %v347 = vunpack.c.l.b16 %v309
    %v348 = vunpack.c.h.b16 %v309
    %v349 = vunpack.c.l.b16 %v310
    %v350 = vunpack.c.h.b16 %v310
    %v351 = vunpack.c.l.b16 %v311
    %v352 = vunpack.c.h.b16 %v311
    %v353 = vunpack.c.l.b16 %v312
    %v354 = vunpack.c.h.b16 %v312
    %v355 = vunpack.c.l.b16 %v313
    %v356 = vunpack.c.h.b16 %v313
    %v357 = vunpack.c.l.b16 %v314
    %v358 = vunpack.c.h.b16 %v314
    %v359 = vunpack.c.l.b16 %v315
    %v360 = vunpack.c.h.b16 %v315
    %v361 = vunpack.c.l.b16 %v316
    %v362 = vunpack.c.h.b16 %v316
    %v363 = vunpack.c.l.b16 %v317
    %v364 = vunpack.c.h.b16 %v317
    %v365 = vunpack.c.l.b16 %v318
    %v366 = vunpack.c.h.b16 %v318
    %v367 = vpack.c.b16 %v337, %v335
    %v368 = vpack.c.b16 %v338, %v336
    %v369 = vpack.c.b16 %v341, %v339
    %v370 = vpack.c.b16 %v342, %v340
    %v371 = vpack.c.b16 %v345, %v343
    %v372 = vpack.c.b16 %v346, %v344
    %v373 = vpack.c.b16 %v349, %v347
    %v374 = vpack.c.b16 %v350, %v348
    %v375 = vpack.c.b16 %v353, %v351
    %v376 = vpack.c.b16 %v354, %v352
    %v377 = vpack.c.b16 %v357, %v355
    %v378 = vpack.c.b16 %v358, %v356
    %v379 = vpack.c.b16 %v361, %v359
    %v380 = vpack.c.b16 %v362, %v360
    %v381 = vpack.c.b16 %v365, %v363
    %v382 = vpack.c.b16 %v366, %v364
    %399 = vmatprep.subr.bf16.mxu0 %v382
    %400 = vmatpush1.bf16.msra.mxu0 %v381
    %401 = vmatprep.subr.bf16.mxu0 %v380
    %402 = vmatpush1.bf16.msra.mxu0 %v379
    %403 = vmatprep.subr.bf16.mxu0 %v378
    %404 = vmatpush1.bf16.msra.mxu0 %v377
    %405 = vmatprep.subr.bf16.mxu0 %v376
    %406 = vmatpush1.bf16.msra.mxu0 %v375
    %407 = vmatprep.subr.bf16.mxu0 %v374
    %408 = vmatpush1.bf16.msra.mxu0 %v373
    %409 = vmatprep.subr.bf16.mxu0 %v372
    %410 = vmatpush1.bf16.msra.mxu0 %v371
    %411 = vmatprep.subr.bf16.mxu0 %v370
    %412 = vmatpush1.bf16.msra.mxu0 %v369
    %413 = vmatprep.subr.bf16.mxu0 %v368
    %414 = vmatpush1.bf16.msra.mxu0 %v367
    %415 = vmatprep.subr.bf16.mxu0 0
    %416 = vmatpush2.bf16.msra.mxu0 0
    %417 = vmatprep.subr.bf16.mxu0 0
    %418 = vmatpush2.bf16.msra.mxu0 0
    %419 = vmatprep.subr.bf16.mxu0 0
    %420 = vmatpush2.bf16.msra.mxu0 0
    %421 = vmatprep.subr.bf16.mxu0 0
    %422 = vmatpush2.bf16.msra.mxu0 0
    %423 = vmatprep.subr.bf16.mxu0 0
    %424 = vmatpush2.bf16.msra.mxu0 0
    %425 = vmatprep.subr.bf16.mxu0 0
    %426 = vmatpush2.bf16.msra.mxu0 0
    %427 = vmatprep.subr.bf16.mxu0 0
    %428 = vmatpush2.bf16.msra.mxu0 0
    %429 = vmatprep.subr.bf16.mxu0 0
    %430 = vmatpush2.bf16.msra.mxu0 0
    %431 = vmatprep.mubr.bf16.mxu0 0
    %432 = vmatmul.mubr.bf16.gmra.mxu0 %v302
    %v433 = vpop.f32.mrf.mxu0
    %v434 = vadd.f32 0.0, %v433
    %v435 = vpop.f32.mrf.mxu0
    %v436 = vadd.f32 0.0, %v435
    %v437 = vpop.f32.mrf.mxu0
    %v438 = vpop.f32.mrf.mxu0
    %439 = vdwg.mxu0
    %v440 = vld [vmem:[#allocation10] sm:$0x3]
    %v441 = vld [vmem:[#allocation11] sm:$0x3]
    %v442 = vrot.slane %v434, 4
    %v443 = vadd.f32 %v434, %v442
    %v444 = vrot.slane %v443, 2
    %v445 = vadd.f32 %v443, %v444
    %v446 = vrot.slane %v445, 1
    %v447 = vadd.f32 %v445, %v446
    %v448 = vrot.slane %v436, 4
    %v449 = vadd.f32 %v436, %v448
    %v450 = vrot.slane %v449, 2
    %v451 = vadd.f32 %v449, %v450
    %v452 = vrot.slane %v451, 1
    %v453 = vadd.f32 %v451, %v452
    %v454 = vrcp.pop 8.0
    %v455 = vmul.f32 %v447, %v454
    %v456 = vmul.f32 %v453, %v454
    %v457 = vmul.f32 %v434, %v434
    %v458 = vmul.f32 %v436, %v436
    %v459 = vrot.slane %v457, 4
    %v460 = vadd.f32 %v457, %v459
    %v461 = vrot.slane %v460, 2
    %v462 = vadd.f32 %v460, %v461
    %v463 = vrot.slane %v462, 1
    %v464 = vadd.f32 %v462, %v463
    %v465 = vrot.slane %v458, 4
    %v466 = vadd.f32 %v458, %v465
    %v467 = vrot.slane %v466, 2
    %v468 = vadd.f32 %v466, %v467
    %v469 = vrot.slane %v468, 1
    %v470 = vadd.f32 %v468, %v469
    %v471 = vmul.f32 %v464, %v454
    %v472 = vmul.f32 %v470, %v454
    %v473 = vmul.f32 %v455, %v455
    %v474 = vmul.f32 %v456, %v456
    %v475 = vsub.f32 %v471, %v473
    %v476 = vsub.f32 %v472, %v474
    %v477 = vadd.f32 %v475, 0.8
    %v478 = vadd.f32 %v476, 0.8
    %v479 = vrsqrt.pop %v477
    %v480 = vrsqrt.pop %v478
    %v482 = vlaneseq
    %v483 = vshrl.u32 %v482, 7
    %v484 = vsub.s32 0, %v483
    %v485 = vrot.slane %v440, %v484
    %v486 = vlaneseq
    %v487 = vshrl.u32 %v486, 7
    %v488 = vsub.s32 1, %v487
    %v489 = vrot.slane %v440, %v488
    %v492 = vmul.f32 %v479, %v485
    %v493 = vmul.f32 %v480, %v489
    %v494 = vsub.f32 %v434, %v455
    %v495 = vsub.f32 %v436, %v456
    %v496 = vlaneseq
    %v497 = vshrl.u32 %v496, 7
    %v498 = vsub.s32 0, %v497
    %v499 = vrot.slane %v492, %v498
    %v500 = vlaneseq
    %v501 = vshrl.u32 %v500, 7
    %v502 = vsub.s32 0, %v501
    %v503 = vrot.slane %v493, %v502
    %v504 = vmul.f32 %v494, %v499
    %v505 = vmul.f32 %v495, %v503
    %v507 = vlaneseq
    %v508 = vshrl.u32 %v507, 7
    %v509 = vsub.s32 0, %v508
    %v510 = vrot.slane %v441, %v509
    %v511 = vlaneseq
    %v512 = vshrl.u32 %v511, 7
    %v513 = vsub.s32 1, %v512
    %v514 = vrot.slane %v441, %v513
    %v517 = vadd.f32 %v504, %v510
    %v518 = vadd.f32 %v505, %v514
    %vm519 = vcmp.gt.f32.partialorder %v517, 0.0
    %vm520 = vcmp.gt.f32.partialorder %v518, 0.0
    %v521 = vmul.f32 %v517, 0.2
    %v522 = vmul.f32 %v518, 0.2
    %v523 = vsel %vm519, %v517, %v521
    %v524 = vsel %vm520, %v518, %v522
    %v525 = vpack.c.bf16 %v523, %v523
    %v526 = vpack.c.bf16 %v524, %v524
    %v527 = vld [vmem:[#allocation13] sm:$0xff]
    %v528 = vld [vmem:[#allocation13 + $0x8] sm:$0xff]
    %v529 = vld [vmem:[#allocation13 + $0x10] sm:$0xff]
    %v530 = vld [vmem:[#allocation13 + $0x18] sm:$0xff]
    %v531 = vld [vmem:[#allocation13 + $0x20] sm:$0xff]
    %v532 = vld [vmem:[#allocation13 + $0x28] sm:$0xff]
    %v533 = vld [vmem:[#allocation13 + $0x30] sm:$0xff]
    %v534 = vld [vmem:[#allocation13 + $0x38] sm:$0xff]
    %v535 = vld [vmem:[#allocation13 + $0x40] sm:$0xff]
    %v536 = vld [vmem:[#allocation13 + $0x48] sm:$0xff]
    %v537 = vld [vmem:[#allocation13 + $0x50] sm:$0xff]
    %v538 = vld [vmem:[#allocation13 + $0x58] sm:$0xff]
    %v539 = vld [vmem:[#allocation13 + $0x60] sm:$0xff]
    %v540 = vld [vmem:[#allocation13 + $0x68] sm:$0xff]
    %v541 = vld [vmem:[#allocation13 + $0x70] sm:$0xff]
    %v542 = vld [vmem:[#allocation13 + $0x78] sm:$0xff]
    %v543 = vld [vmem:[#allocation13 + $0x80] sm:$0xff]
    %v544 = vld [vmem:[#allocation13 + $0x88] sm:$0xff]
    %v545 = vld [vmem:[#allocation13 + $0x90] sm:$0xff]
    %v546 = vld [vmem:[#allocation13 + $0x98] sm:$0xff]
    %v547 = vld [vmem:[#allocation13 + $0xa0] sm:$0xff]
    %v548 = vld [vmem:[#allocation13 + $0xa8] sm:$0xff]
    %v549 = vld [vmem:[#allocation13 + $0xb0] sm:$0xff]
    %v550 = vld [vmem:[#allocation13 + $0xb8] sm:$0xff]
    %v551 = vld [vmem:[#allocation13 + $0xc0] sm:$0xff]
    %v552 = vld [vmem:[#allocation13 + $0xc8] sm:$0xff]
    %v553 = vld [vmem:[#allocation13 + $0xd0] sm:$0xff]
    %v554 = vld [vmem:[#allocation13 + $0xd8] sm:$0xff]
    %v555 = vld [vmem:[#allocation13 + $0xe0] sm:$0xff]
    %v556 = vld [vmem:[#allocation13 + $0xe8] sm:$0xff]
    %v557 = vld [vmem:[#allocation13 + $0xf0] sm:$0xff]
    %v558 = vld [vmem:[#allocation13 + $0xf8] sm:$0xff]
    %v559 = vld [vmem:[#allocation13 + $0x100] sm:$0xff]
    %v560 = vld [vmem:[#allocation13 + $0x108] sm:$0xff]
    %v561 = vld [vmem:[#allocation13 + $0x110] sm:$0xff]
    %v562 = vld [vmem:[#allocation13 + $0x118] sm:$0xff]
    %v563 = vld [vmem:[#allocation13 + $0x120] sm:$0xff]
    %v564 = vld [vmem:[#allocation13 + $0x128] sm:$0xff]
    %v565 = vld [vmem:[#allocation13 + $0x130] sm:$0xff]
    %v566 = vld [vmem:[#allocation13 + $0x138] sm:$0xff]
    %v567 = vld [vmem:[#allocation13 + $0x140] sm:$0xff]
    %v568 = vld [vmem:[#allocation13 + $0x148] sm:$0xff]
    %v569 = vld [vmem:[#allocation13 + $0x150] sm:$0xff]
    %v570 = vld [vmem:[#allocation13 + $0x158] sm:$0xff]
    %v571 = vld [vmem:[#allocation13 + $0x160] sm:$0xff]
    %v572 = vld [vmem:[#allocation13 + $0x168] sm:$0xff]
    %v573 = vld [vmem:[#allocation13 + $0x170] sm:$0xff]
    %v574 = vld [vmem:[#allocation13 + $0x178] sm:$0xff]
    %v575 = vld [vmem:[#allocation13 + $0x180] sm:$0xff]
    %v576 = vld [vmem:[#allocation13 + $0x188] sm:$0xff]
    %v577 = vld [vmem:[#allocation13 + $0x190] sm:$0xff]
    %v578 = vld [vmem:[#allocation13 + $0x198] sm:$0xff]
    %v579 = vld [vmem:[#allocation13 + $0x1a0] sm:$0xff]
    %v580 = vld [vmem:[#allocation13 + $0x1a8] sm:$0xff]
    %v581 = vld [vmem:[#allocation13 + $0x1b0] sm:$0xff]
    %v582 = vld [vmem:[#allocation13 + $0x1b8] sm:$0xff]
    %v583 = vld [vmem:[#allocation13 + $0x1c0] sm:$0xff]
    %v584 = vld [vmem:[#allocation13 + $0x1c8] sm:$0xff]
    %v585 = vld [vmem:[#allocation13 + $0x1d0] sm:$0xff]
    %v586 = vld [vmem:[#allocation13 + $0x1d8] sm:$0xff]
    %v587 = vld [vmem:[#allocation13 + $0x1e0] sm:$0xff]
    %v588 = vld [vmem:[#allocation13 + $0x1e8] sm:$0xff]
    %v589 = vld [vmem:[#allocation13 + $0x1f0] sm:$0xff]
    %v590 = vld [vmem:[#allocation13 + $0x1f8] sm:$0xff]
    %v655 = vunpack.c.l.b16 %v527
    %v656 = vunpack.c.h.b16 %v527
    %v657 = vunpack.c.l.b16 %v528
    %v658 = vunpack.c.h.b16 %v528
    %v659 = vunpack.c.l.b16 %v529
    %v660 = vunpack.c.h.b16 %v529
    %v661 = vunpack.c.l.b16 %v530
    %v662 = vunpack.c.h.b16 %v530
    %v663 = vunpack.c.l.b16 %v531
    %v664 = vunpack.c.h.b16 %v531
    %v665 = vunpack.c.l.b16 %v532
    %v666 = vunpack.c.h.b16 %v532
    %v667 = vunpack.c.l.b16 %v533
    %v668 = vunpack.c.h.b16 %v533
    %v669 = vunpack.c.l.b16 %v534
    %v670 = vunpack.c.h.b16 %v534
    %v671 = vunpack.c.l.b16 %v535
    %v672 = vunpack.c.h.b16 %v535
    %v673 = vunpack.c.l.b16 %v536
    %v674 = vunpack.c.h.b16 %v536
    %v675 = vunpack.c.l.b16 %v537
    %v676 = vunpack.c.h.b16 %v537
    %v677 = vunpack.c.l.b16 %v538
    %v678 = vunpack.c.h.b16 %v538
    %v679 = vunpack.c.l.b16 %v539
    %v680 = vunpack.c.h.b16 %v539
    %v681 = vunpack.c.l.b16 %v540
    %v682 = vunpack.c.h.b16 %v540
    %v683 = vunpack.c.l.b16 %v541
    %v684 = vunpack.c.h.b16 %v541
    %v685 = vunpack.c.l.b16 %v542
    %v686 = vunpack.c.h.b16 %v542
    %v687 = vunpack.c.l.b16 %v543
    %v688 = vunpack.c.h.b16 %v543
    %v689 = vunpack.c.l.b16 %v544
    %v690 = vunpack.c.h.b16 %v544
    %v691 = vunpack.c.l.b16 %v545
    %v692 = vunpack.c.h.b16 %v545
    %v693 = vunpack.c.l.b16 %v546
    %v694 = vunpack.c.h.b16 %v546
    %v695 = vunpack.c.l.b16 %v547
    %v696 = vunpack.c.h.b16 %v547
    %v697 = vunpack.c.l.b16 %v548
    %v698 = vunpack.c.h.b16 %v548
    %v699 = vunpack.c.l.b16 %v549
    %v700 = vunpack.c.h.b16 %v549
    %v701 = vunpack.c.l.b16 %v550
    %v702 = vunpack.c.h.b16 %v550
    %v703 = vunpack.c.l.b16 %v551
    %v704 = vunpack.c.h.b16 %v551
    %v705 = vunpack.c.l.b16 %v552
    %v706 = vunpack.c.h.b16 %v552
    %v707 = vunpack.c.l.b16 %v553
    %v708 = vunpack.c.h.b16 %v553
    %v709 = vunpack.c.l.b16 %v554
    %v710 = vunpack.c.h.b16 %v554
    %v711 = vunpack.c.l.b16 %v555
    %v712 = vunpack.c.h.b16 %v555
    %v713 = vunpack.c.l.b16 %v556
    %v714 = vunpack.c.h.b16 %v556
    %v715 = vunpack.c.l.b16 %v557
    %v716 = vunpack.c.h.b16 %v557
    %v717 = vunpack.c.l.b16 %v558
    %v718 = vunpack.c.h.b16 %v558
    %v719 = vunpack.c.l.b16 %v559
    %v720 = vunpack.c.h.b16 %v559
    %v721 = vunpack.c.l.b16 %v560
    %v722 = vunpack.c.h.b16 %v560
    %v723 = vunpack.c.l.b16 %v561
    %v724 = vunpack.c.h.b16 %v561
    %v725 = vunpack.c.l.b16 %v562
    %v726 = vunpack.c.h.b16 %v562
    %v727 = vunpack.c.l.b16 %v563
    %v728 = vunpack.c.h.b16 %v563
    %v729 = vunpack.c.l.b16 %v564
    %v730 = vunpack.c.h.b16 %v564
    %v731 = vunpack.c.l.b16 %v565
    %v732 = vunpack.c.h.b16 %v565
    %v733 = vunpack.c.l.b16 %v566
    %v734 = vunpack.c.h.b16 %v566
    %v735 = vunpack.c.l.b16 %v567
    %v736 = vunpack.c.h.b16 %v567
    %v737 = vunpack.c.l.b16 %v568
    %v738 = vunpack.c.h.b16 %v568
    %v739 = vunpack.c.l.b16 %v569
    %v740 = vunpack.c.h.b16 %v569
    %v741 = vunpack.c.l.b16 %v570
    %v742 = vunpack.c.h.b16 %v570
    %v743 = vunpack.c.l.b16 %v571
    %v744 = vunpack.c.h.b16 %v571
    %v745 = vunpack.c.l.b16 %v572
    %v746 = vunpack.c.h.b16 %v572
    %v747 = vunpack.c.l.b16 %v573
    %v748 = vunpack.c.h.b16 %v573
    %v749 = vunpack.c.l.b16 %v574
    %v750 = vunpack.c.h.b16 %v574
    %v751 = vunpack.c.l.b16 %v575
    %v752 = vunpack.c.h.b16 %v575
    %v753 = vunpack.c.l.b16 %v576
    %v754 = vunpack.c.h.b16 %v576
    %v755 = vunpack.c.l.b16 %v577
    %v756 = vunpack.c.h.b16 %v577
    %v757 = vunpack.c.l.b16 %v578
    %v758 = vunpack.c.h.b16 %v578
    %v759 = vunpack.c.l.b16 %v579
    %v760 = vunpack.c.h.b16 %v579
    %v761 = vunpack.c.l.b16 %v580
    %v762 = vunpack.c.h.b16 %v580
    %v763 = vunpack.c.l.b16 %v581
    %v764 = vunpack.c.h.b16 %v581
    %v765 = vunpack.c.l.b16 %v582
    %v766 = vunpack.c.h.b16 %v582
    %v767 = vunpack.c.l.b16 %v583
    %v768 = vunpack.c.h.b16 %v583
    %v769 = vunpack.c.l.b16 %v584
    %v770 = vunpack.c.h.b16 %v584
    %v771 = vunpack.c.l.b16 %v585
    %v772 = vunpack.c.h.b16 %v585
    %v773 = vunpack.c.l.b16 %v586
    %v774 = vunpack.c.h.b16 %v586
    %v775 = vunpack.c.l.b16 %v587
    %v776 = vunpack.c.h.b16 %v587
    %v777 = vunpack.c.l.b16 %v588
    %v778 = vunpack.c.h.b16 %v588
    %v779 = vunpack.c.l.b16 %v589
    %v780 = vunpack.c.h.b16 %v589
    %v781 = vunpack.c.l.b16 %v590
    %v782 = vunpack.c.h.b16 %v590
    %v783 = vpack.c.b16 %v659, %v655
    %v784 = vpack.c.b16 %v660, %v656
    %v785 = vpack.c.b16 %v661, %v657
    %v786 = vpack.c.b16 %v662, %v658
    %v787 = vpack.c.b16 %v667, %v663
    %v788 = vpack.c.b16 %v668, %v664
    %v789 = vpack.c.b16 %v669, %v665
    %v790 = vpack.c.b16 %v670, %v666
    %v791 = vpack.c.b16 %v675, %v671
    %v792 = vpack.c.b16 %v676, %v672
    %v793 = vpack.c.b16 %v677, %v673
    %v794 = vpack.c.b16 %v678, %v674
    %v795 = vpack.c.b16 %v683, %v679
    %v796 = vpack.c.b16 %v684, %v680
    %v797 = vpack.c.b16 %v685, %v681
    %v798 = vpack.c.b16 %v686, %v682
    %v799 = vpack.c.b16 %v691, %v687
    %v800 = vpack.c.b16 %v692, %v688
    %v801 = vpack.c.b16 %v693, %v689
    %v802 = vpack.c.b16 %v694, %v690
    %v803 = vpack.c.b16 %v699, %v695
    %v804 = vpack.c.b16 %v700, %v696
    %v805 = vpack.c.b16 %v701, %v697
    %v806 = vpack.c.b16 %v702, %v698
    %v807 = vpack.c.b16 %v707, %v703
    %v808 = vpack.c.b16 %v708, %v704
    %v809 = vpack.c.b16 %v709, %v705
    %v810 = vpack.c.b16 %v710, %v706
    %v811 = vpack.c.b16 %v715, %v711
    %v812 = vpack.c.b16 %v716, %v712
    %v813 = vpack.c.b16 %v717, %v713
    %v814 = vpack.c.b16 %v718, %v714
    %v815 = vpack.c.b16 %v723, %v719
    %v816 = vpack.c.b16 %v724, %v720
    %v817 = vpack.c.b16 %v725, %v721
    %v818 = vpack.c.b16 %v726, %v722
    %v819 = vpack.c.b16 %v731, %v727
    %v820 = vpack.c.b16 %v732, %v728
    %v821 = vpack.c.b16 %v733, %v729
    %v822 = vpack.c.b16 %v734, %v730
    %v823 = vpack.c.b16 %v739, %v735
    %v824 = vpack.c.b16 %v740, %v736
    %v825 = vpack.c.b16 %v741, %v737
    %v826 = vpack.c.b16 %v742, %v738
    %v827 = vpack.c.b16 %v747, %v743
    %v828 = vpack.c.b16 %v748, %v744
    %v829 = vpack.c.b16 %v749, %v745
    %v830 = vpack.c.b16 %v750, %v746
    %v831 = vpack.c.b16 %v755, %v751
    %v832 = vpack.c.b16 %v756, %v752
    %v833 = vpack.c.b16 %v757, %v753
    %v834 = vpack.c.b16 %v758, %v754
    %v835 = vpack.c.b16 %v763, %v759
    %v836 = vpack.c.b16 %v764, %v760
    %v837 = vpack.c.b16 %v765, %v761
    %v838 = vpack.c.b16 %v766, %v762
    %v839 = vpack.c.b16 %v771, %v767
    %v840 = vpack.c.b16 %v772, %v768
    %v841 = vpack.c.b16 %v773, %v769
    %v842 = vpack.c.b16 %v774, %v770
    %v843 = vpack.c.b16 %v779, %v775
    %v844 = vpack.c.b16 %v780, %v776
    %v845 = vpack.c.b16 %v781, %v777
    %v846 = vpack.c.b16 %v782, %v778
    %911 = vmatprep.subr.bf16.mxu0 %v812
    %912 = vmatpush1.bf16.msra.mxu0 %v811
    %913 = vmatprep.subr.bf16.mxu0 %v808
    %914 = vmatpush1.bf16.msra.mxu0 %v807
    %915 = vmatprep.subr.bf16.mxu0 %v804
    %916 = vmatpush1.bf16.msra.mxu0 %v803
    %917 = vmatprep.subr.bf16.mxu0 %v800
    %918 = vmatpush1.bf16.msra.mxu0 %v799
    %919 = vmatprep.subr.bf16.mxu0 %v796
    %920 = vmatpush1.bf16.msra.mxu0 %v795
    %921 = vmatprep.subr.bf16.mxu0 %v792
    %922 = vmatpush1.bf16.msra.mxu0 %v791
    %923 = vmatprep.subr.bf16.mxu0 %v788
    %924 = vmatpush1.bf16.msra.mxu0 %v787
    %925 = vmatprep.subr.bf16.mxu0 %v784
    %926 = vmatpush1.bf16.msra.mxu0 %v783
    %927 = vmatprep.subr.bf16.mxu0 %v844
    %928 = vmatpush2.bf16.msra.mxu0 %v843
    %929 = vmatprep.subr.bf16.mxu0 %v840
    %930 = vmatpush2.bf16.msra.mxu0 %v839
    %931 = vmatprep.subr.bf16.mxu0 %v836
    %932 = vmatpush2.bf16.msra.mxu0 %v835
    %933 = vmatprep.subr.bf16.mxu0 %v832
    %934 = vmatpush2.bf16.msra.mxu0 %v831
    %935 = vmatprep.subr.bf16.mxu0 %v828
    %936 = vmatpush2.bf16.msra.mxu0 %v827
    %937 = vmatprep.subr.bf16.mxu0 %v824
    %938 = vmatpush2.bf16.msra.mxu0 %v823
    %939 = vmatprep.subr.bf16.mxu0 %v820
    %940 = vmatpush2.bf16.msra.mxu0 %v819
    %941 = vmatprep.subr.bf16.mxu0 %v816
    %942 = vmatpush2.bf16.msra.mxu0 %v815
    %943 = vmatprep.mubr.bf16.mxu0 %v526
    %944 = vmatmul.mubr.bf16.gmra.mxu0 %v525
    %v945 = vpop.f32.mrf.mxu0
    %v946 = vadd.f32 0.0, %v945
    %v947 = vpop.f32.mrf.mxu0
    %v948 = vadd.f32 0.0, %v947
    %v949 = vpop.f32.mrf.mxu0
    %v950 = vpop.f32.mrf.mxu0
    %951 = vdwg.mxu0
    %952 = vmatprep.subr.bf16.mxu0 %v814
    %953 = vmatpush1.bf16.msra.mxu0 %v813
    %954 = vmatprep.subr.bf16.mxu0 %v810
    %955 = vmatpush1.bf16.msra.mxu0 %v809
    %956 = vmatprep.subr.bf16.mxu0 %v806
    %957 = vmatpush1.bf16.msra.mxu0 %v805
    %958 = vmatprep.subr.bf16.mxu0 %v802
    %959 = vmatpush1.bf16.msra.mxu0 %v801
    %960 = vmatprep.subr.bf16.mxu0 %v798
    %961 = vmatpush1.bf16.msra.mxu0 %v797
    %962 = vmatprep.subr.bf16.mxu0 %v794
    %963 = vmatpush1.bf16.msra.mxu0 %v793
    %964 = vmatprep.subr.bf16.mxu0 %v790
    %965 = vmatpush1.bf16.msra.mxu0 %v789
    %966 = vmatprep.subr.bf16.mxu0 %v786
    %967 = vmatpush1.bf16.msra.mxu0 %v785
    %968 = vmatprep.subr.bf16.mxu0 %v846
    %969 = vmatpush2.bf16.msra.mxu0 %v845
    %970 = vmatprep.subr.bf16.mxu0 %v842
    %971 = vmatpush2.bf16.msra.mxu0 %v841
    %972 = vmatprep.subr.bf16.mxu0 %v838
    %973 = vmatpush2.bf16.msra.mxu0 %v837
    %974 = vmatprep.subr.bf16.mxu0 %v834
    %975 = vmatpush2.bf16.msra.mxu0 %v833
    %976 = vmatprep.subr.bf16.mxu0 %v830
    %977 = vmatpush2.bf16.msra.mxu0 %v829
    %978 = vmatprep.subr.bf16.mxu0 %v826
    %979 = vmatpush2.bf16.msra.mxu0 %v825
    %980 = vmatprep.subr.bf16.mxu0 %v822
    %981 = vmatpush2.bf16.msra.mxu0 %v821
    %982 = vmatprep.subr.bf16.mxu0 %v818
    %983 = vmatpush2.bf16.msra.mxu0 %v817
    %984 = vmatprep.mubr.bf16.mxu0 %v526
    %985 = vmatmul.mubr.bf16.gmra.mxu0 %v525
    %v986 = vpop.f32.mrf.mxu0
    %v987 = vadd.f32 0.0, %v986
    %v988 = vpop.f32.mrf.mxu0
    %v989 = vadd.f32 0.0, %v988
    %v990 = vpop.f32.mrf.mxu0
    %v991 = vpop.f32.mrf.mxu0
    %992 = vdwg.mxu0
    %v993 = vld [vmem:[#allocation14] sm:$0xf]
    %v994 = vld [vmem:[#allocation16] sm:$0xf]
    %v995 = vrot.slane %v946, 4
    %v996 = vadd.f32 %v946, %v995
    %v997 = vrot.slane %v996, 2
    %v998 = vadd.f32 %v996, %v997
    %v999 = vrot.slane %v998, 1
    %v1000 = vadd.f32 %v998, %v999
    %v1001 = vrot.slane %v948, 4
    %v1002 = vadd.f32 %v948, %v1001
    %v1003 = vrot.slane %v1002, 2
    %v1004 = vadd.f32 %v1002, %v1003
    %v1005 = vrot.slane %v1004, 1
    %v1006 = vadd.f32 %v1004, %v1005
    %v1007 = vrot.slane %v987, 4
    %v1008 = vadd.f32 %v987, %v1007
    %v1009 = vrot.slane %v1008, 2
    %v1010 = vadd.f32 %v1008, %v1009
    %v1011 = vrot.slane %v1010, 1
    %v1012 = vadd.f32 %v1010, %v1011
    %v1013 = vrot.slane %v989, 4
    %v1014 = vadd.f32 %v989, %v1013
    %v1015 = vrot.slane %v1014, 2
    %v1016 = vadd.f32 %v1014, %v1015
    %v1017 = vrot.slane %v1016, 1
    %v1018 = vadd.f32 %v1016, %v1017
    %v1019 = vmul.f32 %v1000, %v454
    %v1020 = vmul.f32 %v1006, %v454
    %v1021 = vmul.f32 %v1012, %v454
    %v1022 = vmul.f32 %v1018, %v454
    %v1023 = vmul.f32 %v946, %v946
    %v1024 = vmul.f32 %v948, %v948
    %v1025 = vmul.f32 %v987, %v987
    %v1026 = vmul.f32 %v989, %v989
    %v1027 = vrot.slane %v1023, 4
    %v1028 = vadd.f32 %v1023, %v1027
    %v1029 = vrot.slane %v1028, 2
    %v1030 = vadd.f32 %v1028, %v1029
    %v1031 = vrot.slane %v1030, 1
    %v1032 = vadd.f32 %v1030, %v1031
    %v1033 = vrot.slane %v1024, 4
    %v1034 = vadd.f32 %v1024, %v1033
    %v1035 = vrot.slane %v1034, 2
    %v1036 = vadd.f32 %v1034, %v1035
    %v1037 = vrot.slane %v1036, 1
    %v1038 = vadd.f32 %v1036, %v1037
    %v1039 = vrot.slane %v1025, 4
    %v1040 = vadd.f32 %v1025, %v1039
    %v1041 = vrot.slane %v1040, 2
    %v1042 = vadd.f32 %v1040, %v1041
    %v1043 = vrot.slane %v1042, 1
    %v1044 = vadd.f32 %v1042, %v1043
    %v1045 = vrot.slane %v1026, 4
    %v1046 = vadd.f32 %v1026, %v1045
    %v1047 = vrot.slane %v1046, 2
    %v1048 = vadd.f32 %v1046, %v1047
    %v1049 = vrot.slane %v1048, 1
    %v1050 = vadd.f32 %v1048, %v1049
    %v1051 = vmul.f32 %v1032, %v454
    %v1052 = vmul.f32 %v1038, %v454
    %v1053 = vmul.f32 %v1044, %v454
    %v1054 = vmul.f32 %v1050, %v454
    %v1055 = vmul.f32 %v1019, %v1019
    %v1056 = vmul.f32 %v1020, %v1020
    %v1057 = vmul.f32 %v1021, %v1021
    %v1058 = vmul.f32 %v1022, %v1022
    %v1059 = vsub.f32 %v1051, %v1055
    %v1060 = vsub.f32 %v1052, %v1056
    %v1061 = vsub.f32 %v1053, %v1057
    %v1062 = vsub.f32 %v1054, %v1058
    %v1063 = vadd.f32 %v1059, 0.8
    %v1064 = vadd.f32 %v1060, 0.8
    %v1065 = vadd.f32 %v1061, 0.8
    %v1066 = vadd.f32 %v1062, 0.8
    %v1067 = vrsqrt.pop %v1063
    %v1068 = vrsqrt.pop %v1064
    %v1069 = vrsqrt.pop %v1065
    %v1070 = vrsqrt.pop %v1066
    %v1072 = vlaneseq
    %v1073 = vshrl.u32 %v1072, 7
    %v1074 = vsub.s32 0, %v1073
    %v1075 = vrot.slane %v993, %v1074
    %v1076 = vlaneseq
    %v1077 = vshrl.u32 %v1076, 7
    %v1078 = vsub.s32 1, %v1077
    %v1079 = vrot.slane %v993, %v1078
    %v1080 = vlaneseq
    %v1081 = vshrl.u32 %v1080, 7
    %v1082 = vsub.s32 2, %v1081
    %v1083 = vrot.slane %v993, %v1082
    %v1084 = vlaneseq
    %v1085 = vshrl.u32 %v1084, 7
    %v1086 = vsub.s32 3, %v1085
    %v1087 = vrot.slane %v993, %v1086
    %v1092 = vmul.f32 %v1067, %v1075
    %v1093 = vmul.f32 %v1068, %v1079
    %v1094 = vmul.f32 %v1069, %v1083
    %v1095 = vmul.f32 %v1070, %v1087
    %v1096 = vsub.f32 %v946, %v1019
    %v1097 = vsub.f32 %v948, %v1020
    %v1098 = vsub.f32 %v987, %v1021
    %v1099 = vsub.f32 %v989, %v1022
    %v1100 = vlaneseq
    %v1101 = vshrl.u32 %v1100, 7
    %v1102 = vsub.s32 0, %v1101
    %v1103 = vrot.slane %v1092, %v1102
    %v1104 = vlaneseq
    %v1105 = vshrl.u32 %v1104, 7
    %v1106 = vsub.s32 0, %v1105
    %v1107 = vrot.slane %v1093, %v1106
    %v1108 = vlaneseq
    %v1109 = vshrl.u32 %v1108, 7
    %v1110 = vsub.s32 0, %v1109
    %v1111 = vrot.slane %v1094, %v1110
    %v1112 = vlaneseq
    %v1113 = vshrl.u32 %v1112, 7
    %v1114 = vsub.s32 0, %v1113
    %v1115 = vrot.slane %v1095, %v1114
    %v1116 = vmul.f32 %v1096, %v1103
    %v1117 = vmul.f32 %v1097, %v1107
    %v1118 = vmul.f32 %v1098, %v1111
    %v1119 = vmul.f32 %v1099, %v1115
    %v1121 = vlaneseq
    %v1122 = vshrl.u32 %v1121, 7
    %v1123 = vsub.s32 0, %v1122
    %v1124 = vrot.slane %v994, %v1123
    %v1125 = vlaneseq
    %v1126 = vshrl.u32 %v1125, 7
    %v1127 = vsub.s32 1, %v1126
    %v1128 = vrot.slane %v994, %v1127
    %v1129 = vlaneseq
    %v1130 = vshrl.u32 %v1129, 7
    %v1131 = vsub.s32 2, %v1130
    %v1132 = vrot.slane %v994, %v1131
    %v1133 = vlaneseq
    %v1134 = vshrl.u32 %v1133, 7
    %v1135 = vsub.s32 3, %v1134
    %v1136 = vrot.slane %v994, %v1135
    %v1141 = vadd.f32 %v1116, %v1124
    %v1142 = vadd.f32 %v1117, %v1128
    %v1143 = vadd.f32 %v1118, %v1132
    %v1144 = vadd.f32 %v1119, %v1136
    %vm1145 = vcmp.gt.f32.partialorder %v1141, 0.0
    %vm1146 = vcmp.gt.f32.partialorder %v1142, 0.0
    %vm1147 = vcmp.gt.f32.partialorder %v1143, 0.0
    %vm1148 = vcmp.gt.f32.partialorder %v1144, 0.0
    %v1149 = vmul.f32 %v1141, 0.2
    %v1150 = vmul.f32 %v1142, 0.2
    %v1151 = vmul.f32 %v1143, 0.2
    %v1152 = vmul.f32 %v1144, 0.2
    %v1153 = vsel %vm1145, %v1141, %v1149
    %v1154 = vsel %vm1146, %v1142, %v1150
    %v1155 = vsel %vm1147, %v1143, %v1151
    %v1156 = vsel %vm1148, %v1144, %v1152
    %v1157 = vpack.c.bf16 %v1153, %v1153
    %v1158 = vpack.c.bf16 %v1154, %v1154
    %v1159 = vpack.c.bf16 %v1155, %v1155
    %v1160 = vpack.c.bf16 %v1156, %v1156
    %v1161 = vld [vmem:[#allocation17] sm:$0xff]
    %v1162 = vld [vmem:[#allocation17 + $0x8] sm:$0xff]
    %v1163 = vld [vmem:[#allocation17 + $0x10] sm:$0xff]
    %v1164 = vld [vmem:[#allocation17 + $0x18] sm:$0xff]
    %v1165 = vld [vmem:[#allocation17 + $0x20] sm:$0xff]
    %v1166 = vld [vmem:[#allocation17 + $0x28] sm:$0xff]
    %v1167 = vld [vmem:[#allocation17 + $0x30] sm:$0xff]
    %v1168 = vld [vmem:[#allocation17 + $0x38] sm:$0xff]
    %v1169 = vld [vmem:[#allocation17 + $0x40] sm:$0xff]
    %v1170 = vld [vmem:[#allocation17 + $0x48] sm:$0xff]
    %v1171 = vld [vmem:[#allocation17 + $0x50] sm:$0xff]
    %v1172 = vld [vmem:[#allocation17 + $0x58] sm:$0xff]
    %v1173 = vld [vmem:[#allocation17 + $0x60] sm:$0xff]
    %v1174 = vld [vmem:[#allocation17 + $0x68] sm:$0xff]
    %v1175 = vld [vmem:[#allocation17 + $0x70] sm:$0xff]
    %v1176 = vld [vmem:[#allocation17 + $0x78] sm:$0xff]
    %v1177 = vld [vmem:[#allocation17 + $0x80] sm:$0xff]
    %v1178 = vld [vmem:[#allocation17 + $0x88] sm:$0xff]
    %v1179 = vld [vmem:[#allocation17 + $0x90] sm:$0xff]
    %v1180 = vld [vmem:[#allocation17 + $0x98] sm:$0xff]
    %v1181 = vld [vmem:[#allocation17 + $0xa0] sm:$0xff]
    %v1182 = vld [vmem:[#allocation17 + $0xa8] sm:$0xff]
    %v1183 = vld [vmem:[#allocation17 + $0xb0] sm:$0xff]
    %v1184 = vld [vmem:[#allocation17 + $0xb8] sm:$0xff]
    %v1185 = vld [vmem:[#allocation17 + $0xc0] sm:$0xff]
    %v1186 = vld [vmem:[#allocation17 + $0xc8] sm:$0xff]
    %v1187 = vld [vmem:[#allocation17 + $0xd0] sm:$0xff]
    %v1188 = vld [vmem:[#allocation17 + $0xd8] sm:$0xff]
    %v1189 = vld [vmem:[#allocation17 + $0xe0] sm:$0xff]
    %v1190 = vld [vmem:[#allocation17 + $0xe8] sm:$0xff]
    %v1191 = vld [vmem:[#allocation17 + $0xf0] sm:$0xff]
    %v1192 = vld [vmem:[#allocation17 + $0xf8] sm:$0xff]
    %v1193 = vld [vmem:[#allocation17 + $0x100] sm:$0xff]
    %v1194 = vld [vmem:[#allocation17 + $0x108] sm:$0xff]
    %v1195 = vld [vmem:[#allocation17 + $0x110] sm:$0xff]
    %v1196 = vld [vmem:[#allocation17 + $0x118] sm:$0xff]
    %v1197 = vld [vmem:[#allocation17 + $0x120] sm:$0xff]
    %v1198 = vld [vmem:[#allocation17 + $0x128] sm:$0xff]
    %v1199 = vld [vmem:[#allocation17 + $0x130] sm:$0xff]
    %v1200 = vld [vmem:[#allocation17 + $0x138] sm:$0xff]
    %v1201 = vld [vmem:[#allocation17 + $0x140] sm:$0xff]
    %v1202 = vld [vmem:[#allocation17 + $0x148] sm:$0xff]
    %v1203 = vld [vmem:[#allocation17 + $0x150] sm:$0xff]
    %v1204 = vld [vmem:[#allocation17 + $0x158] sm:$0xff]
    %v1205 = vld [vmem:[#allocation17 + $0x160] sm:$0xff]
    %v1206 = vld [vmem:[#allocation17 + $0x168] sm:$0xff]
    %v1207 = vld [vmem:[#allocation17 + $0x170] sm:$0xff]
    %v1208 = vld [vmem:[#allocation17 + $0x178] sm:$0xff]
    %v1209 = vld [vmem:[#allocation17 + $0x180] sm:$0xff]
    %v1210 = vld [vmem:[#allocation17 + $0x188] sm:$0xff]
    %v1211 = vld [vmem:[#allocation17 + $0x190] sm:$0xff]
    %v1212 = vld [vmem:[#allocation17 + $0x198] sm:$0xff]
    %v1213 = vld [vmem:[#allocation17 + $0x1a0] sm:$0xff]
    %v1214 = vld [vmem:[#allocation17 + $0x1a8] sm:$0xff]
    %v1215 = vld [vmem:[#allocation17 + $0x1b0] sm:$0xff]
    %v1216 = vld [vmem:[#allocation17 + $0x1b8] sm:$0xff]
    %v1217 = vld [vmem:[#allocation17 + $0x1c0] sm:$0xff]
    %v1218 = vld [vmem:[#allocation17 + $0x1c8] sm:$0xff]
    %v1219 = vld [vmem:[#allocation17 + $0x1d0] sm:$0xff]
    %v1220 = vld [vmem:[#allocation17 + $0x1d8] sm:$0xff]
    %v1221 = vld [vmem:[#allocation17 + $0x1e0] sm:$0xff]
    %v1222 = vld [vmem:[#allocation17 + $0x1e8] sm:$0xff]
    %v1223 = vld [vmem:[#allocation17 + $0x1f0] sm:$0xff]
    %v1224 = vld [vmem:[#allocation17 + $0x1f8] sm:$0xff]
    %v1225 = vld [vmem:[#allocation17 + $0x200] sm:$0xff]
    %v1226 = vld [vmem:[#allocation17 + $0x208] sm:$0xff]
    %v1227 = vld [vmem:[#allocation17 + $0x210] sm:$0xff]
    %v1228 = vld [vmem:[#allocation17 + $0x218] sm:$0xff]
    %v1229 = vld [vmem:[#allocation17 + $0x220] sm:$0xff]
    %v1230 = vld [vmem:[#allocation17 + $0x228] sm:$0xff]
    %v1231 = vld [vmem:[#allocation17 + $0x230] sm:$0xff]
    %v1232 = vld [vmem:[#allocation17 + $0x238] sm:$0xff]
    %v1233 = vld [vmem:[#allocation17 + $0x240] sm:$0xff]
    %v1234 = vld [vmem:[#allocation17 + $0x248] sm:$0xff]
    %v1235 = vld [vmem:[#allocation17 + $0x250] sm:$0xff]
    %v1236 = vld [vmem:[#allocation17 + $0x258] sm:$0xff]
    %v1237 = vld [vmem:[#allocation17 + $0x260] sm:$0xff]
    %v1238 = vld [vmem:[#allocation17 + $0x268] sm:$0xff]
    %v1239 = vld [vmem:[#allocation17 + $0x270] sm:$0xff]
    %v1240 = vld [vmem:[#allocation17 + $0x278] sm:$0xff]
    %v1241 = vld [vmem:[#allocation17 + $0x280] sm:$0xff]
    %v1242 = vld [vmem:[#allocation17 + $0x288] sm:$0xff]
    %v1243 = vld [vmem:[#allocation17 + $0x290] sm:$0xff]
    %v1244 = vld [vmem:[#allocation17 + $0x298] sm:$0xff]
    %v1245 = vld [vmem:[#allocation17 + $0x2a0] sm:$0xff]
    %v1246 = vld [vmem:[#allocation17 + $0x2a8] sm:$0xff]
    %v1247 = vld [vmem:[#allocation17 + $0x2b0] sm:$0xff]
    %v1248 = vld [vmem:[#allocation17 + $0x2b8] sm:$0xff]
    %v1249 = vld [vmem:[#allocation17 + $0x2c0] sm:$0xff]
    %v1250 = vld [vmem:[#allocation17 + $0x2c8] sm:$0xff]
    %v1251 = vld [vmem:[#allocation17 + $0x2d0] sm:$0xff]
    %v1252 = vld [vmem:[#allocation17 + $0x2d8] sm:$0xff]
    %v1253 = vld [vmem:[#allocation17 + $0x2e0] sm:$0xff]
    %v1254 = vld [vmem:[#allocation17 + $0x2e8] sm:$0xff]
    %v1255 = vld [vmem:[#allocation17 + $0x2f0] sm:$0xff]
    %v1256 = vld [vmem:[#allocation17 + $0x2f8] sm:$0xff]
    %v1257 = vld [vmem:[#allocation17 + $0x300] sm:$0xff]
    %v1258 = vld [vmem:[#allocation17 + $0x308] sm:$0xff]
    %v1259 = vld [vmem:[#allocation17 + $0x310] sm:$0xff]
    %v1260 = vld [vmem:[#allocation17 + $0x318] sm:$0xff]
    %v1261 = vld [vmem:[#allocation17 + $0x320] sm:$0xff]
    %v1262 = vld [vmem:[#allocation17 + $0x328] sm:$0xff]
    %v1263 = vld [vmem:[#allocation17 + $0x330] sm:$0xff]
    %v1264 = vld [vmem:[#allocation17 + $0x338] sm:$0xff]
    %v1265 = vld [vmem:[#allocation17 + $0x340] sm:$0xff]
    %v1266 = vld [vmem:[#allocation17 + $0x348] sm:$0xff]
    %v1267 = vld [vmem:[#allocation17 + $0x350] sm:$0xff]
    %v1268 = vld [vmem:[#allocation17 + $0x358] sm:$0xff]
    %v1269 = vld [vmem:[#allocation17 + $0x360] sm:$0xff]
    %v1270 = vld [vmem:[#allocation17 + $0x368] sm:$0xff]
    %v1271 = vld [vmem:[#allocation17 + $0x370] sm:$0xff]
    %v1272 = vld [vmem:[#allocation17 + $0x378] sm:$0xff]
    %v1273 = vld [vmem:[#allocation17 + $0x380] sm:$0xff]
    %v1274 = vld [vmem:[#allocation17 + $0x388] sm:$0xff]
    %v1275 = vld [vmem:[#allocation17 + $0x390] sm:$0xff]
    %v1276 = vld [vmem:[#allocation17 + $0x398] sm:$0xff]
    %v1277 = vld [vmem:[#allocation17 + $0x3a0] sm:$0xff]
    %v1278 = vld [vmem:[#allocation17 + $0x3a8] sm:$0xff]
    %v1279 = vld [vmem:[#allocation17 + $0x3b0] sm:$0xff]
    %v1280 = vld [vmem:[#allocation17 + $0x3b8] sm:$0xff]
    %v1281 = vld [vmem:[#allocation17 + $0x3c0] sm:$0xff]
    %v1282 = vld [vmem:[#allocation17 + $0x3c8] sm:$0xff]
    %v1283 = vld [vmem:[#allocation17 + $0x3d0] sm:$0xff]
    %v1284 = vld [vmem:[#allocation17 + $0x3d8] sm:$0xff]
    %v1285 = vld [vmem:[#allocation17 + $0x3e0] sm:$0xff]
    %v1286 = vld [vmem:[#allocation17 + $0x3e8] sm:$0xff]
    %v1287 = vld [vmem:[#allocation17 + $0x3f0] sm:$0xff]
    %v1288 = vld [vmem:[#allocation17 + $0x3f8] sm:$0xff]
    %v1289 = vld [vmem:[#allocation17 + $0x400] sm:$0xff]
    %v1290 = vld [vmem:[#allocation17 + $0x408] sm:$0xff]
    %v1291 = vld [vmem:[#allocation17 + $0x410] sm:$0xff]
    %v1292 = vld [vmem:[#allocation17 + $0x418] sm:$0xff]
    %v1293 = vld [vmem:[#allocation17 + $0x420] sm:$0xff]
    %v1294 = vld [vmem:[#allocation17 + $0x428] sm:$0xff]
    %v1295 = vld [vmem:[#allocation17 + $0x430] sm:$0xff]
    %v1296 = vld [vmem:[#allocation17 + $0x438] sm:$0xff]
    %v1297 = vld [vmem:[#allocation17 + $0x440] sm:$0xff]
    %v1298 = vld [vmem:[#allocation17 + $0x448] sm:$0xff]
    %v1299 = vld [vmem:[#allocation17 + $0x450] sm:$0xff]
    %v1300 = vld [vmem:[#allocation17 + $0x458] sm:$0xff]
    %v1301 = vld [vmem:[#allocation17 + $0x460] sm:$0xff]
    %v1302 = vld [vmem:[#allocation17 + $0x468] sm:$0xff]
    %v1303 = vld [vmem:[#allocation17 + $0x470] sm:$0xff]
    %v1304 = vld [vmem:[#allocation17 + $0x478] sm:$0xff]
    %v1305 = vld [vmem:[#allocation17 + $0x480] sm:$0xff]
    %v1306 = vld [vmem:[#allocation17 + $0x488] sm:$0xff]
    %v1307 = vld [vmem:[#allocation17 + $0x490] sm:$0xff]
    %v1308 = vld [vmem:[#allocation17 + $0x498] sm:$0xff]
    %v1309 = vld [vmem:[#allocation17 + $0x4a0] sm:$0xff]
    %v1310 = vld [vmem:[#allocation17 + $0x4a8] sm:$0xff]
    %v1311 = vld [vmem:[#allocation17 + $0x4b0] sm:$0xff]
    %v1312 = vld [vmem:[#allocation17 + $0x4b8] sm:$0xff]
    %v1313 = vld [vmem:[#allocation17 + $0x4c0] sm:$0xff]
    %v1314 = vld [vmem:[#allocation17 + $0x4c8] sm:$0xff]
    %v1315 = vld [vmem:[#allocation17 + $0x4d0] sm:$0xff]
    %v1316 = vld [vmem:[#allocation17 + $0x4d8] sm:$0xff]
    %v1317 = vld [vmem:[#allocation17 + $0x4e0] sm:$0xff]
    %v1318 = vld [vmem:[#allocation17 + $0x4e8] sm:$0xff]
    %v1319 = vld [vmem:[#allocation17 + $0x4f0] sm:$0xff]
    %v1320 = vld [vmem:[#allocation17 + $0x4f8] sm:$0xff]
    %v1321 = vld [vmem:[#allocation17 + $0x500] sm:$0xff]
    %v1322 = vld [vmem:[#allocation17 + $0x508] sm:$0xff]
    %v1323 = vld [vmem:[#allocation17 + $0x510] sm:$0xff]
    %v1324 = vld [vmem:[#allocation17 + $0x518] sm:$0xff]
    %v1325 = vld [vmem:[#allocation17 + $0x520] sm:$0xff]
    %v1326 = vld [vmem:[#allocation17 + $0x528] sm:$0xff]
    %v1327 = vld [vmem:[#allocation17 + $0x530] sm:$0xff]
    %v1328 = vld [vmem:[#allocation17 + $0x538] sm:$0xff]
    %v1329 = vld [vmem:[#allocation17 + $0x540] sm:$0xff]
    %v1330 = vld [vmem:[#allocation17 + $0x548] sm:$0xff]
    %v1331 = vld [vmem:[#allocation17 + $0x550] sm:$0xff]
    %v1332 = vld [vmem:[#allocation17 + $0x558] sm:$0xff]
    %v1333 = vld [vmem:[#allocation17 + $0x560] sm:$0xff]
    %v1334 = vld [vmem:[#allocation17 + $0x568] sm:$0xff]
    %v1335 = vld [vmem:[#allocation17 + $0x570] sm:$0xff]
    %v1336 = vld [vmem:[#allocation17 + $0x578] sm:$0xff]
    %v1337 = vld [vmem:[#allocation17 + $0x580] sm:$0xff]
    %v1338 = vld [vmem:[#allocation17 + $0x588] sm:$0xff]
    %v1339 = vld [vmem:[#allocation17 + $0x590] sm:$0xff]
    %v1340 = vld [vmem:[#allocation17 + $0x598] sm:$0xff]
    %v1341 = vld [vmem:[#allocation17 + $0x5a0] sm:$0xff]
    %v1342 = vld [vmem:[#allocation17 + $0x5a8] sm:$0xff]
    %v1343 = vld [vmem:[#allocation17 + $0x5b0] sm:$0xff]
    %v1344 = vld [vmem:[#allocation17 + $0x5b8] sm:$0xff]
    %v1345 = vld [vmem:[#allocation17 + $0x5c0] sm:$0xff]
    %v1346 = vld [vmem:[#allocation17 + $0x5c8] sm:$0xff]
    %v1347 = vld [vmem:[#allocation17 + $0x5d0] sm:$0xff]
    %v1348 = vld [vmem:[#allocation17 + $0x5d8] sm:$0xff]
    %v1349 = vld [vmem:[#allocation17 + $0x5e0] sm:$0xff]
    %v1350 = vld [vmem:[#allocation17 + $0x5e8] sm:$0xff]
    %v1351 = vld [vmem:[#allocation17 + $0x5f0] sm:$0xff]
    %v1352 = vld [vmem:[#allocation17 + $0x5f8] sm:$0xff]
    %v1353 = vld [vmem:[#allocation17 + $0x600] sm:$0xff]
    %v1354 = vld [vmem:[#allocation17 + $0x608] sm:$0xff]
    %v1355 = vld [vmem:[#allocation17 + $0x610] sm:$0xff]
    %v1356 = vld [vmem:[#allocation17 + $0x618] sm:$0xff]
    %v1357 = vld [vmem:[#allocation17 + $0x620] sm:$0xff]
    %v1358 = vld [vmem:[#allocation17 + $0x628] sm:$0xff]
    %v1359 = vld [vmem:[#allocation17 + $0x630] sm:$0xff]
    %v1360 = vld [vmem:[#allocation17 + $0x638] sm:$0xff]
    %v1361 = vld [vmem:[#allocation17 + $0x640] sm:$0xff]
    %v1362 = vld [vmem:[#allocation17 + $0x648] sm:$0xff]
    %v1363 = vld [vmem:[#allocation17 + $0x650] sm:$0xff]
    %v1364 = vld [vmem:[#allocation17 + $0x658] sm:$0xff]
    %v1365 = vld [vmem:[#allocation17 + $0x660] sm:$0xff]
    %v1366 = vld [vmem:[#allocation17 + $0x668] sm:$0xff]
    %v1367 = vld [vmem:[#allocation17 + $0x670] sm:$0xff]
    %v1368 = vld [vmem:[#allocation17 + $0x678] sm:$0xff]
    %v1369 = vld [vmem:[#allocation17 + $0x680] sm:$0xff]
    %v1370 = vld [vmem:[#allocation17 + $0x688] sm:$0xff]
    %v1371 = vld [vmem:[#allocation17 + $0x690] sm:$0xff]
    %v1372 = vld [vmem:[#allocation17 + $0x698] sm:$0xff]
    %v1373 = vld [vmem:[#allocation17 + $0x6a0] sm:$0xff]
    %v1374 = vld [vmem:[#allocation17 + $0x6a8] sm:$0xff]
    %v1375 = vld [vmem:[#allocation17 + $0x6b0] sm:$0xff]
    %v1376 = vld [vmem:[#allocation17 + $0x6b8] sm:$0xff]
    %v1377 = vld [vmem:[#allocation17 + $0x6c0] sm:$0xff]
    %v1378 = vld [vmem:[#allocation17 + $0x6c8] sm:$0xff]
    %v1379 = vld [vmem:[#allocation17 + $0x6d0] sm:$0xff]
    %v1380 = vld [vmem:[#allocation17 + $0x6d8] sm:$0xff]
    %v1381 = vld [vmem:[#allocation17 + $0x6e0] sm:$0xff]
    %v1382 = vld [vmem:[#allocation17 + $0x6e8] sm:$0xff]
    %v1383 = vld [vmem:[#allocation17 + $0x6f0] sm:$0xff]
    %v1384 = vld [vmem:[#allocation17 + $0x6f8] sm:$0xff]
    %v1385 = vld [vmem:[#allocation17 + $0x700] sm:$0xff]
    %v1386 = vld [vmem:[#allocation17 + $0x708] sm:$0xff]
    %v1387 = vld [vmem:[#allocation17 + $0x710] sm:$0xff]
    %v1388 = vld [vmem:[#allocation17 + $0x718] sm:$0xff]
    %v1389 = vld [vmem:[#allocation17 + $0x720] sm:$0xff]
    %v1390 = vld [vmem:[#allocation17 + $0x728] sm:$0xff]
    %v1391 = vld [vmem:[#allocation17 + $0x730] sm:$0xff]
    %v1392 = vld [vmem:[#allocation17 + $0x738] sm:$0xff]
    %v1393 = vld [vmem:[#allocation17 + $0x740] sm:$0xff]
    %v1394 = vld [vmem:[#allocation17 + $0x748] sm:$0xff]
    %v1395 = vld [vmem:[#allocation17 + $0x750] sm:$0xff]
    %v1396 = vld [vmem:[#allocation17 + $0x758] sm:$0xff]
    %v1397 = vld [vmem:[#allocation17 + $0x760] sm:$0xff]
    %v1398 = vld [vmem:[#allocation17 + $0x768] sm:$0xff]
    %v1399 = vld [vmem:[#allocation17 + $0x770] sm:$0xff]
    %v1400 = vld [vmem:[#allocation17 + $0x778] sm:$0xff]
    %v1401 = vld [vmem:[#allocation17 + $0x780] sm:$0xff]
    %v1402 = vld [vmem:[#allocation17 + $0x788] sm:$0xff]
    %v1403 = vld [vmem:[#allocation17 + $0x790] sm:$0xff]
    %v1404 = vld [vmem:[#allocation17 + $0x798] sm:$0xff]
    %v1405 = vld [vmem:[#allocation17 + $0x7a0] sm:$0xff]
    %v1406 = vld [vmem:[#allocation17 + $0x7a8] sm:$0xff]
    %v1407 = vld [vmem:[#allocation17 + $0x7b0] sm:$0xff]
    %v1408 = vld [vmem:[#allocation17 + $0x7b8] sm:$0xff]
    %v1409 = vld [vmem:[#allocation17 + $0x7c0] sm:$0xff]
    %v1410 = vld [vmem:[#allocation17 + $0x7c8] sm:$0xff]
    %v1411 = vld [vmem:[#allocation17 + $0x7d0] sm:$0xff]
    %v1412 = vld [vmem:[#allocation17 + $0x7d8] sm:$0xff]
    %v1413 = vld [vmem:[#allocation17 + $0x7e0] sm:$0xff]
    %v1414 = vld [vmem:[#allocation17 + $0x7e8] sm:$0xff]
    %v1415 = vld [vmem:[#allocation17 + $0x7f0] sm:$0xff]
    %v1416 = vld [vmem:[#allocation17 + $0x7f8] sm:$0xff]
    %v1673 = vunpack.c.l.b16 %v1161
    %v1674 = vunpack.c.h.b16 %v1161
    %v1675 = vunpack.c.l.b16 %v1162
    %v1676 = vunpack.c.h.b16 %v1162
    %v1677 = vunpack.c.l.b16 %v1163
    %v1678 = vunpack.c.h.b16 %v1163
    %v1679 = vunpack.c.l.b16 %v1164
    %v1680 = vunpack.c.h.b16 %v1164
    %v1681 = vunpack.c.l.b16 %v1165
    %v1682 = vunpack.c.h.b16 %v1165
    %v1683 = vunpack.c.l.b16 %v1166
    %v1684 = vunpack.c.h.b16 %v1166
    %v1685 = vunpack.c.l.b16 %v1167
    %v1686 = vunpack.c.h.b16 %v1167
    %v1687 = vunpack.c.l.b16 %v1168
    %v1688 = vunpack.c.h.b16 %v1168
    %v1689 = vunpack.c.l.b16 %v1169
    %v1690 = vunpack.c.h.b16 %v1169
    %v1691 = vunpack.c.l.b16 %v1170
    %v1692 = vunpack.c.h.b16 %v1170
    %v1693 = vunpack.c.l.b16 %v1171
    %v1694 = vunpack.c.h.b16 %v1171
    %v1695 = vunpack.c.l.b16 %v1172
    %v1696 = vunpack.c.h.b16 %v1172
    %v1697 = vunpack.c.l.b16 %v1173
    %v1698 = vunpack.c.h.b16 %v1173
    %v1699 = vunpack.c.l.b16 %v1174
    %v1700 = vunpack.c.h.b16 %v1174
    %v1701 = vunpack.c.l.b16 %v1175
    %v1702 = vunpack.c.h.b16 %v1175
    %v1703 = vunpack.c.l.b16 %v1176
    %v1704 = vunpack.c.h.b16 %v1176
    %v1705 = vunpack.c.l.b16 %v1177
    %v1706 = vunpack.c.h.b16 %v1177
    %v1707 = vunpack.c.l.b16 %v1178
    %v1708 = vunpack.c.h.b16 %v1178
    %v1709 = vunpack.c.l.b16 %v1179
    %v1710 = vunpack.c.h.b16 %v1179
    %v1711 = vunpack.c.l.b16 %v1180
    %v1712 = vunpack.c.h.b16 %v1180
    %v1713 = vunpack.c.l.b16 %v1181
    %v1714 = vunpack.c.h.b16 %v1181
    %v1715 = vunpack.c.l.b16 %v1182
    %v1716 = vunpack.c.h.b16 %v1182
    %v1717 = vunpack.c.l.b16 %v1183
    %v1718 = vunpack.c.h.b16 %v1183
    %v1719 = vunpack.c.l.b16 %v1184
    %v1720 = vunpack.c.h.b16 %v1184
    %v1721 = vunpack.c.l.b16 %v1185
    %v1722 = vunpack.c.h.b16 %v1185
    %v1723 = vunpack.c.l.b16 %v1186
    %v1724 = vunpack.c.h.b16 %v1186
    %v1725 = vunpack.c.l.b16 %v1187
    %v1726 = vunpack.c.h.b16 %v1187
    %v1727 = vunpack.c.l.b16 %v1188
    %v1728 = vunpack.c.h.b16 %v1188
    %v1729 = vunpack.c.l.b16 %v1189
    %v1730 = vunpack.c.h.b16 %v1189
    %v1731 = vunpack.c.l.b16 %v1190
    %v1732 = vunpack.c.h.b16 %v1190
    %v1733 = vunpack.c.l.b16 %v1191
    %v1734 = vunpack.c.h.b16 %v1191
    %v1735 = vunpack.c.l.b16 %v1192
    %v1736 = vunpack.c.h.b16 %v1192
    %v1737 = vunpack.c.l.b16 %v1193
    %v1738 = vunpack.c.h.b16 %v1193
    %v1739 = vunpack.c.l.b16 %v1194
    %v1740 = vunpack.c.h.b16 %v1194
    %v1741 = vunpack.c.l.b16 %v1195
    %v1742 = vunpack.c.h.b16 %v1195
    %v1743 = vunpack.c.l.b16 %v1196
    %v1744 = vunpack.c.h.b16 %v1196
    %v1745 = vunpack.c.l.b16 %v1197
    %v1746 = vunpack.c.h.b16 %v1197
    %v1747 = vunpack.c.l.b16 %v1198
    %v1748 = vunpack.c.h.b16 %v1198
    %v1749 = vunpack.c.l.b16 %v1199
    %v1750 = vunpack.c.h.b16 %v1199
    %v1751 = vunpack.c.l.b16 %v1200
    %v1752 = vunpack.c.h.b16 %v1200
    %v1753 = vunpack.c.l.b16 %v1201
    %v1754 = vunpack.c.h.b16 %v1201
    %v1755 = vunpack.c.l.b16 %v1202
    %v1756 = vunpack.c.h.b16 %v1202
    %v1757 = vunpack.c.l.b16 %v1203
    %v1758 = vunpack.c.h.b16 %v1203
    %v1759 = vunpack.c.l.b16 %v1204
    %v1760 = vunpack.c.h.b16 %v1204
    %v1761 = vunpack.c.l.b16 %v1205
    %v1762 = vunpack.c.h.b16 %v1205
    %v1763 = vunpack.c.l.b16 %v1206
    %v1764 = vunpack.c.h.b16 %v1206
    %v1765 = vunpack.c.l.b16 %v1207
    %v1766 = vunpack.c.h.b16 %v1207
    %v1767 = vunpack.c.l.b16 %v1208
    %v1768 = vunpack.c.h.b16 %v1208
    %v1769 = vunpack.c.l.b16 %v1209
    %v1770 = vunpack.c.h.b16 %v1209
    %v1771 = vunpack.c.l.b16 %v1210
    %v1772 = vunpack.c.h.b16 %v1210
    %v1773 = vunpack.c.l.b16 %v1211
    %v1774 = vunpack.c.h.b16 %v1211
    %v1775 = vunpack.c.l.b16 %v1212
    %v1776 = vunpack.c.h.b16 %v1212
    %v1777 = vunpack.c.l.b16 %v1213
    %v1778 = vunpack.c.h.b16 %v1213
    %v1779 = vunpack.c.l.b16 %v1214
    %v1780 = vunpack.c.h.b16 %v1214
    %v1781 = vunpack.c.l.b16 %v1215
    %v1782 = vunpack.c.h.b16 %v1215
    %v1783 = vunpack.c.l.b16 %v1216
    %v1784 = vunpack.c.h.b16 %v1216
    %v1785 = vunpack.c.l.b16 %v1217
    %v1786 = vunpack.c.h.b16 %v1217
    %v1787 = vunpack.c.l.b16 %v1218
    %v1788 = vunpack.c.h.b16 %v1218
    %v1789 = vunpack.c.l.b16 %v1219
    %v1790 = vunpack.c.h.b16 %v1219
    %v1791 = vunpack.c.l.b16 %v1220
    %v1792 = vunpack.c.h.b16 %v1220
    %v1793 = vunpack.c.l.b16 %v1221
    %v1794 = vunpack.c.h.b16 %v1221
    %v1795 = vunpack.c.l.b16 %v1222
    %v1796 = vunpack.c.h.b16 %v1222
    %v1797 = vunpack.c.l.b16 %v1223
    %v1798 = vunpack.c.h.b16 %v1223
    %v1799 = vunpack.c.l.b16 %v1224
    %v1800 = vunpack.c.h.b16 %v1224
    %v1801 = vunpack.c.l.b16 %v1225
    %v1802 = vunpack.c.h.b16 %v1225
    %v1803 = vunpack.c.l.b16 %v1226
    %v1804 = vunpack.c.h.b16 %v1226
    %v1805 = vunpack.c.l.b16 %v1227
    %v1806 = vunpack.c.h.b16 %v1227
    %v1807 = vunpack.c.l.b16 %v1228
    %v1808 = vunpack.c.h.b16 %v1228
    %v1809 = vunpack.c.l.b16 %v1229
    %v1810 = vunpack.c.h.b16 %v1229
    %v1811 = vunpack.c.l.b16 %v1230
    %v1812 = vunpack.c.h.b16 %v1230
    %v1813 = vunpack.c.l.b16 %v1231
    %v1814 = vunpack.c.h.b16 %v1231
    %v1815 = vunpack.c.l.b16 %v1232
    %v1816 = vunpack.c.h.b16 %v1232
    %v1817 = vunpack.c.l.b16 %v1233
    %v1818 = vunpack.c.h.b16 %v1233
    %v1819 = vunpack.c.l.b16 %v1234
    %v1820 = vunpack.c.h.b16 %v1234
    %v1821 = vunpack.c.l.b16 %v1235
    %v1822 = vunpack.c.h.b16 %v1235
    %v1823 = vunpack.c.l.b16 %v1236
    %v1824 = vunpack.c.h.b16 %v1236
    %v1825 = vunpack.c.l.b16 %v1237
    %v1826 = vunpack.c.h.b16 %v1237
    %v1827 = vunpack.c.l.b16 %v1238
    %v1828 = vunpack.c.h.b16 %v1238
    %v1829 = vunpack.c.l.b16 %v1239
    %v1830 = vunpack.c.h.b16 %v1239
    %v1831 = vunpack.c.l.b16 %v1240
    %v1832 = vunpack.c.h.b16 %v1240
    %v1833 = vunpack.c.l.b16 %v1241
    %v1834 = vunpack.c.h.b16 %v1241
    %v1835 = vunpack.c.l.b16 %v1242
    %v1836 = vunpack.c.h.b16 %v1242
    %v1837 = vunpack.c.l.b16 %v1243
    %v1838 = vunpack.c.h.b16 %v1243
    %v1839 = vunpack.c.l.b16 %v1244
    %v1840 = vunpack.c.h.b16 %v1244
    %v1841 = vunpack.c.l.b16 %v1245
    %v1842 = vunpack.c.h.b16 %v1245
    %v1843 = vunpack.c.l.b16 %v1246
    %v1844 = vunpack.c.h.b16 %v1246
    %v1845 = vunpack.c.l.b16 %v1247
    %v1846 = vunpack.c.h.b16 %v1247
    %v1847 = vunpack.c.l.b16 %v1248
    %v1848 = vunpack.c.h.b16 %v1248
    %v1849 = vunpack.c.l.b16 %v1249
    %v1850 = vunpack.c.h.b16 %v1249
    %v1851 = vunpack.c.l.b16 %v1250
    %v1852 = vunpack.c.h.b16 %v1250
    %v1853 = vunpack.c.l.b16 %v1251
    %v1854 = vunpack.c.h.b16 %v1251
    %v1855 = vunpack.c.l.b16 %v1252
    %v1856 = vunpack.c.h.b16 %v1252
    %v1857 = vunpack.c.l.b16 %v1253
    %v1858 = vunpack.c.h.b16 %v1253
    %v1859 = vunpack.c.l.b16 %v1254
    %v1860 = vunpack.c.h.b16 %v1254
    %v1861 = vunpack.c.l.b16 %v1255
    %v1862 = vunpack.c.h.b16 %v1255
    %v1863 = vunpack.c.l.b16 %v1256
    %v1864 = vunpack.c.h.b16 %v1256
    %v1865 = vunpack.c.l.b16 %v1257
    %v1866 = vunpack.c.h.b16 %v1257
    %v1867 = vunpack.c.l.b16 %v1258
    %v1868 = vunpack.c.h.b16 %v1258
    %v1869 = vunpack.c.l.b16 %v1259
    %v1870 = vunpack.c.h.b16 %v1259
    %v1871 = vunpack.c.l.b16 %v1260
    %v1872 = vunpack.c.h.b16 %v1260
    %v1873 = vunpack.c.l.b16 %v1261
    %v1874 = vunpack.c.h.b16 %v1261
    %v1875 = vunpack.c.l.b16 %v1262
    %v1876 = vunpack.c.h.b16 %v1262
    %v1877 = vunpack.c.l.b16 %v1263
    %v1878 = vunpack.c.h.b16 %v1263
    %v1879 = vunpack.c.l.b16 %v1264
    %v1880 = vunpack.c.h.b16 %v1264
    %v1881 = vunpack.c.l.b16 %v1265
    %v1882 = vunpack.c.h.b16 %v1265
    %v1883 = vunpack.c.l.b16 %v1266
    %v1884 = vunpack.c.h.b16 %v1266
    %v1885 = vunpack.c.l.b16 %v1267
    %v1886 = vunpack.c.h.b16 %v1267
    %v1887 = vunpack.c.l.b16 %v1268
    %v1888 = vunpack.c.h.b16 %v1268
    %v1889 = vunpack.c.l.b16 %v1269
    %v1890 = vunpack.c.h.b16 %v1269
    %v1891 = vunpack.c.l.b16 %v1270
    %v1892 = vunpack.c.h.b16 %v1270
    %v1893 = vunpack.c.l.b16 %v1271
    %v1894 = vunpack.c.h.b16 %v1271
    %v1895 = vunpack.c.l.b16 %v1272
    %v1896 = vunpack.c.h.b16 %v1272
    %v1897 = vunpack.c.l.b16 %v1273
    %v1898 = vunpack.c.h.b16 %v1273
    %v1899 = vunpack.c.l.b16 %v1274
    %v1900 = vunpack.c.h.b16 %v1274
    %v1901 = vunpack.c.l.b16 %v1275
    %v1902 = vunpack.c.h.b16 %v1275
    %v1903 = vunpack.c.l.b16 %v1276
    %v1904 = vunpack.c.h.b16 %v1276
    %v1905 = vunpack.c.l.b16 %v1277
    %v1906 = vunpack.c.h.b16 %v1277
    %v1907 = vunpack.c.l.b16 %v1278
    %v1908 = vunpack.c.h.b16 %v1278
    %v1909 = vunpack.c.l.b16 %v1279
    %v1910 = vunpack.c.h.b16 %v1279
    %v1911 = vunpack.c.l.b16 %v1280
    %v1912 = vunpack.c.h.b16 %v1280
    %v1913 = vunpack.c.l.b16 %v1281
    %v1914 = vunpack.c.h.b16 %v1281
    %v1915 = vunpack.c.l.b16 %v1282
    %v1916 = vunpack.c.h.b16 %v1282
    %v1917 = vunpack.c.l.b16 %v1283
    %v1918 = vunpack.c.h.b16 %v1283
    %v1919 = vunpack.c.l.b16 %v1284
    %v1920 = vunpack.c.h.b16 %v1284
    %v1921 = vunpack.c.l.b16 %v1285
    %v1922 = vunpack.c.h.b16 %v1285
    %v1923 = vunpack.c.l.b16 %v1286
    %v1924 = vunpack.c.h.b16 %v1286
    %v1925 = vunpack.c.l.b16 %v1287
    %v1926 = vunpack.c.h.b16 %v1287
    %v1927 = vunpack.c.l.b16 %v1288
    %v1928 = vunpack.c.h.b16 %v1288
    %v1929 = vunpack.c.l.b16 %v1289
    %v1930 = vunpack.c.h.b16 %v1289
    %v1931 = vunpack.c.l.b16 %v1290
    %v1932 = vunpack.c.h.b16 %v1290
    %v1933 = vunpack.c.l.b16 %v1291
    %v1934 = vunpack.c.h.b16 %v1291
    %v1935 = vunpack.c.l.b16 %v1292
    %v1936 = vunpack.c.h.b16 %v1292
    %v1937 = vunpack.c.l.b16 %v1293
    %v1938 = vunpack.c.h.b16 %v1293
    %v1939 = vunpack.c.l.b16 %v1294
    %v1940 = vunpack.c.h.b16 %v1294
    %v1941 = vunpack.c.l.b16 %v1295
    %v1942 = vunpack.c.h.b16 %v1295
    %v1943 = vunpack.c.l.b16 %v1296
    %v1944 = vunpack.c.h.b16 %v1296
    %v1945 = vunpack.c.l.b16 %v1297
    %v1946 = vunpack.c.h.b16 %v1297
    %v1947 = vunpack.c.l.b16 %v1298
    %v1948 = vunpack.c.h.b16 %v1298
    %v1949 = vunpack.c.l.b16 %v1299
    %v1950 = vunpack.c.h.b16 %v1299
    %v1951 = vunpack.c.l.b16 %v1300
    %v1952 = vunpack.c.h.b16 %v1300
    %v1953 = vunpack.c.l.b16 %v1301
    %v1954 = vunpack.c.h.b16 %v1301
    %v1955 = vunpack.c.l.b16 %v1302
    %v1956 = vunpack.c.h.b16 %v1302
    %v1957 = vunpack.c.l.b16 %v1303
    %v1958 = vunpack.c.h.b16 %v1303
    %v1959 = vunpack.c.l.b16 %v1304
    %v1960 = vunpack.c.h.b16 %v1304
    %v1961 = vunpack.c.l.b16 %v1305
    %v1962 = vunpack.c.h.b16 %v1305
    %v1963 = vunpack.c.l.b16 %v1306
    %v1964 = vunpack.c.h.b16 %v1306
    %v1965 = vunpack.c.l.b16 %v1307
    %v1966 = vunpack.c.h.b16 %v1307
    %v1967 = vunpack.c.l.b16 %v1308
    %v1968 = vunpack.c.h.b16 %v1308
    %v1969 = vunpack.c.l.b16 %v1309
    %v1970 = vunpack.c.h.b16 %v1309
    %v1971 = vunpack.c.l.b16 %v1310
    %v1972 = vunpack.c.h.b16 %v1310
    %v1973 = vunpack.c.l.b16 %v1311
    %v1974 = vunpack.c.h.b16 %v1311
    %v1975 = vunpack.c.l.b16 %v1312
    %v1976 = vunpack.c.h.b16 %v1312
    %v1977 = vunpack.c.l.b16 %v1313
    %v1978 = vunpack.c.h.b16 %v1313
    %v1979 = vunpack.c.l.b16 %v1314
    %v1980 = vunpack.c.h.b16 %v1314
    %v1981 = vunpack.c.l.b16 %v1315
    %v1982 = vunpack.c.h.b16 %v1315
    %v1983 = vunpack.c.l.b16 %v1316
    %v1984 = vunpack.c.h.b16 %v1316
    %v1985 = vunpack.c.l.b16 %v1317
    %v1986 = vunpack.c.h.b16 %v1317
    %v1987 = vunpack.c.l.b16 %v1318
    %v1988 = vunpack.c.h.b16 %v1318
    %v1989 = vunpack.c.l.b16 %v1319
    %v1990 = vunpack.c.h.b16 %v1319
    %v1991 = vunpack.c.l.b16 %v1320
    %v1992 = vunpack.c.h.b16 %v1320
    %v1993 = vunpack.c.l.b16 %v1321
    %v1994 = vunpack.c.h.b16 %v1321
    %v1995 = vunpack.c.l.b16 %v1322
    %v1996 = vunpack.c.h.b16 %v1322
    %v1997 = vunpack.c.l.b16 %v1323
    %v1998 = vunpack.c.h.b16 %v1323
    %v1999 = vunpack.c.l.b16 %v1324
    %v2000 = vunpack.c.h.b16 %v1324
    %v2001 = vunpack.c.l.b16 %v1325
    %v2002 = vunpack.c.h.b16 %v1325
    %v2003 = vunpack.c.l.b16 %v1326
    %v2004 = vunpack.c.h.b16 %v1326
    %v2005 = vunpack.c.l.b16 %v1327
    %v2006 = vunpack.c.h.b16 %v1327
    %v2007 = vunpack.c.l.b16 %v1328
    %v2008 = vunpack.c.h.b16 %v1328
    %v2009 = vunpack.c.l.b16 %v1329
    %v2010 = vunpack.c.h.b16 %v1329
    %v2011 = vunpack.c.l.b16 %v1330
    %v2012 = vunpack.c.h.b16 %v1330
    %v2013 = vunpack.c.l.b16 %v1331
    %v2014 = vunpack.c.h.b16 %v1331
    %v2015 = vunpack.c.l.b16 %v1332
    %v2016 = vunpack.c.h.b16 %v1332
    %v2017 = vunpack.c.l.b16 %v1333
    %v2018 = vunpack.c.h.b16 %v1333
    %v2019 = vunpack.c.l.b16 %v1334
    %v2020 = vunpack.c.h.b16 %v1334
    %v2021 = vunpack.c.l.b16 %v1335
    %v2022 = vunpack.c.h.b16 %v1335
    %v2023 = vunpack.c.l.b16 %v1336
    %v2024 = vunpack.c.h.b16 %v1336
    %v2025 = vunpack.c.l.b16 %v1337
    %v2026 = vunpack.c.h.b16 %v1337
    %v2027 = vunpack.c.l.b16 %v1338
    %v2028 = vunpack.c.h.b16 %v1338
    %v2029 = vunpack.c.l.b16 %v1339
    %v2030 = vunpack.c.h.b16 %v1339
    %v2031 = vunpack.c.l.b16 %v1340
    %v2032 = vunpack.c.h.b16 %v1340
    %v2033 = vunpack.c.l.b16 %v1341
    %v2034 = vunpack.c.h.b16 %v1341
    %v2035 = vunpack.c.l.b16 %v1342
    %v2036 = vunpack.c.h.b16 %v1342
    %v2037 = vunpack.c.l.b16 %v1343
    %v2038 = vunpack.c.h.b16 %v1343
    %v2039 = vunpack.c.l.b16 %v1344
    %v2040 = vunpack.c.h.b16 %v1344
    %v2041 = vunpack.c.l.b16 %v1345
    %v2042 = vunpack.c.h.b16 %v1345
    %v2043 = vunpack.c.l.b16 %v1346
    %v2044 = vunpack.c.h.b16 %v1346
    %v2045 = vunpack.c.l.b16 %v1347
    %v2046 = vunpack.c.h.b16 %v1347
    %v2047 = vunpack.c.l.b16 %v1348
    %v2048 = vunpack.c.h.b16 %v1348
    %v2049 = vunpack.c.l.b16 %v1349
    %v2050 = vunpack.c.h.b16 %v1349
    %v2051 = vunpack.c.l.b16 %v1350
    %v2052 = vunpack.c.h.b16 %v1350
    %v2053 = vunpack.c.l.b16 %v1351
    %v2054 = vunpack.c.h.b16 %v1351
    %v2055 = vunpack.c.l.b16 %v1352
    %v2056 = vunpack.c.h.b16 %v1352
    %v2057 = vunpack.c.l.b16 %v1353
    %v2058 = vunpack.c.h.b16 %v1353
    %v2059 = vunpack.c.l.b16 %v1354
    %v2060 = vunpack.c.h.b16 %v1354
    %v2061 = vunpack.c.l.b16 %v1355
    %v2062 = vunpack.c.h.b16 %v1355
    %v2063 = vunpack.c.l.b16 %v1356
    %v2064 = vunpack.c.h.b16 %v1356
    %v2065 = vunpack.c.l.b16 %v1357
    %v2066 = vunpack.c.h.b16 %v1357
    %v2067 = vunpack.c.l.b16 %v1358
    %v2068 = vunpack.c.h.b16 %v1358
    %v2069 = vunpack.c.l.b16 %v1359
    %v2070 = vunpack.c.h.b16 %v1359
    %v2071 = vunpack.c.l.b16 %v1360
    %v2072 = vunpack.c.h.b16 %v1360
    %v2073 = vunpack.c.l.b16 %v1361
    %v2074 = vunpack.c.h.b16 %v1361
    %v2075 = vunpack.c.l.b16 %v1362
    %v2076 = vunpack.c.h.b16 %v1362
    %v2077 = vunpack.c.l.b16 %v1363
    %v2078 = vunpack.c.h.b16 %v1363
    %v2079 = vunpack.c.l.b16 %v1364
    %v2080 = vunpack.c.h.b16 %v1364
    %v2081 = vunpack.c.l.b16 %v1365
    %v2082 = vunpack.c.h.b16 %v1365
    %v2083 = vunpack.c.l.b16 %v1366
    %v2084 = vunpack.c.h.b16 %v1366
    %v2085 = vunpack.c.l.b16 %v1367
    %v2086 = vunpack.c.h.b16 %v1367
    %v2087 = vunpack.c.l.b16 %v1368
    %v2088 = vunpack.c.h.b16 %v1368
    %v2089 = vunpack.c.l.b16 %v1369
    %v2090 = vunpack.c.h.b16 %v1369
    %v2091 = vunpack.c.l.b16 %v1370
    %v2092 = vunpack.c.h.b16 %v1370
    %v2093 = vunpack.c.l.b16 %v1371
    %v2094 = vunpack.c.h.b16 %v1371
    %v2095 = vunpack.c.l.b16 %v1372
    %v2096 = vunpack.c.h.b16 %v1372
    %v2097 = vunpack.c.l.b16 %v1373
    %v2098 = vunpack.c.h.b16 %v1373
    %v2099 = vunpack.c.l.b16 %v1374
    %v2100 = vunpack.c.h.b16 %v1374
    %v2101 = vunpack.c.l.b16 %v1375
    %v2102 = vunpack.c.h.b16 %v1375
    %v2103 = vunpack.c.l.b16 %v1376
    %v2104 = vunpack.c.h.b16 %v1376
    %v2105 = vunpack.c.l.b16 %v1377
    %v2106 = vunpack.c.h.b16 %v1377
    %v2107 = vunpack.c.l.b16 %v1378
    %v2108 = vunpack.c.h.b16 %v1378
    %v2109 = vunpack.c.l.b16 %v1379
    %v2110 = vunpack.c.h.b16 %v1379
    %v2111 = vunpack.c.l.b16 %v1380
    %v2112 = vunpack.c.h.b16 %v1380
    %v2113 = vunpack.c.l.b16 %v1381
    %v2114 = vunpack.c.h.b16 %v1381
    %v2115 = vunpack.c.l.b16 %v1382
    %v2116 = vunpack.c.h.b16 %v1382
    %v2117 = vunpack.c.l.b16 %v1383
    %v2118 = vunpack.c.h.b16 %v1383
    %v2119 = vunpack.c.l.b16 %v1384
    %v2120 = vunpack.c.h.b16 %v1384
    %v2121 = vunpack.c.l.b16 %v1385
    %v2122 = vunpack.c.h.b16 %v1385
    %v2123 = vunpack.c.l.b16 %v1386
    %v2124 = vunpack.c.h.b16 %v1386
    %v2125 = vunpack.c.l.b16 %v1387
    %v2126 = vunpack.c.h.b16 %v1387
    %v2127 = vunpack.c.l.b16 %v1388
    %v2128 = vunpack.c.h.b16 %v1388
    %v2129 = vunpack.c.l.b16 %v1389
    %v2130 = vunpack.c.h.b16 %v1389
    %v2131 = vunpack.c.l.b16 %v1390
    %v2132 = vunpack.c.h.b16 %v1390
    %v2133 = vunpack.c.l.b16 %v1391
    %v2134 = vunpack.c.h.b16 %v1391
    %v2135 = vunpack.c.l.b16 %v1392
    %v2136 = vunpack.c.h.b16 %v1392
    %v2137 = vunpack.c.l.b16 %v1393
    %v2138 = vunpack.c.h.b16 %v1393
    %v2139 = vunpack.c.l.b16 %v1394
    %v2140 = vunpack.c.h.b16 %v1394
    %v2141 = vunpack.c.l.b16 %v1395
    %v2142 = vunpack.c.h.b16 %v1395
    %v2143 = vunpack.c.l.b16 %v1396
    %v2144 = vunpack.c.h.b16 %v1396
    %v2145 = vunpack.c.l.b16 %v1397
    %v2146 = vunpack.c.h.b16 %v1397
    %v2147 = vunpack.c.l.b16 %v1398
    %v2148 = vunpack.c.h.b16 %v1398
    %v2149 = vunpack.c.l.b16 %v1399
    %v2150 = vunpack.c.h.b16 %v1399
    %v2151 = vunpack.c.l.b16 %v1400
    %v2152 = vunpack.c.h.b16 %v1400
    %v2153 = vunpack.c.l.b16 %v1401
    %v2154 = vunpack.c.h.b16 %v1401
    %v2155 = vunpack.c.l.b16 %v1402
    %v2156 = vunpack.c.h.b16 %v1402
    %v2157 = vunpack.c.l.b16 %v1403
    %v2158 = vunpack.c.h.b16 %v1403
    %v2159 = vunpack.c.l.b16 %v1404
    %v2160 = vunpack.c.h.b16 %v1404
    %v2161 = vunpack.c.l.b16 %v1405
    %v2162 = vunpack.c.h.b16 %v1405
    %v2163 = vunpack.c.l.b16 %v1406
    %v2164 = vunpack.c.h.b16 %v1406
    %v2165 = vunpack.c.l.b16 %v1407
    %v2166 = vunpack.c.h.b16 %v1407
    %v2167 = vunpack.c.l.b16 %v1408
    %v2168 = vunpack.c.h.b16 %v1408
    %v2169 = vunpack.c.l.b16 %v1409
    %v2170 = vunpack.c.h.b16 %v1409
    %v2171 = vunpack.c.l.b16 %v1410
    %v2172 = vunpack.c.h.b16 %v1410
    %v2173 = vunpack.c.l.b16 %v1411
    %v2174 = vunpack.c.h.b16 %v1411
    %v2175 = vunpack.c.l.b16 %v1412
    %v2176 = vunpack.c.h.b16 %v1412
    %v2177 = vunpack.c.l.b16 %v1413
    %v2178 = vunpack.c.h.b16 %v1413
    %v2179 = vunpack.c.l.b16 %v1414
    %v2180 = vunpack.c.h.b16 %v1414
    %v2181 = vunpack.c.l.b16 %v1415
    %v2182 = vunpack.c.h.b16 %v1415
    %v2183 = vunpack.c.l.b16 %v1416
    %v2184 = vunpack.c.h.b16 %v1416
    %v2185 = vpack.c.b16 %v1681, %v1673
    %v2186 = vpack.c.b16 %v1682, %v1674
    %v2187 = vpack.c.b16 %v1683, %v1675
    %v2188 = vpack.c.b16 %v1684, %v1676
    %v2189 = vpack.c.b16 %v1685, %v1677
    %v2190 = vpack.c.b16 %v1686, %v1678
    %v2191 = vpack.c.b16 %v1687, %v1679
    %v2192 = vpack.c.b16 %v1688, %v1680
    %v2193 = vpack.c.b16 %v1697, %v1689
    %v2194 = vpack.c.b16 %v1698, %v1690
    %v2195 = vpack.c.b16 %v1699, %v1691
    %v2196 = vpack.c.b16 %v1700, %v1692
    %v2197 = vpack.c.b16 %v1701, %v1693
    %v2198 = vpack.c.b16 %v1702, %v1694
    %v2199 = vpack.c.b16 %v1703, %v1695
    %v2200 = vpack.c.b16 %v1704, %v1696
    %v2201 = vpack.c.b16 %v1713, %v1705
    %v2202 = vpack.c.b16 %v1714, %v1706
    %v2203 = vpack.c.b16 %v1715, %v1707
    %v2204 = vpack.c.b16 %v1716, %v1708
    %v2205 = vpack.c.b16 %v1717, %v1709
    %v2206 = vpack.c.b16 %v1718, %v1710
    %v2207 = vpack.c.b16 %v1719, %v1711
    %v2208 = vpack.c.b16 %v1720, %v1712
    %v2209 = vpack.c.b16 %v1729, %v1721
    %v2210 = vpack.c.b16 %v1730, %v1722
    %v2211 = vpack.c.b16 %v1731, %v1723
    %v2212 = vpack.c.b16 %v1732, %v1724
    %v2213 = vpack.c.b16 %v1733, %v1725
    %v2214 = vpack.c.b16 %v1734, %v1726
    %v2215 = vpack.c.b16 %v1735, %v1727
    %v2216 = vpack.c.b16 %v1736, %v1728
    %v2217 = vpack.c.b16 %v1745, %v1737
    %v2218 = vpack.c.b16 %v1746, %v1738
    %v2219 = vpack.c.b16 %v1747, %v1739
    %v2220 = vpack.c.b16 %v1748, %v1740
    %v2221 = vpack.c.b16 %v1749, %v1741
    %v2222 = vpack.c.b16 %v1750, %v1742
    %v2223 = vpack.c.b16 %v1751, %v1743
    %v2224 = vpack.c.b16 %v1752, %v1744
    %v2225 = vpack.c.b16 %v1761, %v1753
    %v2226 = vpack.c.b16 %v1762, %v1754
    %v2227 = vpack.c.b16 %v1763, %v1755
    %v2228 = vpack.c.b16 %v1764, %v1756
    %v2229 = vpack.c.b16 %v1765, %v1757
    %v2230 = vpack.c.b16 %v1766, %v1758
    %v2231 = vpack.c.b16 %v1767, %v1759
    %v2232 = vpack.c.b16 %v1768, %v1760
    %v2233 = vpack.c.b16 %v1777, %v1769
    %v2234 = vpack.c.b16 %v1778, %v1770
    %v2235 = vpack.c.b16 %v1779, %v1771
    %v2236 = vpack.c.b16 %v1780, %v1772
    %v2237 = vpack.c.b16 %v1781, %v1773
    %v2238 = vpack.c.b16 %v1782, %v1774
    %v2239 = vpack.c.b16 %v1783, %v1775
    %v2240 = vpack.c.b16 %v1784, %v1776
    %v2241 = vpack.c.b16 %v1793, %v1785
    %v2242 = vpack.c.b16 %v1794, %v1786
    %v2243 = vpack.c.b16 %v1795, %v1787
    %v2244 = vpack.c.b16 %v1796, %v1788
    %v2245 = vpack.c.b16 %v1797, %v1789
    %v2246 = vpack.c.b16 %v1798, %v1790
    %v2247 = vpack.c.b16 %v1799, %v1791
    %v2248 = vpack.c.b16 %v1800, %v1792
    %v2249 = vpack.c.b16 %v1809, %v1801
    %v2250 = vpack.c.b16 %v1810, %v1802
    %v2251 = vpack.c.b16 %v1811, %v1803
    %v2252 = vpack.c.b16 %v1812, %v1804
    %v2253 = vpack.c.b16 %v1813, %v1805
    %v2254 = vpack.c.b16 %v1814, %v1806
    %v2255 = vpack.c.b16 %v1815, %v1807
    %v2256 = vpack.c.b16 %v1816, %v1808
    %v2257 = vpack.c.b16 %v1825, %v1817
    %v2258 = vpack.c.b16 %v1826, %v1818
    %v2259 = vpack.c.b16 %v1827, %v1819
    %v2260 = vpack.c.b16 %v1828, %v1820
    %v2261 = vpack.c.b16 %v1829, %v1821
    %v2262 = vpack.c.b16 %v1830, %v1822
    %v2263 = vpack.c.b16 %v1831, %v1823
    %v2264 = vpack.c.b16 %v1832, %v1824
    %v2265 = vpack.c.b16 %v1841, %v1833
    %v2266 = vpack.c.b16 %v1842, %v1834
    %v2267 = vpack.c.b16 %v1843, %v1835
    %v2268 = vpack.c.b16 %v1844, %v1836
    %v2269 = vpack.c.b16 %v1845, %v1837
    %v2270 = vpack.c.b16 %v1846, %v1838
    %v2271 = vpack.c.b16 %v1847, %v1839
    %v2272 = vpack.c.b16 %v1848, %v1840
    %v2273 = vpack.c.b16 %v1857, %v1849
    %v2274 = vpack.c.b16 %v1858, %v1850
    %v2275 = vpack.c.b16 %v1859, %v1851
    %v2276 = vpack.c.b16 %v1860, %v1852
    %v2277 = vpack.c.b16 %v1861, %v1853
    %v2278 = vpack.c.b16 %v1862, %v1854
    %v2279 = vpack.c.b16 %v1863, %v1855
    %v2280 = vpack.c.b16 %v1864, %v1856
    %v2281 = vpack.c.b16 %v1873, %v1865
    %v2282 = vpack.c.b16 %v1874, %v1866
    %v2283 = vpack.c.b16 %v1875, %v1867
    %v2284 = vpack.c.b16 %v1876, %v1868
    %v2285 = vpack.c.b16 %v1877, %v1869
    %v2286 = vpack.c.b16 %v1878, %v1870
    %v2287 = vpack.c.b16 %v1879, %v1871
    %v2288 = vpack.c.b16 %v1880, %v1872
    %v2289 = vpack.c.b16 %v1889, %v1881
    %v2290 = vpack.c.b16 %v1890, %v1882
    %v2291 = vpack.c.b16 %v1891, %v1883
    %v2292 = vpack.c.b16 %v1892, %v1884
    %v2293 = vpack.c.b16 %v1893, %v1885
    %v2294 = vpack.c.b16 %v1894, %v1886
    %v2295 = vpack.c.b16 %v1895, %v1887
    %v2296 = vpack.c.b16 %v1896, %v1888
    %v2297 = vpack.c.b16 %v1905, %v1897
    %v2298 = vpack.c.b16 %v1906, %v1898
    %v2299 = vpack.c.b16 %v1907, %v1899
    %v2300 = vpack.c.b16 %v1908, %v1900
    %v2301 = vpack.c.b16 %v1909, %v1901
    %v2302 = vpack.c.b16 %v1910, %v1902
    %v2303 = vpack.c.b16 %v1911, %v1903
    %v2304 = vpack.c.b16 %v1912, %v1904
    %v2305 = vpack.c.b16 %v1921, %v1913
    %v2306 = vpack.c.b16 %v1922, %v1914
    %v2307 = vpack.c.b16 %v1923, %v1915
    %v2308 = vpack.c.b16 %v1924, %v1916
    %v2309 = vpack.c.b16 %v1925, %v1917
    %v2310 = vpack.c.b16 %v1926, %v1918
    %v2311 = vpack.c.b16 %v1927, %v1919
    %v2312 = vpack.c.b16 %v1928, %v1920
    %v2313 = vpack.c.b16 %v1937, %v1929
    %v2314 = vpack.c.b16 %v1938, %v1930
    %v2315 = vpack.c.b16 %v1939, %v1931
    %v2316 = vpack.c.b16 %v1940, %v1932
    %v2317 = vpack.c.b16 %v1941, %v1933
    %v2318 = vpack.c.b16 %v1942, %v1934
    %v2319 = vpack.c.b16 %v1943, %v1935
    %v2320 = vpack.c.b16 %v1944, %v1936
    %v2321 = vpack.c.b16 %v1953, %v1945
    %v2322 = vpack.c.b16 %v1954, %v1946
    %v2323 = vpack.c.b16 %v1955, %v1947
    %v2324 = vpack.c.b16 %v1956, %v1948
    %v2325 = vpack.c.b16 %v1957, %v1949
    %v2326 = vpack.c.b16 %v1958, %v1950
    %v2327 = vpack.c.b16 %v1959, %v1951
    %v2328 = vpack.c.b16 %v1960, %v1952
    %v2329 = vpack.c.b16 %v1969, %v1961
    %v2330 = vpack.c.b16 %v1970, %v1962
    %v2331 = vpack.c.b16 %v1971, %v1963
    %v2332 = vpack.c.b16 %v1972, %v1964
    %v2333 = vpack.c.b16 %v1973, %v1965
    %v2334 = vpack.c.b16 %v1974, %v1966
    %v2335 = vpack.c.b16 %v1975, %v1967
    %v2336 = vpack.c.b16 %v1976, %v1968
    %v2337 = vpack.c.b16 %v1985, %v1977
    %v2338 = vpack.c.b16 %v1986, %v1978
    %v2339 = vpack.c.b16 %v1987, %v1979
    %v2340 = vpack.c.b16 %v1988, %v1980
    %v2341 = vpack.c.b16 %v1989, %v1981
    %v2342 = vpack.c.b16 %v1990, %v1982
    %v2343 = vpack.c.b16 %v1991, %v1983
    %v2344 = vpack.c.b16 %v1992, %v1984
    %v2345 = vpack.c.b16 %v2001, %v1993
    %v2346 = vpack.c.b16 %v2002, %v1994
    %v2347 = vpack.c.b16 %v2003, %v1995
    %v2348 = vpack.c.b16 %v2004, %v1996
    %v2349 = vpack.c.b16 %v2005, %v1997
    %v2350 = vpack.c.b16 %v2006, %v1998
    %v2351 = vpack.c.b16 %v2007, %v1999
    %v2352 = vpack.c.b16 %v2008, %v2000
    %v2353 = vpack.c.b16 %v2017, %v2009
    %v2354 = vpack.c.b16 %v2018, %v2010
    %v2355 = vpack.c.b16 %v2019, %v2011
    %v2356 = vpack.c.b16 %v2020, %v2012
    %v2357 = vpack.c.b16 %v2021, %v2013
    %v2358 = vpack.c.b16 %v2022, %v2014
    %v2359 = vpack.c.b16 %v2023, %v2015
    %v2360 = vpack.c.b16 %v2024, %v2016
    %v2361 = vpack.c.b16 %v2033, %v2025
    %v2362 = vpack.c.b16 %v2034, %v2026
    %v2363 = vpack.c.b16 %v2035, %v2027
    %v2364 = vpack.c.b16 %v2036, %v2028
    %v2365 = vpack.c.b16 %v2037, %v2029
    %v2366 = vpack.c.b16 %v2038, %v2030
    %v2367 = vpack.c.b16 %v2039, %v2031
    %v2368 = vpack.c.b16 %v2040, %v2032
    %v2369 = vpack.c.b16 %v2049, %v2041
    %v2370 = vpack.c.b16 %v2050, %v2042
    %v2371 = vpack.c.b16 %v2051, %v2043
    %v2372 = vpack.c.b16 %v2052, %v2044
    %v2373 = vpack.c.b16 %v2053, %v2045
    %v2374 = vpack.c.b16 %v2054, %v2046
    %v2375 = vpack.c.b16 %v2055, %v2047
    %v2376 = vpack.c.b16 %v2056, %v2048
    %v2377 = vpack.c.b16 %v2065, %v2057
    %v2378 = vpack.c.b16 %v2066, %v2058
    %v2379 = vpack.c.b16 %v2067, %v2059
    %v2380 = vpack.c.b16 %v2068, %v2060
    %v2381 = vpack.c.b16 %v2069, %v2061
    %v2382 = vpack.c.b16 %v2070, %v2062
    %v2383 = vpack.c.b16 %v2071, %v2063
    %v2384 = vpack.c.b16 %v2072, %v2064
    %v2385 = vpack.c.b16 %v2081, %v2073
    %v2386 = vpack.c.b16 %v2082, %v2074
    %v2387 = vpack.c.b16 %v2083, %v2075
    %v2388 = vpack.c.b16 %v2084, %v2076
    %v2389 = vpack.c.b16 %v2085, %v2077
    %v2390 = vpack.c.b16 %v2086, %v2078
    %v2391 = vpack.c.b16 %v2087, %v2079
    %v2392 = vpack.c.b16 %v2088, %v2080
    %v2393 = vpack.c.b16 %v2097, %v2089
    %v2394 = vpack.c.b16 %v2098, %v2090
    %v2395 = vpack.c.b16 %v2099, %v2091
    %v2396 = vpack.c.b16 %v2100, %v2092
    %v2397 = vpack.c.b16 %v2101, %v2093
    %v2398 = vpack.c.b16 %v2102, %v2094
    %v2399 = vpack.c.b16 %v2103, %v2095
    %v2400 = vpack.c.b16 %v2104, %v2096
    %v2401 = vpack.c.b16 %v2113, %v2105
    %v2402 = vpack.c.b16 %v2114, %v2106
    %v2403 = vpack.c.b16 %v2115, %v2107
    %v2404 = vpack.c.b16 %v2116, %v2108
    %v2405 = vpack.c.b16 %v2117, %v2109
    %v2406 = vpack.c.b16 %v2118, %v2110
    %v2407 = vpack.c.b16 %v2119, %v2111
    %v2408 = vpack.c.b16 %v2120, %v2112
    %v2409 = vpack.c.b16 %v2129, %v2121
    %v2410 = vpack.c.b16 %v2130, %v2122
    %v2411 = vpack.c.b16 %v2131, %v2123
    %v2412 = vpack.c.b16 %v2132, %v2124
    %v2413 = vpack.c.b16 %v2133, %v2125
    %v2414 = vpack.c.b16 %v2134, %v2126
    %v2415 = vpack.c.b16 %v2135, %v2127
    %v2416 = vpack.c.b16 %v2136, %v2128
    %v2417 = vpack.c.b16 %v2145, %v2137
    %v2418 = vpack.c.b16 %v2146, %v2138
    %v2419 = vpack.c.b16 %v2147, %v2139
    %v2420 = vpack.c.b16 %v2148, %v2140
    %v2421 = vpack.c.b16 %v2149, %v2141
    %v2422 = vpack.c.b16 %v2150, %v2142
    %v2423 = vpack.c.b16 %v2151, %v2143
    %v2424 = vpack.c.b16 %v2152, %v2144
    %v2425 = vpack.c.b16 %v2161, %v2153
    %v2426 = vpack.c.b16 %v2162, %v2154
    %v2427 = vpack.c.b16 %v2163, %v2155
    %v2428 = vpack.c.b16 %v2164, %v2156
    %v2429 = vpack.c.b16 %v2165, %v2157
    %v2430 = vpack.c.b16 %v2166, %v2158
    %v2431 = vpack.c.b16 %v2167, %v2159
    %v2432 = vpack.c.b16 %v2168, %v2160
    %v2433 = vpack.c.b16 %v2177, %v2169
    %v2434 = vpack.c.b16 %v2178, %v2170
    %v2435 = vpack.c.b16 %v2179, %v2171
    %v2436 = vpack.c.b16 %v2180, %v2172
    %v2437 = vpack.c.b16 %v2181, %v2173
    %v2438 = vpack.c.b16 %v2182, %v2174
    %v2439 = vpack.c.b16 %v2183, %v2175
    %v2440 = vpack.c.b16 %v2184, %v2176
    %2697 = vmatprep.subr.bf16.mxu0 %v2242
    %2698 = vmatpush1.bf16.msra.mxu0 %v2241
    %2699 = vmatprep.subr.bf16.mxu0 %v2234
    %2700 = vmatpush1.bf16.msra.mxu0 %v2233
    %2701 = vmatprep.subr.bf16.mxu0 %v2226
    %2702 = vmatpush1.bf16.msra.mxu0 %v2225
    %2703 = vmatprep.subr.bf16.mxu0 %v2218
    %2704 = vmatpush1.bf16.msra.mxu0 %v2217
    %2705 = vmatprep.subr.bf16.mxu0 %v2210
    %2706 = vmatpush1.bf16.msra.mxu0 %v2209
    %2707 = vmatprep.subr.bf16.mxu0 %v2202
    %2708 = vmatpush1.bf16.msra.mxu0 %v2201
    %2709 = vmatprep.subr.bf16.mxu0 %v2194
    %2710 = vmatpush1.bf16.msra.mxu0 %v2193
    %2711 = vmatprep.subr.bf16.mxu0 %v2186
    %2712 = vmatpush1.bf16.msra.mxu0 %v2185
    %2713 = vmatprep.subr.bf16.mxu0 %v2306
    %2714 = vmatpush2.bf16.msra.mxu0 %v2305
    %2715 = vmatprep.subr.bf16.mxu0 %v2298
    %2716 = vmatpush2.bf16.msra.mxu0 %v2297
    %2717 = vmatprep.subr.bf16.mxu0 %v2290
    %2718 = vmatpush2.bf16.msra.mxu0 %v2289
    %2719 = vmatprep.subr.bf16.mxu0 %v2282
    %2720 = vmatpush2.bf16.msra.mxu0 %v2281
    %2721 = vmatprep.subr.bf16.mxu0 %v2274
    %2722 = vmatpush2.bf16.msra.mxu0 %v2273
    %2723 = vmatprep.subr.bf16.mxu0 %v2266
    %2724 = vmatpush2.bf16.msra.mxu0 %v2265
    %2725 = vmatprep.subr.bf16.mxu0 %v2258
    %2726 = vmatpush2.bf16.msra.mxu0 %v2257
    %2727 = vmatprep.subr.bf16.mxu0 %v2250
    %2728 = vmatpush2.bf16.msra.mxu0 %v2249
    %2729 = vmatprep.mubr.bf16.mxu0 %v1158
    %2730 = vmatmul.mubr.bf16.gmra.mxu0 %v1157
    %v2731 = vpop.f32.mrf.mxu0
    %v2732 = vadd.f32 0.0, %v2731
    %v2733 = vpop.f32.mrf.mxu0
    %v2734 = vadd.f32 0.0, %v2733
    %v2735 = vpop.f32.mrf.mxu0
    %v2736 = vpop.f32.mrf.mxu0
    %2737 = vdwg.mxu0
    %2738 = vmatprep.subr.bf16.mxu0 %v2370
    %2739 = vmatpush1.bf16.msra.mxu0 %v2369
    %2740 = vmatprep.subr.bf16.mxu0 %v2362
    %2741 = vmatpush1.bf16.msra.mxu0 %v2361
    %2742 = vmatprep.subr.bf16.mxu0 %v2354
    %2743 = vmatpush1.bf16.msra.mxu0 %v2353
    %2744 = vmatprep.subr.bf16.mxu0 %v2346
    %2745 = vmatpush1.bf16.msra.mxu0 %v2345
    %2746 = vmatprep.subr.bf16.mxu0 %v2338
    %2747 = vmatpush1.bf16.msra.mxu0 %v2337
    %2748 = vmatprep.subr.bf16.mxu0 %v2330
    %2749 = vmatpush1.bf16.msra.mxu0 %v2329
    %2750 = vmatprep.subr.bf16.mxu0 %v2322
    %2751 = vmatpush1.bf16.msra.mxu0 %v2321
    %2752 = vmatprep.subr.bf16.mxu0 %v2314
    %2753 = vmatpush1.bf16.msra.mxu0 %v2313
    %2754 = vmatprep.subr.bf16.mxu0 %v2434
    %2755 = vmatpush2.bf16.msra.mxu0 %v2433
    %2756 = vmatprep.subr.bf16.mxu0 %v2426
    %2757 = vmatpush2.bf16.msra.mxu0 %v2425
    %2758 = vmatprep.subr.bf16.mxu0 %v2418
    %2759 = vmatpush2.bf16.msra.mxu0 %v2417
    %2760 = vmatprep.subr.bf16.mxu0 %v2410
    %2761 = vmatpush2.bf16.msra.mxu0 %v2409
    %2762 = vmatprep.subr.bf16.mxu0 %v2402
    %2763 = vmatpush2.bf16.msra.mxu0 %v2401
    %2764 = vmatprep.subr.bf16.mxu0 %v2394
    %2765 = vmatpush2.bf16.msra.mxu0 %v2393
    %2766 = vmatprep.subr.bf16.mxu0 %v2386
    %2767 = vmatpush2.bf16.msra.mxu0 %v2385
    %2768 = vmatprep.subr.bf16.mxu0 %v2378
    %2769 = vmatpush2.bf16.msra.mxu0 %v2377
    %2770 = vmatprep.mubr.bf16.mxu0 %v1160
    %2771 = vmatmul.mubr.bf16.gmra.mxu0 %v1159
    %v2772 = vpop.f32.mrf.mxu0
    %v2773 = vadd.f32 %v2732, %v2772
    %v2774 = vpop.f32.mrf.mxu0
    %v2775 = vadd.f32 %v2734, %v2774
    %v2776 = vpop.f32.mrf.mxu0
    %v2777 = vpop.f32.mrf.mxu0
    %2778 = vdwg.mxu0
    %2779 = vmatprep.subr.bf16.mxu0 %v2244
    %2780 = vmatpush1.bf16.msra.mxu0 %v2243
    %2781 = vmatprep.subr.bf16.mxu0 %v2236
    %2782 = vmatpush1.bf16.msra.mxu0 %v2235
    %2783 = vmatprep.subr.bf16.mxu0 %v2228
    %2784 = vmatpush1.bf16.msra.mxu0 %v2227
    %2785 = vmatprep.subr.bf16.mxu0 %v2220
    %2786 = vmatpush1.bf16.msra.mxu0 %v2219
    %2787 = vmatprep.subr.bf16.mxu0 %v2212
    %2788 = vmatpush1.bf16.msra.mxu0 %v2211
    %2789 = vmatprep.subr.bf16.mxu0 %v2204
    %2790 = vmatpush1.bf16.msra.mxu0 %v2203
    %2791 = vmatprep.subr.bf16.mxu0 %v2196
    %2792 = vmatpush1.bf16.msra.mxu0 %v2195
    %2793 = vmatprep.subr.bf16.mxu0 %v2188
    %2794 = vmatpush1.bf16.msra.mxu0 %v2187
    %2795 = vmatprep.subr.bf16.mxu0 %v2308
    %2796 = vmatpush2.bf16.msra.mxu0 %v2307
    %2797 = vmatprep.subr.bf16.mxu0 %v2300
    %2798 = vmatpush2.bf16.msra.mxu0 %v2299
    %2799 = vmatprep.subr.bf16.mxu0 %v2292
    %2800 = vmatpush2.bf16.msra.mxu0 %v2291
    %2801 = vmatprep.subr.bf16.mxu0 %v2284
    %2802 = vmatpush2.bf16.msra.mxu0 %v2283
    %2803 = vmatprep.subr.bf16.mxu0 %v2276
    %2804 = vmatpush2.bf16.msra.mxu0 %v2275
    %2805 = vmatprep.subr.bf16.mxu0 %v2268
    %2806 = vmatpush2.bf16.msra.mxu0 %v2267
    %2807 = vmatprep.subr.bf16.mxu0 %v2260
    %2808 = vmatpush2.bf16.msra.mxu0 %v2259
    %2809 = vmatprep.subr.bf16.mxu0 %v2252
    %2810 = vmatpush2.bf16.msra.mxu0 %v2251
    %2811 = vmatprep.mubr.bf16.mxu0 %v1158
    %2812 = vmatmul.mubr.bf16.gmra.mxu0 %v1157
    %v2813 = vpop.f32.mrf.mxu0
    %v2814 = vadd.f32 0.0, %v2813
    %v2815 = vpop.f32.mrf.mxu0
    %v2816 = vadd.f32 0.0, %v2815
    %v2817 = vpop.f32.mrf.mxu0
    %v2818 = vpop.f32.mrf.mxu0
    %2819 = vdwg.mxu0
    %2820 = vmatprep.subr.bf16.mxu0 %v2372
    %2821 = vmatpush1.bf16.msra.mxu0 %v2371
    %2822 = vmatprep.subr.bf16.mxu0 %v2364
    %2823 = vmatpush1.bf16.msra.mxu0 %v2363
    %2824 = vmatprep.subr.bf16.mxu0 %v2356
    %2825 = vmatpush1.bf16.msra.mxu0 %v2355
    %2826 = vmatprep.subr.bf16.mxu0 %v2348
    %2827 = vmatpush1.bf16.msra.mxu0 %v2347
    %2828 = vmatprep.subr.bf16.mxu0 %v2340
    %2829 = vmatpush1.bf16.msra.mxu0 %v2339
    %2830 = vmatprep.subr.bf16.mxu0 %v2332
    %2831 = vmatpush1.bf16.msra.mxu0 %v2331
    %2832 = vmatprep.subr.bf16.mxu0 %v2324
    %2833 = vmatpush1.bf16.msra.mxu0 %v2323
    %2834 = vmatprep.subr.bf16.mxu0 %v2316
    %2835 = vmatpush1.bf16.msra.mxu0 %v2315
    %2836 = vmatprep.subr.bf16.mxu0 %v2436
    %2837 = vmatpush2.bf16.msra.mxu0 %v2435
    %2838 = vmatprep.subr.bf16.mxu0 %v2428
    %2839 = vmatpush2.bf16.msra.mxu0 %v2427
    %2840 = vmatprep.subr.bf16.mxu0 %v2420
    %2841 = vmatpush2.bf16.msra.mxu0 %v2419
    %2842 = vmatprep.subr.bf16.mxu0 %v2412
    %2843 = vmatpush2.bf16.msra.mxu0 %v2411
    %2844 = vmatprep.subr.bf16.mxu0 %v2404
    %2845 = vmatpush2.bf16.msra.mxu0 %v2403
    %2846 = vmatprep.subr.bf16.mxu0 %v2396
    %2847 = vmatpush2.bf16.msra.mxu0 %v2395
    %2848 = vmatprep.subr.bf16.mxu0 %v2388
    %2849 = vmatpush2.bf16.msra.mxu0 %v2387
    %2850 = vmatprep.subr.bf16.mxu0 %v2380
    %2851 = vmatpush2.bf16.msra.mxu0 %v2379
    %2852 = vmatprep.mubr.bf16.mxu0 %v1160
    %2853 = vmatmul.mubr.bf16.gmra.mxu0 %v1159
    %v2854 = vpop.f32.mrf.mxu0
    %v2855 = vadd.f32 %v2814, %v2854
    %v2856 = vpop.f32.mrf.mxu0
    %v2857 = vadd.f32 %v2816, %v2856
    %v2858 = vpop.f32.mrf.mxu0
    %v2859 = vpop.f32.mrf.mxu0
    %2860 = vdwg.mxu0
    %2861 = vmatprep.subr.bf16.mxu0 %v2246
    %2862 = vmatpush1.bf16.msra.mxu0 %v2245
    %2863 = vmatprep.subr.bf16.mxu0 %v2238
    %2864 = vmatpush1.bf16.msra.mxu0 %v2237
    %2865 = vmatprep.subr.bf16.mxu0 %v2230
    %2866 = vmatpush1.bf16.msra.mxu0 %v2229
    %2867 = vmatprep.subr.bf16.mxu0 %v2222
    %2868 = vmatpush1.bf16.msra.mxu0 %v2221
    %2869 = vmatprep.subr.bf16.mxu0 %v2214
    %2870 = vmatpush1.bf16.msra.mxu0 %v2213
    %2871 = vmatprep.subr.bf16.mxu0 %v2206
    %2872 = vmatpush1.bf16.msra.mxu0 %v2205
    %2873 = vmatprep.subr.bf16.mxu0 %v2198
    %2874 = vmatpush1.bf16.msra.mxu0 %v2197
    %2875 = vmatprep.subr.bf16.mxu0 %v2190
    %2876 = vmatpush1.bf16.msra.mxu0 %v2189
    %2877 = vmatprep.subr.bf16.mxu0 %v2310
    %2878 = vmatpush2.bf16.msra.mxu0 %v2309
    %2879 = vmatprep.subr.bf16.mxu0 %v2302
    %2880 = vmatpush2.bf16.msra.mxu0 %v2301
    %2881 = vmatprep.subr.bf16.mxu0 %v2294
    %2882 = vmatpush2.bf16.msra.mxu0 %v2293
    %2883 = vmatprep.subr.bf16.mxu0 %v2286
    %2884 = vmatpush2.bf16.msra.mxu0 %v2285
    %2885 = vmatprep.subr.bf16.mxu0 %v2278
    %2886 = vmatpush2.bf16.msra.mxu0 %v2277
    %2887 = vmatprep.subr.bf16.mxu0 %v2270
    %2888 = vmatpush2.bf16.msra.mxu0 %v2269
    %2889 = vmatprep.subr.bf16.mxu0 %v2262
    %2890 = vmatpush2.bf16.msra.mxu0 %v2261
    %2891 = vmatprep.subr.bf16.mxu0 %v2254
    %2892 = vmatpush2.bf16.msra.mxu0 %v2253
    %2893 = vmatprep.mubr.bf16.mxu0 %v1158
    %2894 = vmatmul.mubr.bf16.gmra.mxu0 %v1157
    %v2895 = vpop.f32.mrf.mxu0
    %v2896 = vadd.f32 0.0, %v2895
    %v2897 = vpop.f32.mrf.mxu0
    %v2898 = vadd.f32 0.0, %v2897
    %v2899 = vpop.f32.mrf.mxu0
    %v2900 = vpop.f32.mrf.mxu0
    %2901 = vdwg.mxu0
    %2902 = vmatprep.subr.bf16.mxu0 %v2374
    %2903 = vmatpush1.bf16.msra.mxu0 %v2373
    %2904 = vmatprep.subr.bf16.mxu0 %v2366
    %2905 = vmatpush1.bf16.msra.mxu0 %v2365
    %2906 = vmatprep.subr.bf16.mxu0 %v2358
    %2907 = vmatpush1.bf16.msra.mxu0 %v2357
    %2908 = vmatprep.subr.bf16.mxu0 %v2350
    %2909 = vmatpush1.bf16.msra.mxu0 %v2349
    %2910 = vmatprep.subr.bf16.mxu0 %v2342
    %2911 = vmatpush1.bf16.msra.mxu0 %v2341
    %2912 = vmatprep.subr.bf16.mxu0 %v2334
    %2913 = vmatpush1.bf16.msra.mxu0 %v2333
    %2914 = vmatprep.subr.bf16.mxu0 %v2326
    %2915 = vmatpush1.bf16.msra.mxu0 %v2325
    %2916 = vmatprep.subr.bf16.mxu0 %v2318
    %2917 = vmatpush1.bf16.msra.mxu0 %v2317
    %2918 = vmatprep.subr.bf16.mxu0 %v2438
    %2919 = vmatpush2.bf16.msra.mxu0 %v2437
    %2920 = vmatprep.subr.bf16.mxu0 %v2430
    %2921 = vmatpush2.bf16.msra.mxu0 %v2429
    %2922 = vmatprep.subr.bf16.mxu0 %v2422
    %2923 = vmatpush2.bf16.msra.mxu0 %v2421
    %2924 = vmatprep.subr.bf16.mxu0 %v2414
    %2925 = vmatpush2.bf16.msra.mxu0 %v2413
    %2926 = vmatprep.subr.bf16.mxu0 %v2406
    %2927 = vmatpush2.bf16.msra.mxu0 %v2405
    %2928 = vmatprep.subr.bf16.mxu0 %v2398
    %2929 = vmatpush2.bf16.msra.mxu0 %v2397
    %2930 = vmatprep.subr.bf16.mxu0 %v2390
    %2931 = vmatpush2.bf16.msra.mxu0 %v2389
    %2932 = vmatprep.subr.bf16.mxu0 %v2382
    %2933 = vmatpush2.bf16.msra.mxu0 %v2381
    %2934 = vmatprep.mubr.bf16.mxu0 %v1160
    %2935 = vmatmul.mubr.bf16.gmra.mxu0 %v1159
    %v2936 = vpop.f32.mrf.mxu0
    %v2937 = vadd.f32 %v2896, %v2936
    %v2938 = vpop.f32.mrf.mxu0
    %v2939 = vadd.f32 %v2898, %v2938
    %v2940 = vpop.f32.mrf.mxu0
    %v2941 = vpop.f32.mrf.mxu0
    %2942 = vdwg.mxu0
    %2943 = vmatprep.subr.bf16.mxu0 %v2248
    %2944 = vmatpush1.bf16.msra.mxu0 %v2247
    %2945 = vmatprep.subr.bf16.mxu0 %v2240
    %2946 = vmatpush1.bf16.msra.mxu0 %v2239
    %2947 = vmatprep.subr.bf16.mxu0 %v2232
    %2948 = vmatpush1.bf16.msra.mxu0 %v2231
    %2949 = vmatprep.subr.bf16.mxu0 %v2224
    %2950 = vmatpush1.bf16.msra.mxu0 %v2223
    %2951 = vmatprep.subr.bf16.mxu0 %v2216
    %2952 = vmatpush1.bf16.msra.mxu0 %v2215
    %2953 = vmatprep.subr.bf16.mxu0 %v2208
    %2954 = vmatpush1.bf16.msra.mxu0 %v2207
    %2955 = vmatprep.subr.bf16.mxu0 %v2200
    %2956 = vmatpush1.bf16.msra.mxu0 %v2199
    %2957 = vmatprep.subr.bf16.mxu0 %v2192
    %2958 = vmatpush1.bf16.msra.mxu0 %v2191
    %2959 = vmatprep.subr.bf16.mxu0 %v2312
    %2960 = vmatpush2.bf16.msra.mxu0 %v2311
    %2961 = vmatprep.subr.bf16.mxu0 %v2304
    %2962 = vmatpush2.bf16.msra.mxu0 %v2303
    %2963 = vmatprep.subr.bf16.mxu0 %v2296
    %2964 = vmatpush2.bf16.msra.mxu0 %v2295
    %2965 = vmatprep.subr.bf16.mxu0 %v2288
    %2966 = vmatpush2.bf16.msra.mxu0 %v2287
    %2967 = vmatprep.subr.bf16.mxu0 %v2280
    %2968 = vmatpush2.bf16.msra.mxu0 %v2279
    %2969 = vmatprep.subr.bf16.mxu0 %v2272
    %2970 = vmatpush2.bf16.msra.mxu0 %v2271
    %2971 = vmatprep.subr.bf16.mxu0 %v2264
    %2972 = vmatpush2.bf16.msra.mxu0 %v2263
    %2973 = vmatprep.subr.bf16.mxu0 %v2256
    %2974 = vmatpush2.bf16.msra.mxu0 %v2255
    %2975 = vmatprep.mubr.bf16.mxu0 %v1158
    %2976 = vmatmul.mubr.bf16.gmra.mxu0 %v1157
    %v2977 = vpop.f32.mrf.mxu0
    %v2978 = vadd.f32 0.0, %v2977
    %v2979 = vpop.f32.mrf.mxu0
    %v2980 = vadd.f32 0.0, %v2979
    %v2981 = vpop.f32.mrf.mxu0
    %v2982 = vpop.f32.mrf.mxu0
    %2983 = vdwg.mxu0
    %2984 = vmatprep.subr.bf16.mxu0 %v2376
    %2985 = vmatpush1.bf16.msra.mxu0 %v2375
    %2986 = vmatprep.subr.bf16.mxu0 %v2368
    %2987 = vmatpush1.bf16.msra.mxu0 %v2367
    %2988 = vmatprep.subr.bf16.mxu0 %v2360
    %2989 = vmatpush1.bf16.msra.mxu0 %v2359
    %2990 = vmatprep.subr.bf16.mxu0 %v2352
    %2991 = vmatpush1.bf16.msra.mxu0 %v2351
    %2992 = vmatprep.subr.bf16.mxu0 %v2344
    %2993 = vmatpush1.bf16.msra.mxu0 %v2343
    %2994 = vmatprep.subr.bf16.mxu0 %v2336
    %2995 = vmatpush1.bf16.msra.mxu0 %v2335
    %2996 = vmatprep.subr.bf16.mxu0 %v2328
    %2997 = vmatpush1.bf16.msra.mxu0 %v2327
    %2998 = vmatprep.subr.bf16.mxu0 %v2320
    %2999 = vmatpush1.bf16.msra.mxu0 %v2319
    %3000 = vmatprep.subr.bf16.mxu0 %v2440
    %3001 = vmatpush2.bf16.msra.mxu0 %v2439
    %3002 = vmatprep.subr.bf16.mxu0 %v2432
    %3003 = vmatpush2.bf16.msra.mxu0 %v2431
    %3004 = vmatprep.subr.bf16.mxu0 %v2424
    %3005 = vmatpush2.bf16.msra.mxu0 %v2423
    %3006 = vmatprep.subr.bf16.mxu0 %v2416
    %3007 = vmatpush2.bf16.msra.mxu0 %v2415
    %3008 = vmatprep.subr.bf16.mxu0 %v2408
    %3009 = vmatpush2.bf16.msra.mxu0 %v2407
    %3010 = vmatprep.subr.bf16.mxu0 %v2400
    %3011 = vmatpush2.bf16.msra.mxu0 %v2399
    %3012 = vmatprep.subr.bf16.mxu0 %v2392
    %3013 = vmatpush2.bf16.msra.mxu0 %v2391
    %3014 = vmatprep.subr.bf16.mxu0 %v2384
    %3015 = vmatpush2.bf16.msra.mxu0 %v2383
    %3016 = vmatprep.mubr.bf16.mxu0 %v1160
    %3017 = vmatmul.mubr.bf16.gmra.mxu0 %v1159
    %v3018 = vpop.f32.mrf.mxu0
    %v3019 = vadd.f32 %v2978, %v3018
    %v3020 = vpop.f32.mrf.mxu0
    %v3021 = vadd.f32 %v2980, %v3020
    %v3022 = vpop.f32.mrf.mxu0
    %v3023 = vpop.f32.mrf.mxu0
    %3024 = vdwg.mxu0
    %v3025 = vld [vmem:[%s10] sm:$0xff]
    %v3026 = vld [vmem:[%s11] sm:$0xff]
    %v3027 = vrot.slane %v2773, 4
    %v3028 = vadd.f32 %v2773, %v3027
    %v3029 = vrot.slane %v3028, 2
    %v3030 = vadd.f32 %v3028, %v3029
    %v3031 = vrot.slane %v3030, 1
    %v3032 = vadd.f32 %v3030, %v3031
    %v3033 = vrot.slane %v2775, 4
    %v3034 = vadd.f32 %v2775, %v3033
    %v3035 = vrot.slane %v3034, 2
    %v3036 = vadd.f32 %v3034, %v3035
    %v3037 = vrot.slane %v3036, 1
    %v3038 = vadd.f32 %v3036, %v3037
    %v3039 = vrot.slane %v2855, 4
    %v3040 = vadd.f32 %v2855, %v3039
    %v3041 = vrot.slane %v3040, 2
    %v3042 = vadd.f32 %v3040, %v3041
    %v3043 = vrot.slane %v3042, 1
    %v3044 = vadd.f32 %v3042, %v3043
    %v3045 = vrot.slane %v2857, 4
    %v3046 = vadd.f32 %v2857, %v3045
    %v3047 = vrot.slane %v3046, 2
    %v3048 = vadd.f32 %v3046, %v3047
    %v3049 = vrot.slane %v3048, 1
    %v3050 = vadd.f32 %v3048, %v3049
    %v3051 = vrot.slane %v2937, 4
    %v3052 = vadd.f32 %v2937, %v3051
    %v3053 = vrot.slane %v3052, 2
    %v3054 = vadd.f32 %v3052, %v3053
    %v3055 = vrot.slane %v3054, 1
    %v3056 = vadd.f32 %v3054, %v3055
    %v3057 = vrot.slane %v2939, 4
    %v3058 = vadd.f32 %v2939, %v3057
    %v3059 = vrot.slane %v3058, 2
    %v3060 = vadd.f32 %v3058, %v3059
    %v3061 = vrot.slane %v3060, 1
    %v3062 = vadd.f32 %v3060, %v3061
    %v3063 = vrot.slane %v3019, 4
    %v3064 = vadd.f32 %v3019, %v3063
    %v3065 = vrot.slane %v3064, 2
    %v3066 = vadd.f32 %v3064, %v3065
    %v3067 = vrot.slane %v3066, 1
    %v3068 = vadd.f32 %v3066, %v3067
    %v3069 = vrot.slane %v3021, 4
    %v3070 = vadd.f32 %v3021, %v3069
    %v3071 = vrot.slane %v3070, 2
    %v3072 = vadd.f32 %v3070, %v3071
    %v3073 = vrot.slane %v3072, 1
    %v3074 = vadd.f32 %v3072, %v3073
    %v3075 = vmul.f32 %v3032, %v454
    %v3076 = vmul.f32 %v3038, %v454
    %v3077 = vmul.f32 %v3044, %v454
    %v3078 = vmul.f32 %v3050, %v454
    %v3079 = vmul.f32 %v3056, %v454
    %v3080 = vmul.f32 %v3062, %v454
    %v3081 = vmul.f32 %v3068, %v454
    %v3082 = vmul.f32 %v3074, %v454
    %v3083 = vmul.f32 %v2773, %v2773
    %v3084 = vmul.f32 %v2775, %v2775
    %v3085 = vmul.f32 %v2855, %v2855
    %v3086 = vmul.f32 %v2857, %v2857
    %v3087 = vmul.f32 %v2937, %v2937
    %v3088 = vmul.f32 %v2939, %v2939
    %v3089 = vmul.f32 %v3019, %v3019
    %v3090 = vmul.f32 %v3021, %v3021
    %v3091 = vrot.slane %v3083, 4
    %v3092 = vadd.f32 %v3083, %v3091
    %v3093 = vrot.slane %v3092, 2
    %v3094 = vadd.f32 %v3092, %v3093
    %v3095 = vrot.slane %v3094, 1
    %v3096 = vadd.f32 %v3094, %v3095
    %v3097 = vrot.slane %v3084, 4
    %v3098 = vadd.f32 %v3084, %v3097
    %v3099 = vrot.slane %v3098, 2
    %v3100 = vadd.f32 %v3098, %v3099
    %v3101 = vrot.slane %v3100, 1
    %v3102 = vadd.f32 %v3100, %v3101
    %v3103 = vrot.slane %v3085, 4
    %v3104 = vadd.f32 %v3085, %v3103
    %v3105 = vrot.slane %v3104, 2
    %v3106 = vadd.f32 %v3104, %v3105
    %v3107 = vrot.slane %v3106, 1
    %v3108 = vadd.f32 %v3106, %v3107
    %v3109 = vrot.slane %v3086, 4
    %v3110 = vadd.f32 %v3086, %v3109
    %v3111 = vrot.slane %v3110, 2
    %v3112 = vadd.f32 %v3110, %v3111
    %v3113 = vrot.slane %v3112, 1
    %v3114 = vadd.f32 %v3112, %v3113
    %v3115 = vrot.slane %v3087, 4
    %v3116 = vadd.f32 %v3087, %v3115
    %v3117 = vrot.slane %v3116, 2
    %v3118 = vadd.f32 %v3116, %v3117
    %v3119 = vrot.slane %v3118, 1
    %v3120 = vadd.f32 %v3118, %v3119
    %v3121 = vrot.slane %v3088, 4
    %v3122 = vadd.f32 %v3088, %v3121
    %v3123 = vrot.slane %v3122, 2
    %v3124 = vadd.f32 %v3122, %v3123
    %v3125 = vrot.slane %v3124, 1
    %v3126 = vadd.f32 %v3124, %v3125
    %v3127 = vrot.slane %v3089, 4
    %v3128 = vadd.f32 %v3089, %v3127
    %v3129 = vrot.slane %v3128, 2
    %v3130 = vadd.f32 %v3128, %v3129
    %v3131 = vrot.slane %v3130, 1
    %v3132 = vadd.f32 %v3130, %v3131
    %v3133 = vrot.slane %v3090, 4
    %v3134 = vadd.f32 %v3090, %v3133
    %v3135 = vrot.slane %v3134, 2
    %v3136 = vadd.f32 %v3134, %v3135
    %v3137 = vrot.slane %v3136, 1
    %v3138 = vadd.f32 %v3136, %v3137
    %v3139 = vmul.f32 %v3096, %v454
    %v3140 = vmul.f32 %v3102, %v454
    %v3141 = vmul.f32 %v3108, %v454
    %v3142 = vmul.f32 %v3114, %v454
    %v3143 = vmul.f32 %v3120, %v454
    %v3144 = vmul.f32 %v3126, %v454
    %v3145 = vmul.f32 %v3132, %v454
    %v3146 = vmul.f32 %v3138, %v454
    %v3147 = vmul.f32 %v3075, %v3075
    %v3148 = vmul.f32 %v3076, %v3076
    %v3149 = vmul.f32 %v3077, %v3077
    %v3150 = vmul.f32 %v3078, %v3078
    %v3151 = vmul.f32 %v3079, %v3079
    %v3152 = vmul.f32 %v3080, %v3080
    %v3153 = vmul.f32 %v3081, %v3081
    %v3154 = vmul.f32 %v3082, %v3082
    %v3155 = vsub.f32 %v3139, %v3147
    %v3156 = vsub.f32 %v3140, %v3148
    %v3157 = vsub.f32 %v3141, %v3149
    %v3158 = vsub.f32 %v3142, %v3150
    %v3159 = vsub.f32 %v3143, %v3151
    %v3160 = vsub.f32 %v3144, %v3152
    %v3161 = vsub.f32 %v3145, %v3153
    %v3162 = vsub.f32 %v3146, %v3154
    %v3163 = vadd.f32 %v3155, 0.8
    %v3164 = vadd.f32 %v3156, 0.8
    %v3165 = vadd.f32 %v3157, 0.8
    %v3166 = vadd.f32 %v3158, 0.8
    %v3167 = vadd.f32 %v3159, 0.8
    %v3168 = vadd.f32 %v3160, 0.8
    %v3169 = vadd.f32 %v3161, 0.8
    %v3170 = vadd.f32 %v3162, 0.8
    %v3171 = vrsqrt.pop %v3163
    %v3172 = vrsqrt.pop %v3164
    %v3173 = vrsqrt.pop %v3165
    %v3174 = vrsqrt.pop %v3166
    %v3175 = vrsqrt.pop %v3167
    %v3176 = vrsqrt.pop %v3168
    %v3177 = vrsqrt.pop %v3169
    %v3178 = vrsqrt.pop %v3170
    %v3180 = vlaneseq
    %v3181 = vshrl.u32 %v3180, 7
    %v3182 = vsub.s32 0, %v3181
    %v3183 = vrot.slane %v3025, %v3182
    %v3184 = vlaneseq
    %v3185 = vshrl.u32 %v3184, 7
    %v3186 = vsub.s32 1, %v3185
    %v3187 = vrot.slane %v3025, %v3186
    %v3188 = vlaneseq
    %v3189 = vshrl.u32 %v3188, 7
    %v3190 = vsub.s32 2, %v3189
    %v3191 = vrot.slane %v3025, %v3190
    %v3192 = vlaneseq
    %v3193 = vshrl.u32 %v3192, 7
    %v3194 = vsub.s32 3, %v3193
    %v3195 = vrot.slane %v3025, %v3194
    %v3196 = vlaneseq
    %v3197 = vshrl.u32 %v3196, 7
    %v3198 = vsub.s32 4, %v3197
    %v3199 = vrot.slane %v3025, %v3198
    %v3200 = vlaneseq
    %v3201 = vshrl.u32 %v3200, 7
    %v3202 = vsub.s32 5, %v3201
    %v3203 = vrot.slane %v3025, %v3202
    %v3204 = vlaneseq
    %v3205 = vshrl.u32 %v3204, 7
    %v3206 = vsub.s32 6, %v3205
    %v3207 = vrot.slane %v3025, %v3206
    %v3208 = vlaneseq
    %v3209 = vshrl.u32 %v3208, 7
    %v3210 = vsub.s32 7, %v3209
    %v3211 = vrot.slane %v3025, %v3210
    %v3220 = vmul.f32 %v3171, %v3183
    %v3221 = vmul.f32 %v3172, %v3187
    %v3222 = vmul.f32 %v3173, %v3191
    %v3223 = vmul.f32 %v3174, %v3195
    %v3224 = vmul.f32 %v3175, %v3199
    %v3225 = vmul.f32 %v3176, %v3203
    %v3226 = vmul.f32 %v3177, %v3207
    %v3227 = vmul.f32 %v3178, %v3211
    %v3228 = vsub.f32 %v2773, %v3075
    %v3229 = vsub.f32 %v2775, %v3076
    %v3230 = vsub.f32 %v2855, %v3077
    %v3231 = vsub.f32 %v2857, %v3078
    %v3232 = vsub.f32 %v2937, %v3079
    %v3233 = vsub.f32 %v2939, %v3080
    %v3234 = vsub.f32 %v3019, %v3081
    %v3235 = vsub.f32 %v3021, %v3082
    %v3236 = vlaneseq
    %v3237 = vshrl.u32 %v3236, 7
    %v3238 = vsub.s32 0, %v3237
    %v3239 = vrot.slane %v3220, %v3238
    %v3240 = vlaneseq
    %v3241 = vshrl.u32 %v3240, 7
    %v3242 = vsub.s32 0, %v3241
    %v3243 = vrot.slane %v3221, %v3242
    %v3244 = vlaneseq
    %v3245 = vshrl.u32 %v3244, 7
    %v3246 = vsub.s32 0, %v3245
    %v3247 = vrot.slane %v3222, %v3246
    %v3248 = vlaneseq
    %v3249 = vshrl.u32 %v3248, 7
    %v3250 = vsub.s32 0, %v3249
    %v3251 = vrot.slane %v3223, %v3250
    %v3252 = vlaneseq
    %v3253 = vshrl.u32 %v3252, 7
    %v3254 = vsub.s32 0, %v3253
    %v3255 = vrot.slane %v3224, %v3254
    %v3256 = vlaneseq
    %v3257 = vshrl.u32 %v3256, 7
    %v3258 = vsub.s32 0, %v3257
    %v3259 = vrot.slane %v3225, %v3258
    %v3260 = vlaneseq
    %v3261 = vshrl.u32 %v3260, 7
    %v3262 = vsub.s32 0, %v3261
    %v3263 = vrot.slane %v3226, %v3262
    %v3264 = vlaneseq
    %v3265 = vshrl.u32 %v3264, 7
    %v3266 = vsub.s32 0, %v3265
    %v3267 = vrot.slane %v3227, %v3266
    %v3268 = vmul.f32 %v3228, %v3239
    %v3269 = vmul.f32 %v3229, %v3243
    %v3270 = vmul.f32 %v3230, %v3247
    %v3271 = vmul.f32 %v3231, %v3251
    %v3272 = vmul.f32 %v3232, %v3255
    %v3273 = vmul.f32 %v3233, %v3259
    %v3274 = vmul.f32 %v3234, %v3263
    %v3275 = vmul.f32 %v3235, %v3267
    %v3277 = vlaneseq
    %v3278 = vshrl.u32 %v3277, 7
    %v3279 = vsub.s32 0, %v3278
    %v3280 = vrot.slane %v3026, %v3279
    %v3281 = vlaneseq
    %v3282 = vshrl.u32 %v3281, 7
    %v3283 = vsub.s32 1, %v3282
    %v3284 = vrot.slane %v3026, %v3283
    %v3285 = vlaneseq
    %v3286 = vshrl.u32 %v3285, 7
    %v3287 = vsub.s32 2, %v3286
    %v3288 = vrot.slane %v3026, %v3287
    %v3289 = vlaneseq
    %v3290 = vshrl.u32 %v3289, 7
    %v3291 = vsub.s32 3, %v3290
    %v3292 = vrot.slane %v3026, %v3291
    %v3293 = vlaneseq
    %v3294 = vshrl.u32 %v3293, 7
    %v3295 = vsub.s32 4, %v3294
    %v3296 = vrot.slane %v3026, %v3295
    %v3297 = vlaneseq
    %v3298 = vshrl.u32 %v3297, 7
    %v3299 = vsub.s32 5, %v3298
    %v3300 = vrot.slane %v3026, %v3299
    %v3301 = vlaneseq
    %v3302 = vshrl.u32 %v3301, 7
    %v3303 = vsub.s32 6, %v3302
    %v3304 = vrot.slane %v3026, %v3303
    %v3305 = vlaneseq
    %v3306 = vshrl.u32 %v3305, 7
    %v3307 = vsub.s32 7, %v3306
    %v3308 = vrot.slane %v3026, %v3307
    %v3317 = vadd.f32 %v3268, %v3280
    %v3318 = vadd.f32 %v3269, %v3284
    %v3319 = vadd.f32 %v3270, %v3288
    %v3320 = vadd.f32 %v3271, %v3292
    %v3321 = vadd.f32 %v3272, %v3296
    %v3322 = vadd.f32 %v3273, %v3300
    %v3323 = vadd.f32 %v3274, %v3304
    %v3324 = vadd.f32 %v3275, %v3308
    %vm3325 = vcmp.gt.f32.partialorder %v3317, 0.0
    %vm3326 = vcmp.gt.f32.partialorder %v3318, 0.0
    %vm3327 = vcmp.gt.f32.partialorder %v3319, 0.0
    %vm3328 = vcmp.gt.f32.partialorder %v3320, 0.0
    %vm3329 = vcmp.gt.f32.partialorder %v3321, 0.0
    %vm3330 = vcmp.gt.f32.partialorder %v3322, 0.0
    %vm3331 = vcmp.gt.f32.partialorder %v3323, 0.0
    %vm3332 = vcmp.gt.f32.partialorder %v3324, 0.0
    %v3333 = vmul.f32 %v3317, 0.2
    %v3334 = vmul.f32 %v3318, 0.2
    %v3335 = vmul.f32 %v3319, 0.2
    %v3336 = vmul.f32 %v3320, 0.2
    %v3337 = vmul.f32 %v3321, 0.2
    %v3338 = vmul.f32 %v3322, 0.2
    %v3339 = vmul.f32 %v3323, 0.2
    %v3340 = vmul.f32 %v3324, 0.2
    %v3341 = vsel %vm3325, %v3317, %v3333
    %v3342 = vsel %vm3326, %v3318, %v3334
    %v3343 = vsel %vm3327, %v3319, %v3335
    %v3344 = vsel %vm3328, %v3320, %v3336
    %v3345 = vsel %vm3329, %v3321, %v3337
    %v3346 = vsel %vm3330, %v3322, %v3338
    %v3347 = vsel %vm3331, %v3323, %v3339
    %v3348 = vsel %vm3332, %v3324, %v3340
    %v3349 = vpack.c.bf16 %v3341, %v3341
    %v3350 = vpack.c.bf16 %v3342, %v3342
    %v3351 = vpack.c.bf16 %v3343, %v3343
    %v3352 = vpack.c.bf16 %v3344, %v3344
    %v3353 = vpack.c.bf16 %v3345, %v3345
    %v3354 = vpack.c.bf16 %v3346, %v3346
    %v3355 = vpack.c.bf16 %v3347, %v3347
    %v3356 = vpack.c.bf16 %v3348, %v3348
    %v3357 = vld [vmem:[#allocation19] sm:$0xff]
    %v3358 = vld [vmem:[#allocation19 + $0x8] sm:$0xff]
    %v3359 = vld [vmem:[#allocation19 + $0x10] sm:$0xff]
    %v3360 = vld [vmem:[#allocation19 + $0x18] sm:$0xff]
    %v3361 = vld [vmem:[#allocation19 + $0x20] sm:$0xff]
    %v3362 = vld [vmem:[#allocation19 + $0x28] sm:$0xff]
    %v3363 = vld [vmem:[#allocation19 + $0x30] sm:$0xff]
    %v3364 = vld [vmem:[#allocation19 + $0x38] sm:$0xff]
    %v3365 = vld [vmem:[#allocation19 + $0x40] sm:$0xff]
    %v3366 = vld [vmem:[#allocation19 + $0x48] sm:$0xff]
    %v3367 = vld [vmem:[#allocation19 + $0x50] sm:$0xff]
    %v3368 = vld [vmem:[#allocation19 + $0x58] sm:$0xff]
    %v3369 = vld [vmem:[#allocation19 + $0x60] sm:$0xff]
    %v3370 = vld [vmem:[#allocation19 + $0x68] sm:$0xff]
    %v3371 = vld [vmem:[#allocation19 + $0x70] sm:$0xff]
    %v3372 = vld [vmem:[#allocation19 + $0x78] sm:$0xff]
    %v3373 = vld [vmem:[#allocation19 + $0x80] sm:$0xff]
    %v3374 = vld [vmem:[#allocation19 + $0x88] sm:$0xff]
    %v3375 = vld [vmem:[#allocation19 + $0x90] sm:$0xff]
    %v3376 = vld [vmem:[#allocation19 + $0x98] sm:$0xff]
    %v3377 = vld [vmem:[#allocation19 + $0xa0] sm:$0xff]
    %v3378 = vld [vmem:[#allocation19 + $0xa8] sm:$0xff]
    %v3379 = vld [vmem:[#allocation19 + $0xb0] sm:$0xff]
    %v3380 = vld [vmem:[#allocation19 + $0xb8] sm:$0xff]
    %v3381 = vld [vmem:[#allocation19 + $0xc0] sm:$0xff]
    %v3382 = vld [vmem:[#allocation19 + $0xc8] sm:$0xff]
    %v3383 = vld [vmem:[#allocation19 + $0xd0] sm:$0xff]
    %v3384 = vld [vmem:[#allocation19 + $0xd8] sm:$0xff]
    %v3385 = vld [vmem:[#allocation19 + $0xe0] sm:$0xff]
    %v3386 = vld [vmem:[#allocation19 + $0xe8] sm:$0xff]
    %v3387 = vld [vmem:[#allocation19 + $0xf0] sm:$0xff]
    %v3388 = vld [vmem:[#allocation19 + $0xf8] sm:$0xff]
    %v3389 = vld [vmem:[#allocation19 + $0x100] sm:$0xff]
    %v3390 = vld [vmem:[#allocation19 + $0x108] sm:$0xff]
    %v3391 = vld [vmem:[#allocation19 + $0x110] sm:$0xff]
    %v3392 = vld [vmem:[#allocation19 + $0x118] sm:$0xff]
    %v3393 = vld [vmem:[#allocation19 + $0x120] sm:$0xff]
    %v3394 = vld [vmem:[#allocation19 + $0x128] sm:$0xff]
    %v3395 = vld [vmem:[#allocation19 + $0x130] sm:$0xff]
    %v3396 = vld [vmem:[#allocation19 + $0x138] sm:$0xff]
    %v3397 = vld [vmem:[#allocation19 + $0x140] sm:$0xff]
    %v3398 = vld [vmem:[#allocation19 + $0x148] sm:$0xff]
    %v3399 = vld [vmem:[#allocation19 + $0x150] sm:$0xff]
    %v3400 = vld [vmem:[#allocation19 + $0x158] sm:$0xff]
    %v3401 = vld [vmem:[#allocation19 + $0x160] sm:$0xff]
    %v3402 = vld [vmem:[#allocation19 + $0x168] sm:$0xff]
    %v3403 = vld [vmem:[#allocation19 + $0x170] sm:$0xff]
    %v3404 = vld [vmem:[#allocation19 + $0x178] sm:$0xff]
    %v3405 = vld [vmem:[#allocation19 + $0x180] sm:$0xff]
    %v3406 = vld [vmem:[#allocation19 + $0x188] sm:$0xff]
    %v3407 = vld [vmem:[#allocation19 + $0x190] sm:$0xff]
    %v3408 = vld [vmem:[#allocation19 + $0x198] sm:$0xff]
    %v3409 = vld [vmem:[#allocation19 + $0x1a0] sm:$0xff]
    %v3410 = vld [vmem:[#allocation19 + $0x1a8] sm:$0xff]
    %v3411 = vld [vmem:[#allocation19 + $0x1b0] sm:$0xff]
    %v3412 = vld [vmem:[#allocation19 + $0x1b8] sm:$0xff]
    %v3413 = vld [vmem:[#allocation19 + $0x1c0] sm:$0xff]
    %v3414 = vld [vmem:[#allocation19 + $0x1c8] sm:$0xff]
    %v3415 = vld [vmem:[#allocation19 + $0x1d0] sm:$0xff]
    %v3416 = vld [vmem:[#allocation19 + $0x1d8] sm:$0xff]
    %v3417 = vld [vmem:[#allocation19 + $0x1e0] sm:$0xff]
    %v3418 = vld [vmem:[#allocation19 + $0x1e8] sm:$0xff]
    %v3419 = vld [vmem:[#allocation19 + $0x1f0] sm:$0xff]
    %v3420 = vld [vmem:[#allocation19 + $0x1f8] sm:$0xff]
    %v3421 = vld [vmem:[#allocation19 + $0x200] sm:$0xff]
    %v3422 = vld [vmem:[#allocation19 + $0x208] sm:$0xff]
    %v3423 = vld [vmem:[#allocation19 + $0x210] sm:$0xff]
    %v3424 = vld [vmem:[#allocation19 + $0x218] sm:$0xff]
    %v3425 = vld [vmem:[#allocation19 + $0x220] sm:$0xff]
    %v3426 = vld [vmem:[#allocation19 + $0x228] sm:$0xff]
    %v3427 = vld [vmem:[#allocation19 + $0x230] sm:$0xff]
    %v3428 = vld [vmem:[#allocation19 + $0x238] sm:$0xff]
    %v3429 = vld [vmem:[#allocation19 + $0x240] sm:$0xff]
    %v3430 = vld [vmem:[#allocation19 + $0x248] sm:$0xff]
    %v3431 = vld [vmem:[#allocation19 + $0x250] sm:$0xff]
    %v3432 = vld [vmem:[#allocation19 + $0x258] sm:$0xff]
    %v3433 = vld [vmem:[#allocation19 + $0x260] sm:$0xff]
    %v3434 = vld [vmem:[#allocation19 + $0x268] sm:$0xff]
    %v3435 = vld [vmem:[#allocation19 + $0x270] sm:$0xff]
    %v3436 = vld [vmem:[#allocation19 + $0x278] sm:$0xff]
    %v3437 = vld [vmem:[#allocation19 + $0x280] sm:$0xff]
    %v3438 = vld [vmem:[#allocation19 + $0x288] sm:$0xff]
    %v3439 = vld [vmem:[#allocation19 + $0x290] sm:$0xff]
    %v3440 = vld [vmem:[#allocation19 + $0x298] sm:$0xff]
    %v3441 = vld [vmem:[#allocation19 + $0x2a0] sm:$0xff]
    %v3442 = vld [vmem:[#allocation19 + $0x2a8] sm:$0xff]
    %v3443 = vld [vmem:[#allocation19 + $0x2b0] sm:$0xff]
    %v3444 = vld [vmem:[#allocation19 + $0x2b8] sm:$0xff]
    %v3445 = vld [vmem:[#allocation19 + $0x2c0] sm:$0xff]
    %v3446 = vld [vmem:[#allocation19 + $0x2c8] sm:$0xff]
    %v3447 = vld [vmem:[#allocation19 + $0x2d0] sm:$0xff]
    %v3448 = vld [vmem:[#allocation19 + $0x2d8] sm:$0xff]
    %v3449 = vld [vmem:[#allocation19 + $0x2e0] sm:$0xff]
    %v3450 = vld [vmem:[#allocation19 + $0x2e8] sm:$0xff]
    %v3451 = vld [vmem:[#allocation19 + $0x2f0] sm:$0xff]
    %v3452 = vld [vmem:[#allocation19 + $0x2f8] sm:$0xff]
    %v3453 = vld [vmem:[#allocation19 + $0x300] sm:$0xff]
    %v3454 = vld [vmem:[#allocation19 + $0x308] sm:$0xff]
    %v3455 = vld [vmem:[#allocation19 + $0x310] sm:$0xff]
    %v3456 = vld [vmem:[#allocation19 + $0x318] sm:$0xff]
    %v3457 = vld [vmem:[#allocation19 + $0x320] sm:$0xff]
    %v3458 = vld [vmem:[#allocation19 + $0x328] sm:$0xff]
    %v3459 = vld [vmem:[#allocation19 + $0x330] sm:$0xff]
    %v3460 = vld [vmem:[#allocation19 + $0x338] sm:$0xff]
    %v3461 = vld [vmem:[#allocation19 + $0x340] sm:$0xff]
    %v3462 = vld [vmem:[#allocation19 + $0x348] sm:$0xff]
    %v3463 = vld [vmem:[#allocation19 + $0x350] sm:$0xff]
    %v3464 = vld [vmem:[#allocation19 + $0x358] sm:$0xff]
    %v3465 = vld [vmem:[#allocation19 + $0x360] sm:$0xff]
    %v3466 = vld [vmem:[#allocation19 + $0x368] sm:$0xff]
    %v3467 = vld [vmem:[#allocation19 + $0x370] sm:$0xff]
    %v3468 = vld [vmem:[#allocation19 + $0x378] sm:$0xff]
    %v3469 = vld [vmem:[#allocation19 + $0x380] sm:$0xff]
    %v3470 = vld [vmem:[#allocation19 + $0x388] sm:$0xff]
    %v3471 = vld [vmem:[#allocation19 + $0x390] sm:$0xff]
    %v3472 = vld [vmem:[#allocation19 + $0x398] sm:$0xff]
    %v3473 = vld [vmem:[#allocation19 + $0x3a0] sm:$0xff]
    %v3474 = vld [vmem:[#allocation19 + $0x3a8] sm:$0xff]
    %v3475 = vld [vmem:[#allocation19 + $0x3b0] sm:$0xff]
    %v3476 = vld [vmem:[#allocation19 + $0x3b8] sm:$0xff]
    %v3477 = vld [vmem:[#allocation19 + $0x3c0] sm:$0xff]
    %v3478 = vld [vmem:[#allocation19 + $0x3c8] sm:$0xff]
    %v3479 = vld [vmem:[#allocation19 + $0x3d0] sm:$0xff]
    %v3480 = vld [vmem:[#allocation19 + $0x3d8] sm:$0xff]
    %v3481 = vld [vmem:[#allocation19 + $0x3e0] sm:$0xff]
    %v3482 = vld [vmem:[#allocation19 + $0x3e8] sm:$0xff]
    %v3483 = vld [vmem:[#allocation19 + $0x3f0] sm:$0xff]
    %v3484 = vld [vmem:[#allocation19 + $0x3f8] sm:$0xff]
    %v3485 = vld [vmem:[%s13] sm:$0x3]
    %v3487 = vlaneseq
    %v3488 = vshrl.u32 %v3487, 7
    %v3489 = vsub.s32 0, %v3488
    %v3490 = vrot.slane %v3485, %v3489
    %v3491 = vlaneseq
    %v3492 = vshrl.u32 %v3491, 7
    %v3493 = vsub.s32 1, %v3492
    %v3494 = vrot.slane %v3485, %v3493
    %v3625 = vunpack.c.l.b16 %v3357
    %v3626 = vunpack.c.h.b16 %v3357
    %v3627 = vunpack.c.l.b16 %v3358
    %v3628 = vunpack.c.h.b16 %v3358
    %v3629 = vunpack.c.l.b16 %v3359
    %v3630 = vunpack.c.h.b16 %v3359
    %v3631 = vunpack.c.l.b16 %v3360
    %v3632 = vunpack.c.h.b16 %v3360
    %v3633 = vunpack.c.l.b16 %v3361
    %v3634 = vunpack.c.h.b16 %v3361
    %v3635 = vunpack.c.l.b16 %v3362
    %v3636 = vunpack.c.h.b16 %v3362
    %v3637 = vunpack.c.l.b16 %v3363
    %v3638 = vunpack.c.h.b16 %v3363
    %v3639 = vunpack.c.l.b16 %v3364
    %v3640 = vunpack.c.h.b16 %v3364
    %v3641 = vunpack.c.l.b16 %v3365
    %v3642 = vunpack.c.h.b16 %v3365
    %v3643 = vunpack.c.l.b16 %v3366
    %v3644 = vunpack.c.h.b16 %v3366
    %v3645 = vunpack.c.l.b16 %v3367
    %v3646 = vunpack.c.h.b16 %v3367
    %v3647 = vunpack.c.l.b16 %v3368
    %v3648 = vunpack.c.h.b16 %v3368
    %v3649 = vunpack.c.l.b16 %v3369
    %v3650 = vunpack.c.h.b16 %v3369
    %v3651 = vunpack.c.l.b16 %v3370
    %v3652 = vunpack.c.h.b16 %v3370
    %v3653 = vunpack.c.l.b16 %v3371
    %v3654 = vunpack.c.h.b16 %v3371
    %v3655 = vunpack.c.l.b16 %v3372
    %v3656 = vunpack.c.h.b16 %v3372
    %v3657 = vunpack.c.l.b16 %v3373
    %v3658 = vunpack.c.h.b16 %v3373
    %v3659 = vunpack.c.l.b16 %v3374
    %v3660 = vunpack.c.h.b16 %v3374
    %v3661 = vunpack.c.l.b16 %v3375
    %v3662 = vunpack.c.h.b16 %v3375
    %v3663 = vunpack.c.l.b16 %v3376
    %v3664 = vunpack.c.h.b16 %v3376
    %v3665 = vunpack.c.l.b16 %v3377
    %v3666 = vunpack.c.h.b16 %v3377
    %v3667 = vunpack.c.l.b16 %v3378
    %v3668 = vunpack.c.h.b16 %v3378
    %v3669 = vunpack.c.l.b16 %v3379
    %v3670 = vunpack.c.h.b16 %v3379
    %v3671 = vunpack.c.l.b16 %v3380
    %v3672 = vunpack.c.h.b16 %v3380
    %v3673 = vunpack.c.l.b16 %v3381
    %v3674 = vunpack.c.h.b16 %v3381
    %v3675 = vunpack.c.l.b16 %v3382
    %v3676 = vunpack.c.h.b16 %v3382
    %v3677 = vunpack.c.l.b16 %v3383
    %v3678 = vunpack.c.h.b16 %v3383
    %v3679 = vunpack.c.l.b16 %v3384
    %v3680 = vunpack.c.h.b16 %v3384
    %v3681 = vunpack.c.l.b16 %v3385
    %v3682 = vunpack.c.h.b16 %v3385
    %v3683 = vunpack.c.l.b16 %v3386
    %v3684 = vunpack.c.h.b16 %v3386
    %v3685 = vunpack.c.l.b16 %v3387
    %v3686 = vunpack.c.h.b16 %v3387
    %v3687 = vunpack.c.l.b16 %v3388
    %v3688 = vunpack.c.h.b16 %v3388
    %v3689 = vunpack.c.l.b16 %v3389
    %v3690 = vunpack.c.h.b16 %v3389
    %v3691 = vunpack.c.l.b16 %v3390
    %v3692 = vunpack.c.h.b16 %v3390
    %v3693 = vunpack.c.l.b16 %v3391
    %v3694 = vunpack.c.h.b16 %v3391
    %v3695 = vunpack.c.l.b16 %v3392
    %v3696 = vunpack.c.h.b16 %v3392
    %v3697 = vunpack.c.l.b16 %v3393
    %v3698 = vunpack.c.h.b16 %v3393
    %v3699 = vunpack.c.l.b16 %v3394
    %v3700 = vunpack.c.h.b16 %v3394
    %v3701 = vunpack.c.l.b16 %v3395
    %v3702 = vunpack.c.h.b16 %v3395
    %v3703 = vunpack.c.l.b16 %v3396
    %v3704 = vunpack.c.h.b16 %v3396
    %v3705 = vunpack.c.l.b16 %v3397
    %v3706 = vunpack.c.h.b16 %v3397
    %v3707 = vunpack.c.l.b16 %v3398
    %v3708 = vunpack.c.h.b16 %v3398
    %v3709 = vunpack.c.l.b16 %v3399
    %v3710 = vunpack.c.h.b16 %v3399
    %v3711 = vunpack.c.l.b16 %v3400
    %v3712 = vunpack.c.h.b16 %v3400
    %v3713 = vunpack.c.l.b16 %v3401
    %v3714 = vunpack.c.h.b16 %v3401
    %v3715 = vunpack.c.l.b16 %v3402
    %v3716 = vunpack.c.h.b16 %v3402
    %v3717 = vunpack.c.l.b16 %v3403
    %v3718 = vunpack.c.h.b16 %v3403
    %v3719 = vunpack.c.l.b16 %v3404
    %v3720 = vunpack.c.h.b16 %v3404
    %v3721 = vunpack.c.l.b16 %v3405
    %v3722 = vunpack.c.h.b16 %v3405
    %v3723 = vunpack.c.l.b16 %v3406
    %v3724 = vunpack.c.h.b16 %v3406
    %v3725 = vunpack.c.l.b16 %v3407
    %v3726 = vunpack.c.h.b16 %v3407
    %v3727 = vunpack.c.l.b16 %v3408
    %v3728 = vunpack.c.h.b16 %v3408
    %v3729 = vunpack.c.l.b16 %v3409
    %v3730 = vunpack.c.h.b16 %v3409
    %v3731 = vunpack.c.l.b16 %v3410
    %v3732 = vunpack.c.h.b16 %v3410
    %v3733 = vunpack.c.l.b16 %v3411
    %v3734 = vunpack.c.h.b16 %v3411
    %v3735 = vunpack.c.l.b16 %v3412
    %v3736 = vunpack.c.h.b16 %v3412
    %v3737 = vunpack.c.l.b16 %v3413
    %v3738 = vunpack.c.h.b16 %v3413
    %v3739 = vunpack.c.l.b16 %v3414
    %v3740 = vunpack.c.h.b16 %v3414
    %v3741 = vunpack.c.l.b16 %v3415
    %v3742 = vunpack.c.h.b16 %v3415
    %v3743 = vunpack.c.l.b16 %v3416
    %v3744 = vunpack.c.h.b16 %v3416
    %v3745 = vunpack.c.l.b16 %v3417
    %v3746 = vunpack.c.h.b16 %v3417
    %v3747 = vunpack.c.l.b16 %v3418
    %v3748 = vunpack.c.h.b16 %v3418
    %v3749 = vunpack.c.l.b16 %v3419
    %v3750 = vunpack.c.h.b16 %v3419
    %v3751 = vunpack.c.l.b16 %v3420
    %v3752 = vunpack.c.h.b16 %v3420
    %v3753 = vunpack.c.l.b16 %v3421
    %v3754 = vunpack.c.h.b16 %v3421
    %v3755 = vunpack.c.l.b16 %v3422
    %v3756 = vunpack.c.h.b16 %v3422
    %v3757 = vunpack.c.l.b16 %v3423
    %v3758 = vunpack.c.h.b16 %v3423
    %v3759 = vunpack.c.l.b16 %v3424
    %v3760 = vunpack.c.h.b16 %v3424
    %v3761 = vunpack.c.l.b16 %v3425
    %v3762 = vunpack.c.h.b16 %v3425
    %v3763 = vunpack.c.l.b16 %v3426
    %v3764 = vunpack.c.h.b16 %v3426
    %v3765 = vunpack.c.l.b16 %v3427
    %v3766 = vunpack.c.h.b16 %v3427
    %v3767 = vunpack.c.l.b16 %v3428
    %v3768 = vunpack.c.h.b16 %v3428
    %v3769 = vunpack.c.l.b16 %v3429
    %v3770 = vunpack.c.h.b16 %v3429
    %v3771 = vunpack.c.l.b16 %v3430
    %v3772 = vunpack.c.h.b16 %v3430
    %v3773 = vunpack.c.l.b16 %v3431
    %v3774 = vunpack.c.h.b16 %v3431
    %v3775 = vunpack.c.l.b16 %v3432
    %v3776 = vunpack.c.h.b16 %v3432
    %v3777 = vunpack.c.l.b16 %v3433
    %v3778 = vunpack.c.h.b16 %v3433
    %v3779 = vunpack.c.l.b16 %v3434
    %v3780 = vunpack.c.h.b16 %v3434
    %v3781 = vunpack.c.l.b16 %v3435
    %v3782 = vunpack.c.h.b16 %v3435
    %v3783 = vunpack.c.l.b16 %v3436
    %v3784 = vunpack.c.h.b16 %v3436
    %v3785 = vunpack.c.l.b16 %v3437
    %v3786 = vunpack.c.h.b16 %v3437
    %v3787 = vunpack.c.l.b16 %v3438
    %v3788 = vunpack.c.h.b16 %v3438
    %v3789 = vunpack.c.l.b16 %v3439
    %v3790 = vunpack.c.h.b16 %v3439
    %v3791 = vunpack.c.l.b16 %v3440
    %v3792 = vunpack.c.h.b16 %v3440
    %v3793 = vunpack.c.l.b16 %v3441
    %v3794 = vunpack.c.h.b16 %v3441
    %v3795 = vunpack.c.l.b16 %v3442
    %v3796 = vunpack.c.h.b16 %v3442
    %v3797 = vunpack.c.l.b16 %v3443
    %v3798 = vunpack.c.h.b16 %v3443
    %v3799 = vunpack.c.l.b16 %v3444
    %v3800 = vunpack.c.h.b16 %v3444
    %v3801 = vunpack.c.l.b16 %v3445
    %v3802 = vunpack.c.h.b16 %v3445
    %v3803 = vunpack.c.l.b16 %v3446
    %v3804 = vunpack.c.h.b16 %v3446
    %v3805 = vunpack.c.l.b16 %v3447
    %v3806 = vunpack.c.h.b16 %v3447
    %v3807 = vunpack.c.l.b16 %v3448
    %v3808 = vunpack.c.h.b16 %v3448
    %v3809 = vunpack.c.l.b16 %v3449
    %v3810 = vunpack.c.h.b16 %v3449
    %v3811 = vunpack.c.l.b16 %v3450
    %v3812 = vunpack.c.h.b16 %v3450
    %v3813 = vunpack.c.l.b16 %v3451
    %v3814 = vunpack.c.h.b16 %v3451
    %v3815 = vunpack.c.l.b16 %v3452
    %v3816 = vunpack.c.h.b16 %v3452
    %v3817 = vunpack.c.l.b16 %v3453
    %v3818 = vunpack.c.h.b16 %v3453
    %v3819 = vunpack.c.l.b16 %v3454
    %v3820 = vunpack.c.h.b16 %v3454
    %v3821 = vunpack.c.l.b16 %v3455
    %v3822 = vunpack.c.h.b16 %v3455
    %v3823 = vunpack.c.l.b16 %v3456
    %v3824 = vunpack.c.h.b16 %v3456
    %v3825 = vunpack.c.l.b16 %v3457
    %v3826 = vunpack.c.h.b16 %v3457
    %v3827 = vunpack.c.l.b16 %v3458
    %v3828 = vunpack.c.h.b16 %v3458
    %v3829 = vunpack.c.l.b16 %v3459
    %v3830 = vunpack.c.h.b16 %v3459
    %v3831 = vunpack.c.l.b16 %v3460
    %v3832 = vunpack.c.h.b16 %v3460
    %v3833 = vunpack.c.l.b16 %v3461
    %v3834 = vunpack.c.h.b16 %v3461
    %v3835 = vunpack.c.l.b16 %v3462
    %v3836 = vunpack.c.h.b16 %v3462
    %v3837 = vunpack.c.l.b16 %v3463
    %v3838 = vunpack.c.h.b16 %v3463
    %v3839 = vunpack.c.l.b16 %v3464
    %v3840 = vunpack.c.h.b16 %v3464
    %v3841 = vunpack.c.l.b16 %v3465
    %v3842 = vunpack.c.h.b16 %v3465
    %v3843 = vunpack.c.l.b16 %v3466
    %v3844 = vunpack.c.h.b16 %v3466
    %v3845 = vunpack.c.l.b16 %v3467
    %v3846 = vunpack.c.h.b16 %v3467
    %v3847 = vunpack.c.l.b16 %v3468
    %v3848 = vunpack.c.h.b16 %v3468
    %v3849 = vunpack.c.l.b16 %v3469
    %v3850 = vunpack.c.h.b16 %v3469
    %v3851 = vunpack.c.l.b16 %v3470
    %v3852 = vunpack.c.h.b16 %v3470
    %v3853 = vunpack.c.l.b16 %v3471
    %v3854 = vunpack.c.h.b16 %v3471
    %v3855 = vunpack.c.l.b16 %v3472
    %v3856 = vunpack.c.h.b16 %v3472
    %v3857 = vunpack.c.l.b16 %v3473
    %v3858 = vunpack.c.h.b16 %v3473
    %v3859 = vunpack.c.l.b16 %v3474
    %v3860 = vunpack.c.h.b16 %v3474
    %v3861 = vunpack.c.l.b16 %v3475
    %v3862 = vunpack.c.h.b16 %v3475
    %v3863 = vunpack.c.l.b16 %v3476
    %v3864 = vunpack.c.h.b16 %v3476
    %v3865 = vunpack.c.l.b16 %v3477
    %v3866 = vunpack.c.h.b16 %v3477
    %v3867 = vunpack.c.l.b16 %v3478
    %v3868 = vunpack.c.h.b16 %v3478
    %v3869 = vunpack.c.l.b16 %v3479
    %v3870 = vunpack.c.h.b16 %v3479
    %v3871 = vunpack.c.l.b16 %v3480
    %v3872 = vunpack.c.h.b16 %v3480
    %v3873 = vunpack.c.l.b16 %v3481
    %v3874 = vunpack.c.h.b16 %v3481
    %v3875 = vunpack.c.l.b16 %v3482
    %v3876 = vunpack.c.h.b16 %v3482
    %v3877 = vunpack.c.l.b16 %v3483
    %v3878 = vunpack.c.h.b16 %v3483
    %v3879 = vunpack.c.l.b16 %v3484
    %v3880 = vunpack.c.h.b16 %v3484
    %v3881 = vpack.c.b16 %v3627, %v3625
    %v3882 = vpack.c.b16 %v3628, %v3626
    %v3883 = vpack.c.b16 %v3631, %v3629
    %v3884 = vpack.c.b16 %v3632, %v3630
    %v3885 = vpack.c.b16 %v3635, %v3633
    %v3886 = vpack.c.b16 %v3636, %v3634
    %v3887 = vpack.c.b16 %v3639, %v3637
    %v3888 = vpack.c.b16 %v3640, %v3638
    %v3889 = vpack.c.b16 %v3643, %v3641
    %v3890 = vpack.c.b16 %v3644, %v3642
    %v3891 = vpack.c.b16 %v3647, %v3645
    %v3892 = vpack.c.b16 %v3648, %v3646
    %v3893 = vpack.c.b16 %v3651, %v3649
    %v3894 = vpack.c.b16 %v3652, %v3650
    %v3895 = vpack.c.b16 %v3655, %v3653
    %v3896 = vpack.c.b16 %v3656, %v3654
    %v3897 = vpack.c.b16 %v3659, %v3657
    %v3898 = vpack.c.b16 %v3660, %v3658
    %v3899 = vpack.c.b16 %v3663, %v3661
    %v3900 = vpack.c.b16 %v3664, %v3662
    %v3901 = vpack.c.b16 %v3667, %v3665
    %v3902 = vpack.c.b16 %v3668, %v3666
    %v3903 = vpack.c.b16 %v3671, %v3669
    %v3904 = vpack.c.b16 %v3672, %v3670
    %v3905 = vpack.c.b16 %v3675, %v3673
    %v3906 = vpack.c.b16 %v3676, %v3674
    %v3907 = vpack.c.b16 %v3679, %v3677
    %v3908 = vpack.c.b16 %v3680, %v3678
    %v3909 = vpack.c.b16 %v3683, %v3681
    %v3910 = vpack.c.b16 %v3684, %v3682
    %v3911 = vpack.c.b16 %v3687, %v3685
    %v3912 = vpack.c.b16 %v3688, %v3686
    %v3913 = vpack.c.b16 %v3691, %v3689
    %v3914 = vpack.c.b16 %v3692, %v3690
    %v3915 = vpack.c.b16 %v3695, %v3693
    %v3916 = vpack.c.b16 %v3696, %v3694
    %v3917 = vpack.c.b16 %v3699, %v3697
    %v3918 = vpack.c.b16 %v3700, %v3698
    %v3919 = vpack.c.b16 %v3703, %v3701
    %v3920 = vpack.c.b16 %v3704, %v3702
    %v3921 = vpack.c.b16 %v3707, %v3705
    %v3922 = vpack.c.b16 %v3708, %v3706
    %v3923 = vpack.c.b16 %v3711, %v3709
    %v3924 = vpack.c.b16 %v3712, %v3710
    %v3925 = vpack.c.b16 %v3715, %v3713
    %v3926 = vpack.c.b16 %v3716, %v3714
    %v3927 = vpack.c.b16 %v3719, %v3717
    %v3928 = vpack.c.b16 %v3720, %v3718
    %v3929 = vpack.c.b16 %v3723, %v3721
    %v3930 = vpack.c.b16 %v3724, %v3722
    %v3931 = vpack.c.b16 %v3727, %v3725
    %v3932 = vpack.c.b16 %v3728, %v3726
    %v3933 = vpack.c.b16 %v3731, %v3729
    %v3934 = vpack.c.b16 %v3732, %v3730
    %v3935 = vpack.c.b16 %v3735, %v3733
    %v3936 = vpack.c.b16 %v3736, %v3734
    %v3937 = vpack.c.b16 %v3739, %v3737
    %v3938 = vpack.c.b16 %v3740, %v3738
    %v3939 = vpack.c.b16 %v3743, %v3741
    %v3940 = vpack.c.b16 %v3744, %v3742
    %v3941 = vpack.c.b16 %v3747, %v3745
    %v3942 = vpack.c.b16 %v3748, %v3746
    %v3943 = vpack.c.b16 %v3751, %v3749
    %v3944 = vpack.c.b16 %v3752, %v3750
    %v3945 = vpack.c.b16 %v3755, %v3753
    %v3946 = vpack.c.b16 %v3756, %v3754
    %v3947 = vpack.c.b16 %v3759, %v3757
    %v3948 = vpack.c.b16 %v3760, %v3758
    %v3949 = vpack.c.b16 %v3763, %v3761
    %v3950 = vpack.c.b16 %v3764, %v3762
    %v3951 = vpack.c.b16 %v3767, %v3765
    %v3952 = vpack.c.b16 %v3768, %v3766
    %v3953 = vpack.c.b16 %v3771, %v3769
    %v3954 = vpack.c.b16 %v3772, %v3770
    %v3955 = vpack.c.b16 %v3775, %v3773
    %v3956 = vpack.c.b16 %v3776, %v3774
    %v3957 = vpack.c.b16 %v3779, %v3777
    %v3958 = vpack.c.b16 %v3780, %v3778
    %v3959 = vpack.c.b16 %v3783, %v3781
    %v3960 = vpack.c.b16 %v3784, %v3782
    %v3961 = vpack.c.b16 %v3787, %v3785
    %v3962 = vpack.c.b16 %v3788, %v3786
    %v3963 = vpack.c.b16 %v3791, %v3789
    %v3964 = vpack.c.b16 %v3792, %v3790
    %v3965 = vpack.c.b16 %v3795, %v3793
    %v3966 = vpack.c.b16 %v3796, %v3794
    %v3967 = vpack.c.b16 %v3799, %v3797
    %v3968 = vpack.c.b16 %v3800, %v3798
    %v3969 = vpack.c.b16 %v3803, %v3801
    %v3970 = vpack.c.b16 %v3804, %v3802
    %v3971 = vpack.c.b16 %v3807, %v3805
    %v3972 = vpack.c.b16 %v3808, %v3806
    %v3973 = vpack.c.b16 %v3811, %v3809
    %v3974 = vpack.c.b16 %v3812, %v3810
    %v3975 = vpack.c.b16 %v3815, %v3813
    %v3976 = vpack.c.b16 %v3816, %v3814
    %v3977 = vpack.c.b16 %v3819, %v3817
    %v3978 = vpack.c.b16 %v3820, %v3818
    %v3979 = vpack.c.b16 %v3823, %v3821
    %v3980 = vpack.c.b16 %v3824, %v3822
    %v3981 = vpack.c.b16 %v3827, %v3825
    %v3982 = vpack.c.b16 %v3828, %v3826
    %v3983 = vpack.c.b16 %v3831, %v3829
    %v3984 = vpack.c.b16 %v3832, %v3830
    %v3985 = vpack.c.b16 %v3835, %v3833
    %v3986 = vpack.c.b16 %v3836, %v3834
    %v3987 = vpack.c.b16 %v3839, %v3837
    %v3988 = vpack.c.b16 %v3840, %v3838
    %v3989 = vpack.c.b16 %v3843, %v3841
    %v3990 = vpack.c.b16 %v3844, %v3842
    %v3991 = vpack.c.b16 %v3847, %v3845
    %v3992 = vpack.c.b16 %v3848, %v3846
    %v3993 = vpack.c.b16 %v3851, %v3849
    %v3994 = vpack.c.b16 %v3852, %v3850
    %v3995 = vpack.c.b16 %v3855, %v3853
    %v3996 = vpack.c.b16 %v3856, %v3854
    %v3997 = vpack.c.b16 %v3859, %v3857
    %v3998 = vpack.c.b16 %v3860, %v3858
    %v3999 = vpack.c.b16 %v3863, %v3861
    %v4000 = vpack.c.b16 %v3864, %v3862
    %v4001 = vpack.c.b16 %v3867, %v3865
    %v4002 = vpack.c.b16 %v3868, %v3866
    %v4003 = vpack.c.b16 %v3871, %v3869
    %v4004 = vpack.c.b16 %v3872, %v3870
    %v4005 = vpack.c.b16 %v3875, %v3873
    %v4006 = vpack.c.b16 %v3876, %v3874
    %v4007 = vpack.c.b16 %v3879, %v3877
    %v4008 = vpack.c.b16 %v3880, %v3878
    %4137 = vmatprep.subr.bf16.mxu0 %v3896
    %4138 = vmatpush1.bf16.msra.mxu0 %v3895
    %4139 = vmatprep.subr.bf16.mxu0 %v3894
    %4140 = vmatpush1.bf16.msra.mxu0 %v3893
    %4141 = vmatprep.subr.bf16.mxu0 %v3892
    %4142 = vmatpush1.bf16.msra.mxu0 %v3891
    %4143 = vmatprep.subr.bf16.mxu0 %v3890
    %4144 = vmatpush1.bf16.msra.mxu0 %v3889
    %4145 = vmatprep.subr.bf16.mxu0 %v3888
    %4146 = vmatpush1.bf16.msra.mxu0 %v3887
    %4147 = vmatprep.subr.bf16.mxu0 %v3886
    %4148 = vmatpush1.bf16.msra.mxu0 %v3885
    %4149 = vmatprep.subr.bf16.mxu0 %v3884
    %4150 = vmatpush1.bf16.msra.mxu0 %v3883
    %4151 = vmatprep.subr.bf16.mxu0 %v3882
    %4152 = vmatpush1.bf16.msra.mxu0 %v3881
    %4153 = vmatprep.subr.bf16.mxu0 %v3912
    %4154 = vmatpush2.bf16.msra.mxu0 %v3911
    %4155 = vmatprep.subr.bf16.mxu0 %v3910
    %4156 = vmatpush2.bf16.msra.mxu0 %v3909
    %4157 = vmatprep.subr.bf16.mxu0 %v3908
    %4158 = vmatpush2.bf16.msra.mxu0 %v3907
    %4159 = vmatprep.subr.bf16.mxu0 %v3906
    %4160 = vmatpush2.bf16.msra.mxu0 %v3905
    %4161 = vmatprep.subr.bf16.mxu0 %v3904
    %4162 = vmatpush2.bf16.msra.mxu0 %v3903
    %4163 = vmatprep.subr.bf16.mxu0 %v3902
    %4164 = vmatpush2.bf16.msra.mxu0 %v3901
    %4165 = vmatprep.subr.bf16.mxu0 %v3900
    %4166 = vmatpush2.bf16.msra.mxu0 %v3899
    %4167 = vmatprep.subr.bf16.mxu0 %v3898
    %4168 = vmatpush2.bf16.msra.mxu0 %v3897
    %4169 = vmatprep.mubr.bf16.mxu0 %v3350
    %4170 = vmatmul.mubr.bf16.gmra.mxu0 %v3349
    %v4171 = vpop.f32.mrf.mxu0
    %v4172 = vadd.f32 %v3490, %v4171
    %v4173 = vpop.f32.mrf.mxu0
    %v4174 = vadd.f32 %v3494, %v4173
    %v4175 = vpop.f32.mrf.mxu0
    %v4176 = vpop.f32.mrf.mxu0
    %4177 = vdwg.mxu0
    %4178 = vmatprep.subr.bf16.mxu0 %v3928
    %4179 = vmatpush1.bf16.msra.mxu0 %v3927
    %4180 = vmatprep.subr.bf16.mxu0 %v3926
    %4181 = vmatpush1.bf16.msra.mxu0 %v3925
    %4182 = vmatprep.subr.bf16.mxu0 %v3924
    %4183 = vmatpush1.bf16.msra.mxu0 %v3923
    %4184 = vmatprep.subr.bf16.mxu0 %v3922
    %4185 = vmatpush1.bf16.msra.mxu0 %v3921
    %4186 = vmatprep.subr.bf16.mxu0 %v3920
    %4187 = vmatpush1.bf16.msra.mxu0 %v3919
    %4188 = vmatprep.subr.bf16.mxu0 %v3918
    %4189 = vmatpush1.bf16.msra.mxu0 %v3917
    %4190 = vmatprep.subr.bf16.mxu0 %v3916
    %4191 = vmatpush1.bf16.msra.mxu0 %v3915
    %4192 = vmatprep.subr.bf16.mxu0 %v3914
    %4193 = vmatpush1.bf16.msra.mxu0 %v3913
    %4194 = vmatprep.subr.bf16.mxu0 %v3944
    %4195 = vmatpush2.bf16.msra.mxu0 %v3943
    %4196 = vmatprep.subr.bf16.mxu0 %v3942
    %4197 = vmatpush2.bf16.msra.mxu0 %v3941
    %4198 = vmatprep.subr.bf16.mxu0 %v3940
    %4199 = vmatpush2.bf16.msra.mxu0 %v3939
    %4200 = vmatprep.subr.bf16.mxu0 %v3938
    %4201 = vmatpush2.bf16.msra.mxu0 %v3937
    %4202 = vmatprep.subr.bf16.mxu0 %v3936
    %4203 = vmatpush2.bf16.msra.mxu0 %v3935
    %4204 = vmatprep.subr.bf16.mxu0 %v3934
    %4205 = vmatpush2.bf16.msra.mxu0 %v3933
    %4206 = vmatprep.subr.bf16.mxu0 %v3932
    %4207 = vmatpush2.bf16.msra.mxu0 %v3931
    %4208 = vmatprep.subr.bf16.mxu0 %v3930
    %4209 = vmatpush2.bf16.msra.mxu0 %v3929
    %4210 = vmatprep.mubr.bf16.mxu0 %v3352
    %4211 = vmatmul.mubr.bf16.gmra.mxu0 %v3351
    %v4212 = vpop.f32.mrf.mxu0
    %v4213 = vadd.f32 %v4172, %v4212
    %v4214 = vpop.f32.mrf.mxu0
    %v4215 = vadd.f32 %v4174, %v4214
    %v4216 = vpop.f32.mrf.mxu0
    %v4217 = vpop.f32.mrf.mxu0
    %4218 = vdwg.mxu0
    %4219 = vmatprep.subr.bf16.mxu0 %v3960
    %4220 = vmatpush1.bf16.msra.mxu0 %v3959
    %4221 = vmatprep.subr.bf16.mxu0 %v3958
    %4222 = vmatpush1.bf16.msra.mxu0 %v3957
    %4223 = vmatprep.subr.bf16.mxu0 %v3956
    %4224 = vmatpush1.bf16.msra.mxu0 %v3955
    %4225 = vmatprep.subr.bf16.mxu0 %v3954
    %4226 = vmatpush1.bf16.msra.mxu0 %v3953
    %4227 = vmatprep.subr.bf16.mxu0 %v3952
    %4228 = vmatpush1.bf16.msra.mxu0 %v3951
    %4229 = vmatprep.subr.bf16.mxu0 %v3950
    %4230 = vmatpush1.bf16.msra.mxu0 %v3949
    %4231 = vmatprep.subr.bf16.mxu0 %v3948
    %4232 = vmatpush1.bf16.msra.mxu0 %v3947
    %4233 = vmatprep.subr.bf16.mxu0 %v3946
    %4234 = vmatpush1.bf16.msra.mxu0 %v3945
    %4235 = vmatprep.subr.bf16.mxu0 %v3976
    %4236 = vmatpush2.bf16.msra.mxu0 %v3975
    %4237 = vmatprep.subr.bf16.mxu0 %v3974
    %4238 = vmatpush2.bf16.msra.mxu0 %v3973
    %4239 = vmatprep.subr.bf16.mxu0 %v3972
    %4240 = vmatpush2.bf16.msra.mxu0 %v3971
    %4241 = vmatprep.subr.bf16.mxu0 %v3970
    %4242 = vmatpush2.bf16.msra.mxu0 %v3969
    %4243 = vmatprep.subr.bf16.mxu0 %v3968
    %4244 = vmatpush2.bf16.msra.mxu0 %v3967
    %4245 = vmatprep.subr.bf16.mxu0 %v3966
    %4246 = vmatpush2.bf16.msra.mxu0 %v3965
    %4247 = vmatprep.subr.bf16.mxu0 %v3964
    %4248 = vmatpush2.bf16.msra.mxu0 %v3963
    %4249 = vmatprep.subr.bf16.mxu0 %v3962
    %4250 = vmatpush2.bf16.msra.mxu0 %v3961
    %4251 = vmatprep.mubr.bf16.mxu0 %v3354
    %4252 = vmatmul.mubr.bf16.gmra.mxu0 %v3353
    %v4253 = vpop.f32.mrf.mxu0
    %v4254 = vadd.f32 %v4213, %v4253
    %v4255 = vpop.f32.mrf.mxu0
    %v4256 = vadd.f32 %v4215, %v4255
    %v4257 = vpop.f32.mrf.mxu0
    %v4258 = vpop.f32.mrf.mxu0
    %4259 = vdwg.mxu0
    %4260 = vmatprep.subr.bf16.mxu0 %v3992
    %4261 = vmatpush1.bf16.msra.mxu0 %v3991
    %4262 = vmatprep.subr.bf16.mxu0 %v3990
    %4263 = vmatpush1.bf16.msra.mxu0 %v3989
    %4264 = vmatprep.subr.bf16.mxu0 %v3988
    %4265 = vmatpush1.bf16.msra.mxu0 %v3987
    %4266 = vmatprep.subr.bf16.mxu0 %v3986
    %4267 = vmatpush1.bf16.msra.mxu0 %v3985
    %4268 = vmatprep.subr.bf16.mxu0 %v3984
    %4269 = vmatpush1.bf16.msra.mxu0 %v3983
    %4270 = vmatprep.subr.bf16.mxu0 %v3982
    %4271 = vmatpush1.bf16.msra.mxu0 %v3981
    %4272 = vmatprep.subr.bf16.mxu0 %v3980
    %4273 = vmatpush1.bf16.msra.mxu0 %v3979
    %4274 = vmatprep.subr.bf16.mxu0 %v3978
    %4275 = vmatpush1.bf16.msra.mxu0 %v3977
    %4276 = vmatprep.subr.bf16.mxu0 %v4008
    %4277 = vmatpush2.bf16.msra.mxu0 %v4007
    %4278 = vmatprep.subr.bf16.mxu0 %v4006
    %4279 = vmatpush2.bf16.msra.mxu0 %v4005
    %4280 = vmatprep.subr.bf16.mxu0 %v4004
    %4281 = vmatpush2.bf16.msra.mxu0 %v4003
    %4282 = vmatprep.subr.bf16.mxu0 %v4002
    %4283 = vmatpush2.bf16.msra.mxu0 %v4001
    %4284 = vmatprep.subr.bf16.mxu0 %v4000
    %4285 = vmatpush2.bf16.msra.mxu0 %v3999
    %4286 = vmatprep.subr.bf16.mxu0 %v3998
    %4287 = vmatpush2.bf16.msra.mxu0 %v3997
    %4288 = vmatprep.subr.bf16.mxu0 %v3996
    %4289 = vmatpush2.bf16.msra.mxu0 %v3995
    %4290 = vmatprep.subr.bf16.mxu0 %v3994
    %4291 = vmatpush2.bf16.msra.mxu0 %v3993
    %4292 = vmatprep.mubr.bf16.mxu0 %v3356
    %4293 = vmatmul.mubr.bf16.gmra.mxu0 %v3355
    %v4294 = vpop.f32.mrf.mxu0
    %v4295 = vadd.f32 %v4254, %v4294
    %v4296 = vpop.f32.mrf.mxu0
    %v4297 = vadd.f32 %v4256, %v4296
    %v4298 = vpop.f32.mrf.mxu0
    %v4299 = vpop.f32.mrf.mxu0
    %4300 = vdwg.mxu0
    %v4301 = vtanh.pop %v4295
    %v4302 = vtanh.pop %v4297
    %4303 = vst [vmem:[#allocation20] sm:$0xff] %v4301
    %4304 = vst [vmem:[#allocation20 + $0x8] sm:$0xff] %v4302
    // Predicated region
    $region102: #{tpu_custom_call.1} parent=1 // pred_check
      _
    $region103: #{tpu_custom_call.1} parent=1 // pred_check_branch
      %4306 = sbr.rel (0) target = $region105
    $region104: #{tpu_custom_call.1} parent=1 // pred_region
      %s4308 = ssub.s32 256, 256
      %4309 = vsyncadd [#allocation4], %s4308
      %s4311 = sshll.u32 [#allocation20], 4
      %s4312 = int_to_ptr.vmem [resolvable:$true] %s4311
      %4314 = dma.vmem_to_hbm [thread:$0]  %s4312, 256, %s14, [#allocation4]
    $region105: #{tpu_custom_call.1} parent=1 // pred_fallthru
      _
    // Predicated region
    $region106: #{tpu_custom_call.1} parent=1 // pred_check
      _
    $region107: #{tpu_custom_call.1} parent=1 // pred_check_branch
      %4316 = sbr.rel (0) target = $region109
    $region108: #{tpu_custom_call.1} parent=1 // pred_region
      %4317 = dma.done [#allocation4], 256
    $region109: #{tpu_custom_call.1} parent=1 // pred_fallthru
      _
    %4318 = vsyncpa [#allocation3], 1
    %4319 = vsyncpa [#allocation6], 1
    %4320 = vsyncpa [#allocation9], 1
    %4321 = vsyncpa [#allocation12], 1
    %4322 = vsyncpa [#allocation15], 1
    %4323 = vsyncpa [#allocation18], 1
    %4324 = vsyncpa [#allocation4], 1

</llo_original>
